<compile_context>
chip_gen: v7x
topology: tpu7x:2x2x1
jax: 0.10.0
libtpu: 0.0.40
codegen_flags: <defaults>
</compile_context>

<pallas_src>
import jax
import jax.numpy as jnp
from jax import lax
from jax.experimental import pallas as pl
from jax.experimental.pallas import tpu as pltpu


# ----------------------------------------------------------------------------
# Fused BasicBlock kernel: one batch element per grid step.
# ----------------------------------------------------------------------------
def _make_fused_block_kernel(*, KH, KW, stride, pad, H, W, Cin, Cout,
                             H1, W1, has_downsample, scaling, compute_dtype):
    def kernel(*refs):
        if has_downsample:
            (x_ref, w1_ref, b1_ref, w2_ref, b2_ref, wd_ref, bd_ref,
             o_ref, xp_scr, y1p_scr) = refs
        else:
            (x_ref, w1_ref, b1_ref, w2_ref, b2_ref,
             o_ref, xp_scr, y1p_scr) = refs

        x = x_ref[0]                                    # (H, W, Cin), f32

        # ---- residual path --------------------------------------------------
        if has_downsample:
            xs = x[::stride, ::stride, :]               # (H1, W1, Cin)
            res = jnp.dot(
                xs.reshape(H1 * W1, Cin).astype(compute_dtype),
                wd_ref[...],                            # (Cin, Cout)
                preferred_element_type=jnp.float32,
            ) + bd_ref[...]                             # (H1*W1, Cout) f32
        else:
            # stride == 1 and Cin == Cout in this branch.
            res = x.reshape(H1 * W1, Cout)

        # ---- conv1: in-kernel zero-pad -> im2col -> one MXU matmul ----------
        xp_scr[...] = jnp.zeros_like(xp_scr)
        xp_scr[pad:pad + H, pad:pad + W, :] = x
        xp = xp_scr[...]                                # (H+2p, W+2p, Cin)

        cols = []
        for dy in range(KH):
            for dx in range(KW):
                tap = xp[dy:dy + (H1 - 1) * stride + 1:stride,
                         dx:dx + (W1 - 1) * stride + 1:stride, :]
                cols.append(tap.reshape(H1 * W1, Cin))
        pat1 = jnp.concatenate(cols, axis=-1)           # (H1*W1, KH*KW*Cin)
        y1 = jnp.dot(pat1.astype(compute_dtype), w1_ref[...],
                     preferred_element_type=jnp.float32)
        y1 = jnp.maximum(y1 + b1_ref[...], 0.0)         # conv1 ReLU (f32)

        # ---- conv2 (stride 1): same trick, input kept on-chip ---------------
        y1p_scr[...] = jnp.zeros_like(y1p_scr)
        y1p_scr[pad:pad + H1, pad:pad + W1, :] = y1.reshape(H1, W1, Cout)
        y1p = y1p_scr[...]                              # (H1+2p, W1+2p, Cout)

        cols2 = []
        for dy in range(KH):
            for dx in range(KW):
                tap = y1p[dy:dy + H1, dx:dx + W1, :]
                cols2.append(tap.reshape(H1 * W1, Cout))
        pat2 = jnp.concatenate(cols2, axis=-1)          # (H1*W1, KH*KW*Cout)
        y2 = jnp.dot(pat2.astype(compute_dtype), w2_ref[...],
                     preferred_element_type=jnp.float32)
        y2 = y2 + b2_ref[...] + res * scaling           # bias + scaled residual
        y2 = jnp.maximum(y2, 0.0)                       # last activation

        # ---- lane-dense channel-major store: (Cout, H1*W1) -------------------
        o_ref[0] = y2.T.astype(o_ref.dtype)

    return kernel


# ----------------------------------------------------------------------------
# Wrapper: NCHW in -> fused pallas_call -> NCHW out (free reshape, no transpose)
# ----------------------------------------------------------------------------
def basic_block_forward(x_nchw, params, *, kernel_size, stride, scaling_factor,
                        compute_dtype=jnp.float32):
    N, Cin, H, W = x_nchw.shape
    w1, b1 = params["conv1"]
    w2, b2 = params["conv2"]
    KH, KW, _, Cout = w1.shape
    pad = kernel_size // 2
    H1 = (H + 2 * pad - KH) // stride + 1
    W1 = (W + 2 * pad - KW) // stride + 1
    has_ds = params["downsample"] is not None

    x = jnp.transpose(x_nchw, (0, 2, 3, 1))                      # NCHW -> NHWC (input only)

    # im2col weight layout: (KH*KW*Cin, Cout); cast matmul operands only.
    w1m = w1.reshape(KH * KW * Cin, Cout).astype(compute_dtype)
    w2m = w2.reshape(KH * KW * Cout, Cout).astype(compute_dtype)
    b1m = b1.reshape(1, Cout).astype(jnp.float32)
    b2m = b2.reshape(1, Cout).astype(jnp.float32)

    args = [x, w1m, b1m, w2m, b2m]
    in_specs = [
        pl.BlockSpec((1, H, W, Cin), lambda n: (n, 0, 0, 0)),
        pl.BlockSpec((KH * KW * Cin, Cout), lambda n: (0, 0)),
        pl.BlockSpec((1, Cout), lambda n: (0, 0)),
        pl.BlockSpec((KH * KW * Cout, Cout), lambda n: (0, 0)),
        pl.BlockSpec((1, Cout), lambda n: (0, 0)),
    ]
    if has_ds:
        wd, bd = params["downsample"]
        args += [wd.reshape(Cin, Cout).astype(compute_dtype),
                 bd.reshape(1, Cout).astype(jnp.float32)]
        in_specs += [pl.BlockSpec((Cin, Cout), lambda n: (0, 0)),
                     pl.BlockSpec((1, Cout), lambda n: (0, 0))]

    kernel = _make_fused_block_kernel(
        KH=KH, KW=KW, stride=stride, pad=pad, H=H, W=W, Cin=Cin, Cout=Cout,
        H1=H1, W1=W1, has_downsample=has_ds, scaling=float(scaling_factor),
        compute_dtype=compute_dtype)

    flops = 2 * N * H1 * W1 * Cout * (KH * KW * Cin + KH * KW * Cout
                                      + (Cin if has_ds else 0))
    bytes_accessed = (sum(int(a.size) * a.dtype.itemsize for a in args)
                      + N * Cout * H1 * W1 * x.dtype.itemsize)

    out = pl.pallas_call(
        kernel,
        out_shape=jax.ShapeDtypeStruct((N, Cout, H1 * W1), x.dtype),
        grid=(N,),
        in_specs=in_specs,
        out_specs=pl.BlockSpec((1, Cout, H1 * W1), lambda n: (n, 0, 0)),
        scratch_shapes=[
            pltpu.VMEM((H + 2 * pad, W + 2 * pad, Cin), jnp.float32),    # padded input
            pltpu.VMEM((H1 + 2 * pad, W1 + 2 * pad, Cout), jnp.float32), # padded conv1 out
        ],
        compiler_params=pltpu.CompilerParams(
            dimension_semantics=("parallel",),
            vmem_limit_bytes=32 * 1024 * 1024,
        ),
        cost_estimate=pl.CostEstimate(flops=flops, transcendentals=0,
                                      bytes_accessed=bytes_accessed),
    )(*args)

    return out.reshape(N, Cout, H1, W1)   # already channel-major == NCHW


# ----------------------------------------------------------------------------
# Parameter init mirroring the module's init scheme (weights stored HWIO).
# ----------------------------------------------------------------------------
def init_basic_block_params(key, in_channels, out_channels, kernel_size, stride):
    k1, k2, k3, kb1, kb2, kb3 = jax.random.split(key, 6)

    def kaiming_normal(k, cout, cin, kh, kw):       # ReLU branch (a=0)
        fan_in = cin * kh * kw
        std = jnp.sqrt(2.0) / jnp.sqrt(fan_in)
        return jax.random.normal(k, (cout, cin, kh, kw), jnp.float32) * std

    def xavier_normal(k, cout, cin, kh, kw):        # no-activation branch
        fan_in, fan_out = cin * kh * kw, cout * kh * kw
        std = jnp.sqrt(2.0 / (fan_in + fan_out))
        return jax.random.normal(k, (cout, cin, kh, kw), jnp.float32) * std

    def bias_init(k, cout, cin, kh, kw):            # torch Conv2d default
        bound = 1.0 / jnp.sqrt(cin * kh * kw)
        return jax.random.uniform(k, (cout,), jnp.float32, -bound, bound)

    def oihw_to_hwio(w):
        return jnp.transpose(w, (2, 3, 1, 0))

    params = {
        "conv1": (
            oihw_to_hwio(kaiming_normal(k1, out_channels, in_channels,
                                        kernel_size, kernel_size)),
            bias_init(kb1, out_channels, in_channels, kernel_size, kernel_size),
        ),
        "conv2": (
            oihw_to_hwio(kaiming_normal(k2, out_channels, out_channels,
                                        kernel_size, kernel_size)),
            bias_init(kb2, out_channels, out_channels, kernel_size, kernel_size),
        ),
        "downsample": None,
    }
    if stride != 1 or in_channels != out_channels:
        params["downsample"] = (
            oihw_to_hwio(xavier_normal(k3, out_channels, in_channels, 1, 1)),
            bias_init(kb3, out_channels, in_channels, 1, 1),
        )
    return params


# ----------------------------------------------------------------------------
# Pure-JAX reference (correctness check for the Pallas path)
# ----------------------------------------------------------------------------
def _conv_ref(x_nhwc, w_hwio, b, stride, pad):
    y = lax.conv_general_dilated(
        x_nhwc, w_hwio, window_strides=(stride, stride),
        padding=((pad, pad), (pad, pad)),
        dimension_numbers=("NHWC", "HWIO", "NHWC"))
    return y + b.reshape(1, 1, 1, -1)


def basic_block_ref(x_nchw, params, *, kernel_size, stride, scaling_factor):
    x = jnp.transpose(x_nchw, (0, 2, 3, 1))
    pad = kernel_size // 2
    if params["downsample"] is not None:
        wd, bd = params["downsample"]
        residual = _conv_ref(x, wd, bd, stride, 0)
    else:
        residual = x
    w1, b1 = params["conv1"]
    out = jnp.maximum(_conv_ref(x, w1, b1, stride, pad), 0.0)
    w2, b2 = params["conv2"]
    out = _conv_ref(out, w2, b2, 1, pad)
    out = out + residual * scaling_factor
    out = jnp.maximum(out, 0.0)
    return jnp.transpose(out, (0, 3, 1, 2))


if __name__ == "__main__":
    batch, hw, ksz = 2, 16, 3
    scaling_factor = 0.5
    key = jax.random.PRNGKey(0)
    kx, kx2, kp1, kp2 = jax.random.split(key, 4)

    # Case 1: in_channels != out_channels -> 1x1 downsample residual path.
    in_c, out_c, stride = 4, 8, 1
    x = jax.random.normal(kx, (batch, in_c, hw, hw), jnp.float32)
    params = init_basic_block_params(kp1, in_c, out_c, ksz, stride)

    out = basic_block_forward(x, params, kernel_size=ksz, stride=stride,
                              scaling_factor=scaling_factor)
    out = jax.block_until_ready(out)
    ref = basic_block_ref(x, params, kernel_size=ksz, stride=stride,
                          scaling_factor=scaling_factor)
    assert out.shape == (batch, out_c, hw, hw), out.shape
    assert jnp.allclose(out, ref, atol=1e-4, rtol=1e-4), "mismatch (downsample, f32)"

    # Case 2: identity residual (in_channels == out_channels, stride == 1).
    x2 = jax.random.normal(kx2, (batch, out_c, hw, hw), jnp.float32)
    params2 = init_basic_block_params(kp2, out_c, out_c, ksz, 1)
    out2 = jax.block_until_ready(
        basic_block_forward(x2, params2, kernel_size=ksz, stride=1,
                            scaling_factor=scaling_factor))
    ref2 = basic_block_ref(x2, params2, kernel_size=ksz, stride=1,
                           scaling_factor=scaling_factor)
    assert jnp.allclose(out2, ref2, atol=1e-4, rtol=1e-4), "mismatch (identity, f32)"

    # Case 3: bf16 MXU operands (v6e/v7x fast path), f32 accumulation/epilogue.
    out_bf16 = jax.block_until_ready(
        basic_block_forward(x, params, kernel_size=ksz, stride=stride,
                            scaling_factor=scaling_factor,
                            compute_dtype=jnp.bfloat16))
    assert jnp.allclose(out_bf16, ref, atol=1e-1, rtol=1e-1), "mismatch (bf16)"

    print("KERNEL_OK")
</pallas_src>

<mosaic_0001>
module attributes {stable_mosaic.version = 11 : i64} {
  func.func @kernel(%arg0: i32, %arg1: memref<1x16x16x4xf32, #tpu.memory_space<vmem>>, %arg2: memref<36x8xf32, #tpu.memory_space<vmem>>, %arg3: memref<1x8xf32, #tpu.memory_space<vmem>>, %arg4: memref<72x8xf32, #tpu.memory_space<vmem>>, %arg5: memref<1x8xf32, #tpu.memory_space<vmem>>, %arg6: memref<4x8xf32, #tpu.memory_space<vmem>>, %arg7: memref<1x8xf32, #tpu.memory_space<vmem>>, %arg8: memref<1x8x256xf32, #tpu.memory_space<vmem>>, %arg9: memref<18x18x4xf32, #tpu.memory_space<vmem>>, %arg10: memref<18x18x8xf32, #tpu.memory_space<vmem>>) attributes {dimension_semantics = [#tpu.dimension_semantics<parallel>], iteration_bounds = array<i64: 2>, scalar_prefetch = 0 : i64, scratch_operands = 2 : i64, tpu.core_type = #tpu.core_type<tc>, window_params = [{transform_indices = @transform_0, window_bounds = array<i64: 1, 16, 16, 4>}, {pipeline_mode = #tpu.pipeline_mode<synchronous>, transform_indices = @transform_1, window_bounds = array<i64: 36, 8>}, {pipeline_mode = #tpu.pipeline_mode<synchronous>, transform_indices = @transform_2, window_bounds = array<i64: 1, 8>}, {pipeline_mode = #tpu.pipeline_mode<synchronous>, transform_indices = @transform_3, window_bounds = array<i64: 72, 8>}, {pipeline_mode = #tpu.pipeline_mode<synchronous>, transform_indices = @transform_4, window_bounds = array<i64: 1, 8>}, {pipeline_mode = #tpu.pipeline_mode<synchronous>, transform_indices = @transform_5, window_bounds = array<i64: 4, 8>}, {pipeline_mode = #tpu.pipeline_mode<synchronous>, transform_indices = @transform_6, window_bounds = array<i64: 1, 8>}, {transform_indices = @transform_7, window_bounds = array<i64: 1, 8, 256>}]} {
    %c0 = arith.constant 0 : index
    %c0_0 = arith.constant 0 : index
    %c0_1 = arith.constant 0 : index
    %c0_2 = arith.constant 0 : index
    %0 = vector.load %arg1[%c0, %c0_0, %c0_1, %c0_2] : memref<1x16x16x4xf32, #tpu.memory_space<vmem>>, vector<1x16x16x4xf32>
    %1 = vector.shape_cast %0 : vector<1x16x16x4xf32> to vector<16x16x4xf32>
    %2 = vector.shape_cast %1 : vector<16x16x4xf32> to vector<256x4xf32>
    %c0_3 = arith.constant 0 : index
    %c0_4 = arith.constant 0 : index
    %3 = vector.load %arg6[%c0_3, %c0_4] : memref<4x8xf32, #tpu.memory_space<vmem>>, vector<4x8xf32>
    %cst = arith.constant dense<0.000000e+00> : vector<256x8xf32>
    %4 = tpu.matmul %2, %3, %cst {dimension_numbers = #tpu.dot_dimension_numbers<[1], [0], [0], [1], [0, 0, 1, 1], [], []>} : vector<256x4xf32>, vector<4x8xf32>, vector<256x8xf32> -> vector<256x8xf32>
    %c0_5 = arith.constant 0 : index
    %c0_6 = arith.constant 0 : index
    %5 = vector.load %arg7[%c0_5, %c0_6] : memref<1x8xf32, #tpu.memory_space<vmem>>, vector<1x8xf32>
    %6 = vector.broadcast %5 : vector<1x8xf32> to vector<256x8xf32>
    %7 = arith.addf %4, %6 : vector<256x8xf32>
    %cst_7 = arith.constant 0.000000e+00 : f32
    %8 = vector.broadcast %cst_7 : f32 to vector<18x18x4xf32>
    %c0_8 = arith.constant 0 : index
    %c0_9 = arith.constant 0 : index
    %c0_10 = arith.constant 0 : index
    %9 = vector.load %arg9[%c0_8, %c0_9, %c0_10] : memref<18x18x4xf32, #tpu.memory_space<vmem>>, vector<18x18x4xf32>
    tpu.vector_store %arg9[%c0_8, %c0_9, %c0_10], %8 {strides = array<i32>} : memref<18x18x4xf32, #tpu.memory_space<vmem>>, vector<18x18x4xf32>,
    %c1 = arith.constant 1 : index
    %c1_11 = arith.constant 1 : index
    %c0_12 = arith.constant 0 : index
    %10 = vector.load %arg9[%c1, %c1_11, %c0_12] : memref<18x18x4xf32, #tpu.memory_space<vmem>>, vector<16x16x4xf32>
    tpu.vector_store %arg9[%c1, %c1_11, %c0_12], %1 {strides = array<i32>} : memref<18x18x4xf32, #tpu.memory_space<vmem>>, vector<16x16x4xf32>,
    %c0_13 = arith.constant 0 : index
    %c0_14 = arith.constant 0 : index
    %c0_15 = arith.constant 0 : index
    %11 = vector.load %arg9[%c0_13, %c0_14, %c0_15] : memref<18x18x4xf32, #tpu.memory_space<vmem>>, vector<18x18x4xf32>
    %12 = vector.extract_strided_slice %11 {offsets = [0, 0, 0], sizes = [16, 16, 4], strides = [1, 1, 1]} : vector<18x18x4xf32> to vector<16x16x4xf32>
    %13 = vector.shape_cast %12 : vector<16x16x4xf32> to vector<256x4xf32>
    %14 = vector.extract_strided_slice %11 {offsets = [0, 1, 0], sizes = [16, 16, 4], strides = [1, 1, 1]} : vector<18x18x4xf32> to vector<16x16x4xf32>
    %15 = vector.shape_cast %14 : vector<16x16x4xf32> to vector<256x4xf32>
    %16 = vector.extract_strided_slice %11 {offsets = [0, 2, 0], sizes = [16, 16, 4], strides = [1, 1, 1]} : vector<18x18x4xf32> to vector<16x16x4xf32>
    %17 = vector.shape_cast %16 : vector<16x16x4xf32> to vector<256x4xf32>
    %18 = vector.extract_strided_slice %11 {offsets = [1, 0, 0], sizes = [16, 16, 4], strides = [1, 1, 1]} : vector<18x18x4xf32> to vector<16x16x4xf32>
    %19 = vector.shape_cast %18 : vector<16x16x4xf32> to vector<256x4xf32>
    %20 = vector.extract_strided_slice %11 {offsets = [1, 1, 0], sizes = [16, 16, 4], strides = [1, 1, 1]} : vector<18x18x4xf32> to vector<16x16x4xf32>
    %21 = vector.shape_cast %20 : vector<16x16x4xf32> to vector<256x4xf32>
    %22 = vector.extract_strided_slice %11 {offsets = [1, 2, 0], sizes = [16, 16, 4], strides = [1, 1, 1]} : vector<18x18x4xf32> to vector<16x16x4xf32>
    %23 = vector.shape_cast %22 : vector<16x16x4xf32> to vector<256x4xf32>
    %24 = vector.extract_strided_slice %11 {offsets = [2, 0, 0], sizes = [16, 16, 4], strides = [1, 1, 1]} : vector<18x18x4xf32> to vector<16x16x4xf32>
    %25 = vector.shape_cast %24 : vector<16x16x4xf32> to vector<256x4xf32>
    %26 = vector.extract_strided_slice %11 {offsets = [2, 1, 0], sizes = [16, 16, 4], strides = [1, 1, 1]} : vector<18x18x4xf32> to vector<16x16x4xf32>
    %27 = vector.shape_cast %26 : vector<16x16x4xf32> to vector<256x4xf32>
    %28 = vector.extract_strided_slice %11 {offsets = [2, 2, 0], sizes = [16, 16, 4], strides = [1, 1, 1]} : vector<18x18x4xf32> to vector<16x16x4xf32>
    %29 = vector.shape_cast %28 : vector<16x16x4xf32> to vector<256x4xf32>
    %30 = tpu.concatenate %13, %15, %17, %19, %21, %23, %25, %27, %29 in 1 : vector<256x4xf32>, vector<256x4xf32>, vector<256x4xf32>, vector<256x4xf32>, vector<256x4xf32>, vector<256x4xf32>, vector<256x4xf32>, vector<256x4xf32>, vector<256x4xf32> -> vector<256x36xf32>
    %c0_16 = arith.constant 0 : index
    %c0_17 = arith.constant 0 : index
    %31 = vector.load %arg2[%c0_16, %c0_17] : memref<36x8xf32, #tpu.memory_space<vmem>>, vector<36x8xf32>
    %cst_18 = arith.constant dense<0.000000e+00> : vector<256x8xf32>
    %32 = tpu.matmul %30, %31, %cst_18 {dimension_numbers = #tpu.dot_dimension_numbers<[1], [0], [0], [1], [0, 0, 1, 1], [], []>} : vector<256x36xf32>, vector<36x8xf32>, vector<256x8xf32> -> vector<256x8xf32>
    %c0_19 = arith.constant 0 : index
    %c0_20 = arith.constant 0 : index
    %33 = vector.load %arg3[%c0_19, %c0_20] : memref<1x8xf32, #tpu.memory_space<vmem>>, vector<1x8xf32>
    %34 = vector.broadcast %33 : vector<1x8xf32> to vector<256x8xf32>
    %35 = arith.addf %32, %34 : vector<256x8xf32>
    %cst_21 = arith.constant 0.000000e+00 : f32
    %36 = vector.broadcast %cst_21 : f32 to vector<256x8xf32>
    %37 = arith.maximumf %35, %36 : vector<256x8xf32>
    %cst_22 = arith.constant 0.000000e+00 : f32
    %38 = vector.broadcast %cst_22 : f32 to vector<18x18x8xf32>
    %c0_23 = arith.constant 0 : index
    %c0_24 = arith.constant 0 : index
    %c0_25 = arith.constant 0 : index
    %39 = vector.load %arg10[%c0_23, %c0_24, %c0_25] : memref<18x18x8xf32, #tpu.memory_space<vmem>>, vector<18x18x8xf32>
    tpu.vector_store %arg10[%c0_23, %c0_24, %c0_25], %38 {strides = array<i32>} : memref<18x18x8xf32, #tpu.memory_space<vmem>>, vector<18x18x8xf32>,
    %40 = vector.shape_cast %37 : vector<256x8xf32> to vector<16x16x8xf32>
    %c1_26 = arith.constant 1 : index
    %c1_27 = arith.constant 1 : index
    %c0_28 = arith.constant 0 : index
    %41 = vector.load %arg10[%c1_26, %c1_27, %c0_28] : memref<18x18x8xf32, #tpu.memory_space<vmem>>, vector<16x16x8xf32>
    tpu.vector_store %arg10[%c1_26, %c1_27, %c0_28], %40 {strides = array<i32>} : memref<18x18x8xf32, #tpu.memory_space<vmem>>, vector<16x16x8xf32>,
    %c0_29 = arith.constant 0 : index
    %c0_30 = arith.constant 0 : index
    %c0_31 = arith.constant 0 : index
    %42 = vector.load %arg10[%c0_29, %c0_30, %c0_31] : memref<18x18x8xf32, #tpu.memory_space<vmem>>, vector<18x18x8xf32>
    %43 = vector.extract_strided_slice %42 {offsets = [0, 0, 0], sizes = [16, 16, 8], strides = [1, 1, 1]} : vector<18x18x8xf32> to vector<16x16x8xf32>
    %44 = vector.shape_cast %43 : vector<16x16x8xf32> to vector<256x8xf32>
    %45 = vector.extract_strided_slice %42 {offsets = [0, 1, 0], sizes = [16, 16, 8], strides = [1, 1, 1]} : vector<18x18x8xf32> to vector<16x16x8xf32>
    %46 = vector.shape_cast %45 : vector<16x16x8xf32> to vector<256x8xf32>
    %47 = vector.extract_strided_slice %42 {offsets = [0, 2, 0], sizes = [16, 16, 8], strides = [1, 1, 1]} : vector<18x18x8xf32> to vector<16x16x8xf32>
    %48 = vector.shape_cast %47 : vector<16x16x8xf32> to vector<256x8xf32>
    %49 = vector.extract_strided_slice %42 {offsets = [1, 0, 0], sizes = [16, 16, 8], strides = [1, 1, 1]} : vector<18x18x8xf32> to vector<16x16x8xf32>
    %50 = vector.shape_cast %49 : vector<16x16x8xf32> to vector<256x8xf32>
    %51 = vector.extract_strided_slice %42 {offsets = [1, 1, 0], sizes = [16, 16, 8], strides = [1, 1, 1]} : vector<18x18x8xf32> to vector<16x16x8xf32>
    %52 = vector.shape_cast %51 : vector<16x16x8xf32> to vector<256x8xf32>
    %53 = vector.extract_strided_slice %42 {offsets = [1, 2, 0], sizes = [16, 16, 8], strides = [1, 1, 1]} : vector<18x18x8xf32> to vector<16x16x8xf32>
    %54 = vector.shape_cast %53 : vector<16x16x8xf32> to vector<256x8xf32>
    %55 = vector.extract_strided_slice %42 {offsets = [2, 0, 0], sizes = [16, 16, 8], strides = [1, 1, 1]} : vector<18x18x8xf32> to vector<16x16x8xf32>
    %56 = vector.shape_cast %55 : vector<16x16x8xf32> to vector<256x8xf32>
    %57 = vector.extract_strided_slice %42 {offsets = [2, 1, 0], sizes = [16, 16, 8], strides = [1, 1, 1]} : vector<18x18x8xf32> to vector<16x16x8xf32>
    %58 = vector.shape_cast %57 : vector<16x16x8xf32> to vector<256x8xf32>
    %59 = vector.extract_strided_slice %42 {offsets = [2, 2, 0], sizes = [16, 16, 8], strides = [1, 1, 1]} : vector<18x18x8xf32> to vector<16x16x8xf32>
    %60 = vector.shape_cast %59 : vector<16x16x8xf32> to vector<256x8xf32>
    %61 = tpu.concatenate %44, %46, %48, %50, %52, %54, %56, %58, %60 in 1 : vector<256x8xf32>, vector<256x8xf32>, vector<256x8xf32>, vector<256x8xf32>, vector<256x8xf32>, vector<256x8xf32>, vector<256x8xf32>, vector<256x8xf32>, vector<256x8xf32> -> vector<256x72xf32>
    %c0_32 = arith.constant 0 : index
    %c0_33 = arith.constant 0 : index
    %62 = vector.load %arg4[%c0_32, %c0_33] : memref<72x8xf32, #tpu.memory_space<vmem>>, vector<72x8xf32>
    %cst_34 = arith.constant dense<0.000000e+00> : vector<256x8xf32>
    %63 = tpu.matmul %61, %62, %cst_34 {dimension_numbers = #tpu.dot_dimension_numbers<[1], [0], [0], [1], [0, 0, 1, 1], [], []>} : vector<256x72xf32>, vector<72x8xf32>, vector<256x8xf32> -> vector<256x8xf32>
    %c0_35 = arith.constant 0 : index
    %c0_36 = arith.constant 0 : index
    %64 = vector.load %arg5[%c0_35, %c0_36] : memref<1x8xf32, #tpu.memory_space<vmem>>, vector<1x8xf32>
    %65 = vector.broadcast %64 : vector<1x8xf32> to vector<256x8xf32>
    %66 = arith.addf %63, %65 : vector<256x8xf32>
    %cst_37 = arith.constant 5.000000e-01 : f32
    %67 = vector.broadcast %cst_37 : f32 to vector<256x8xf32>
    %68 = arith.mulf %7, %67 : vector<256x8xf32>
    %69 = arith.addf %66, %68 : vector<256x8xf32>
    %cst_38 = arith.constant 0.000000e+00 : f32
    %70 = vector.broadcast %cst_38 : f32 to vector<256x8xf32>
    %71 = arith.maximumf %69, %70 : vector<256x8xf32>
    %72 = tpu.transpose %71, [1, 0] : vector<256x8xf32> -> vector<8x256xf32>
    %c0_39 = arith.constant 0 : index
    %c0_40 = arith.constant 0 : index
    %c0_41 = arith.constant 0 : index
    %73 = vector.load %arg8[%c0_39, %c0_40, %c0_41] : memref<1x8x256xf32, #tpu.memory_space<vmem>>, vector<1x8x256xf32>
    %74 = vector.shape_cast %73 : vector<1x8x256xf32> to vector<8x256xf32>
    %75 = vector.shape_cast %72 : vector<8x256xf32> to vector<1x8x256xf32>
    tpu.vector_store %arg8[%c0_39, %c0_40, %c0_41], %75 {strides = array<i32>} : memref<1x8x256xf32, #tpu.memory_space<vmem>>, vector<1x8x256xf32>,
    return
  }
  func.func @transform_0(%arg0: i32) -> (i32, i32, i32, i32) {
    %c0_i32 = arith.constant 0 : i32
    %c0_i32_0 = arith.constant 0 : i32
    %c0_i32_1 = arith.constant 0 : i32
    %c0_i32_2 = arith.constant 0 : i32
    return %arg0, %c0_i32, %c0_i32_0, %c0_i32_1 : i32, i32, i32, i32
  }
  func.func @transform_1(%arg0: i32) -> (i32, i32) {
    %c0_i32 = arith.constant 0 : i32
    %c0_i32_0 = arith.constant 0 : i32
    %c0_i32_1 = arith.constant 0 : i32
    return %c0_i32, %c0_i32_0 : i32, i32
  }
  func.func @transform_2(%arg0: i32) -> (i32, i32) {
    %c0_i32 = arith.constant 0 : i32
    %c0_i32_0 = arith.constant 0 : i32
    %c0_i32_1 = arith.constant 0 : i32
    return %c0_i32, %c0_i32_0 : i32, i32
  }
  func.func @transform_3(%arg0: i32) -> (i32, i32) {
    %c0_i32 = arith.constant 0 : i32
    %c0_i32_0 = arith.constant 0 : i32
    %c0_i32_1 = arith.constant 0 : i32
    return %c0_i32, %c0_i32_0 : i32, i32
  }
  func.func @transform_4(%arg0: i32) -> (i32, i32) {
    %c0_i32 = arith.constant 0 : i32
    %c0_i32_0 = arith.constant 0 : i32
    %c0_i32_1 = arith.constant 0 : i32
    return %c0_i32, %c0_i32_0 : i32, i32
  }
  func.func @transform_5(%arg0: i32) -> (i32, i32) {
    %c0_i32 = arith.constant 0 : i32
    %c0_i32_0 = arith.constant 0 : i32
    %c0_i32_1 = arith.constant 0 : i32
    return %c0_i32, %c0_i32_0 : i32, i32
  }
  func.func @transform_6(%arg0: i32) -> (i32, i32) {
    %c0_i32 = arith.constant 0 : i32
    %c0_i32_0 = arith.constant 0 : i32
    %c0_i32_1 = arith.constant 0 : i32
    return %c0_i32, %c0_i32_0 : i32, i32
  }
  func.func @transform_7(%arg0: i32) -> (i32, i32, i32) {
    %c0_i32 = arith.constant 0 : i32
    %c0_i32_0 = arith.constant 0 : i32
    %c0_i32_1 = arith.constant 0 : i32
    return %arg0, %c0_i32, %c0_i32_0 : i32, i32, i32
  }
}

</mosaic_0001>

<llo_original>
// kernel: tpu_custom_call.1
$region0: #{tpu_custom_call.1}
  #allocation0 [shape = 'u32[]', space=smem, size = 0x4, offset = 0x4, fixed_abs, tag = 'smem constant byte address 0x4 - core index']
  #allocation1 [shape = 'u32[144,128]{1,0:T(1,128)}', space=vmem, size = 0x12000, scoped, tag = 'internal scratch']
  #allocation2 [shape = 'f32[18,18,4]{2,1,0:T(8,128)}', space=vmem, size = 0x36000, scoped, tag = 'scratch operand']
  #allocation3 [shape = 'f32[18,18,8]{2,1,0:T(8,128)}', space=vmem, size = 0x36000, scoped, tag = 'scratch operand']
  %s0 = inlined_call_operand.vmem [shape: f32[2,16,16,4], index: 0, kind: input, shape index: {}]
  %s1 = inlined_call_operand.vmem [shape: f32[36,8], index: 1, kind: input, shape index: {}]
  %s2 = inlined_call_operand.vmem [shape: f32[1,8], index: 2, kind: input, shape index: {}]
  %s3 = inlined_call_operand.vmem [shape: f32[72,8], index: 3, kind: input, shape index: {}]
  %s4 = inlined_call_operand.vmem [shape: f32[1,8], index: 4, kind: input, shape index: {}]
  %s5 = inlined_call_operand.vmem [shape: f32[4,8], index: 5, kind: input, shape index: {}]
  %s6 = inlined_call_operand.vmem [shape: f32[1,8], index: 6, kind: input, shape index: {}]
  %s7 = inlined_call_operand.hbm [shape: f32[2,8,256], index: 7, kind: output, shape index: {}]
  %s8 = sld [smem:[#allocation0]]
  $region61: #{tpu_custom_call.1} parent=0
    _
  %s10 = ssub.s32 1, %s8
  %s11 = scalar_select 0, %s10, %s8
  $region1: #{tpu_custom_call.1} parent=0
    #allocation4 [shape = 'u8[16384]{0}', space=vmem, size = 0x4000, scoped, tag = 'output window, operand 0']
    #allocation5 [shape = 's32[2]{0}', space=sflag, size = 0x8, scoped, tag = 'scoped memory for tpu_custom_call.1']
    %12 = vsyncpa [#allocation5], 0
    %s13 = scalar_lea.sflag [#allocation5], 1
    %14 = vsyncpa %s13, 0
    loop: start=0, step=1, limit=4
    $region2: #{tpu_custom_call.1} parent=1 // loop_pre_header
      _
    $region3: #{tpu_custom_call.1} parent=1 // loop_header
      %s16 = sphi 0, %s20
      %p17 = scmp.ge.s32.totalorder %s16, 4
      %s26 = sphi 0, %s28
      %s29 = sphi 0, %s26
      %s30 = sphi 0, %s29
      %s46 = sphi 0, %s30
      %s50 = sphi 0, %s50
      %s52 = sphi 0, %s50
      %s53 = sphi 0, %s52
      %s67 = sphi 0, %s53
      %s71 = sphi 0, %s71
      %s73 = sphi 0, %s71
      %s74 = sphi 0, %s73
      %s88 = sphi 0, %s74
      %s92 = sphi 0, %s92
      %s94 = sphi 0, %s92
      %s95 = sphi 0, %s94
      %s109 = sphi 0, %s95
      %s113 = sphi 0, %s113
      %s115 = sphi 0, %s113
      %s116 = sphi 0, %s115
      %s130 = sphi 0, %s116
      %s134 = sphi 0, %s134
      %s136 = sphi 0, %s134
      %s137 = sphi 0, %s136
      %s151 = sphi 0, %s137
      %s155 = sphi 0, %s155
      %s157 = sphi 0, %s155
      %s158 = sphi 0, %s157
      %s172 = sphi 0, %s158
      %s178 = sphi 0, %s180
      %s181 = sphi 0, %s178
      %s182 = sphi 0, %s181
      %s198 = sphi 0, %s182
    $region4: #{tpu_custom_call.1} parent=1 // loop_header_branch
      %19 = sbr.rel (%p17) target = $region8
    $region5: #{tpu_custom_call.1} parent=1 // loop_body
      %s21 = ssub.s32 %s16, 1
      %s22 = ssub.s32 %s16, 2
      %s23 = sadd.s32 %s16, 1
      %s24 = ssub.s32 %s16, %s23
      %p25 = scmp.eq.s32.totalorder %s24, 0
      %s27 = sadd.s32 %s26, 1
      %s28 = scalar_select %p25, %s26, %s27
      %p31 = pneg %p25
      %p32 = scmp.eq.s32.totalorder %s16, 1
      %p33 = por %p31, %p32
      %p34 = scmp.ne.s32.totalorder %s26, %s29
      %p35 = scmp.eq.s32.totalorder %s16, 0
      %p36 = por %p34, %p35
      %p37 = scmp.ne.s32.totalorder %s26, %s29
      %p38 = scmp.eq.s32.totalorder %s21, 1
      %p39 = por %p37, %p38
      %p40 = scmp.ne.s32.totalorder %s29, %s30
      %p41 = scmp.eq.s32.totalorder %s21, 0
      %p42 = por %p40, %p41
      %p43 = scmp.ne.s32.totalorder %s29, %s30
      %p44 = scmp.eq.s32.totalorder %s22, 1
      %p45 = por %p43, %p44
      %p47 = scmp.ne.s32.totalorder %s30, %s46
      %p48 = scmp.eq.s32.totalorder %s22, 0
      %p49 = por %p47, %p48
      %s51 = sadd.s32 %s50, 1
      %p54 = scmp.eq.s32.totalorder %s16, 1
      %p55 = scmp.ne.s32.totalorder %s50, %s52
      %p56 = scmp.eq.s32.totalorder %s16, 0
      %p57 = por %p55, %p56
      %p58 = scmp.ne.s32.totalorder %s50, %s52
      %p59 = scmp.eq.s32.totalorder %s21, 1
      %p60 = por %p58, %p59
      %p61 = scmp.ne.s32.totalorder %s52, %s53
      %p62 = scmp.eq.s32.totalorder %s21, 0
      %p63 = por %p61, %p62
      %p64 = scmp.ne.s32.totalorder %s52, %s53
      %p65 = scmp.eq.s32.totalorder %s22, 1
      %p66 = por %p64, %p65
      %p68 = scmp.ne.s32.totalorder %s53, %s67
      %p69 = scmp.eq.s32.totalorder %s22, 0
      %p70 = por %p68, %p69
      %s72 = sadd.s32 %s71, 1
      %p75 = scmp.eq.s32.totalorder %s16, 1
      %p76 = scmp.ne.s32.totalorder %s71, %s73
      %p77 = scmp.eq.s32.totalorder %s16, 0
      %p78 = por %p76, %p77
      %p79 = scmp.ne.s32.totalorder %s71, %s73
      %p80 = scmp.eq.s32.totalorder %s21, 1
      %p81 = por %p79, %p80
      %p82 = scmp.ne.s32.totalorder %s73, %s74
      %p83 = scmp.eq.s32.totalorder %s21, 0
      %p84 = por %p82, %p83
      %p85 = scmp.ne.s32.totalorder %s73, %s74
      %p86 = scmp.eq.s32.totalorder %s22, 1
      %p87 = por %p85, %p86
      %p89 = scmp.ne.s32.totalorder %s74, %s88
      %p90 = scmp.eq.s32.totalorder %s22, 0
      %p91 = por %p89, %p90
      %s93 = sadd.s32 %s92, 1
      %p96 = scmp.eq.s32.totalorder %s16, 1
      %p97 = scmp.ne.s32.totalorder %s92, %s94
      %p98 = scmp.eq.s32.totalorder %s16, 0
      %p99 = por %p97, %p98
      %p100 = scmp.ne.s32.totalorder %s92, %s94
      %p101 = scmp.eq.s32.totalorder %s21, 1
      %p102 = por %p100, %p101
      %p103 = scmp.ne.s32.totalorder %s94, %s95
      %p104 = scmp.eq.s32.totalorder %s21, 0
      %p105 = por %p103, %p104
      %p106 = scmp.ne.s32.totalorder %s94, %s95
      %p107 = scmp.eq.s32.totalorder %s22, 1
      %p108 = por %p106, %p107
      %p110 = scmp.ne.s32.totalorder %s95, %s109
      %p111 = scmp.eq.s32.totalorder %s22, 0
      %p112 = por %p110, %p111
      %s114 = sadd.s32 %s113, 1
      %p117 = scmp.eq.s32.totalorder %s16, 1
      %p118 = scmp.ne.s32.totalorder %s113, %s115
      %p119 = scmp.eq.s32.totalorder %s16, 0
      %p120 = por %p118, %p119
      %p121 = scmp.ne.s32.totalorder %s113, %s115
      %p122 = scmp.eq.s32.totalorder %s21, 1
      %p123 = por %p121, %p122
      %p124 = scmp.ne.s32.totalorder %s115, %s116
      %p125 = scmp.eq.s32.totalorder %s21, 0
      %p126 = por %p124, %p125
      %p127 = scmp.ne.s32.totalorder %s115, %s116
      %p128 = scmp.eq.s32.totalorder %s22, 1
      %p129 = por %p127, %p128
      %p131 = scmp.ne.s32.totalorder %s116, %s130
      %p132 = scmp.eq.s32.totalorder %s22, 0
      %p133 = por %p131, %p132
      %s135 = sadd.s32 %s134, 1
      %p138 = scmp.eq.s32.totalorder %s16, 1
      %p139 = scmp.ne.s32.totalorder %s134, %s136
      %p140 = scmp.eq.s32.totalorder %s16, 0
      %p141 = por %p139, %p140
      %p142 = scmp.ne.s32.totalorder %s134, %s136
      %p143 = scmp.eq.s32.totalorder %s21, 1
      %p144 = por %p142, %p143
      %p145 = scmp.ne.s32.totalorder %s136, %s137
      %p146 = scmp.eq.s32.totalorder %s21, 0
      %p147 = por %p145, %p146
      %p148 = scmp.ne.s32.totalorder %s136, %s137
      %p149 = scmp.eq.s32.totalorder %s22, 1
      %p150 = por %p148, %p149
      %p152 = scmp.ne.s32.totalorder %s137, %s151
      %p153 = scmp.eq.s32.totalorder %s22, 0
      %p154 = por %p152, %p153
      %s156 = sadd.s32 %s155, 1
      %p159 = scmp.eq.s32.totalorder %s16, 1
      %p160 = scmp.ne.s32.totalorder %s155, %s157
      %p161 = scmp.eq.s32.totalorder %s16, 0
      %p162 = por %p160, %p161
      %p163 = scmp.ne.s32.totalorder %s155, %s157
      %p164 = scmp.eq.s32.totalorder %s21, 1
      %p165 = por %p163, %p164
      %p166 = scmp.ne.s32.totalorder %s157, %s158
      %p167 = scmp.eq.s32.totalorder %s21, 0
      %p168 = por %p166, %p167
      %p169 = scmp.ne.s32.totalorder %s157, %s158
      %p170 = scmp.eq.s32.totalorder %s22, 1
      %p171 = por %p169, %p170
      %p173 = scmp.ne.s32.totalorder %s158, %s172
      %p174 = scmp.eq.s32.totalorder %s22, 0
      %p175 = por %p173, %p174
      %s176 = ssub.s32 %s16, %s23
      %p177 = scmp.eq.s32.totalorder %s176, 0
      %s179 = sadd.s32 %s178, 1
      %s180 = scalar_select %p177, %s178, %s179
      %p183 = pneg %p177
      %p184 = scmp.eq.s32.totalorder %s16, 1
      %p185 = por %p183, %p184
      %p186 = scmp.ne.s32.totalorder %s178, %s181
      %p187 = scmp.eq.s32.totalorder %s16, 0
      %p188 = por %p186, %p187
      %p189 = scmp.ne.s32.totalorder %s178, %s181
      %p190 = scmp.eq.s32.totalorder %s21, 1
      %p191 = por %p189, %p190
      %p192 = scmp.ne.s32.totalorder %s181, %s182
      %p193 = scmp.eq.s32.totalorder %s21, 0
      %p194 = por %p192, %p193
      %p195 = scmp.ne.s32.totalorder %s181, %s182
      %p196 = scmp.eq.s32.totalorder %s22, 1
      %p197 = por %p195, %p196
      %p199 = scmp.ne.s32.totalorder %s182, %s198
      %p200 = scmp.eq.s32.totalorder %s22, 0
      %p201 = por %p199, %p200
      %p202 = scmp.le.s32.totalorder 1, %s16
      %p203 = scmp.lt.s32.totalorder %s16, 3
      %p204 = pnand %p202, %p203
      %p205 = pneg %p204
      // Predicated region
      $region9: #{tpu_custom_call.1} parent=5 // pred_check
        _
      $region10: #{tpu_custom_call.1} parent=5 // pred_check_branch
        %207 = sbr.rel (%p204) target = $region12
      $region11: #{tpu_custom_call.1} parent=5 // pred_region
        %s208 = ssub.s32 %s16, 1
        // Predicated region
        $region13: #{tpu_custom_call.1} parent=11 // pred_check
          %p209 = pneg %p63
        $region14: #{tpu_custom_call.1} parent=11 // pred_check_branch
          %211 = sbr.rel (%p209) target = $region16
        $region15: #{tpu_custom_call.1} parent=11 // pred_region
          _
        $region16: #{tpu_custom_call.1} parent=11 // pred_fallthru
          _
        // Predicated region
        $region17: #{tpu_custom_call.1} parent=11 // pred_check
          %p212 = pneg %p84
        $region18: #{tpu_custom_call.1} parent=11 // pred_check_branch
          %214 = sbr.rel (%p212) target = $region20
        $region19: #{tpu_custom_call.1} parent=11 // pred_region
          _
        $region20: #{tpu_custom_call.1} parent=11 // pred_fallthru
          _
        // Predicated region
        $region21: #{tpu_custom_call.1} parent=11 // pred_check
          %p215 = pneg %p105
        $region22: #{tpu_custom_call.1} parent=11 // pred_check_branch
          %217 = sbr.rel (%p215) target = $region24
        $region23: #{tpu_custom_call.1} parent=11 // pred_region
          _
        $region24: #{tpu_custom_call.1} parent=11 // pred_fallthru
          _
        // Predicated region
        $region25: #{tpu_custom_call.1} parent=11 // pred_check
          %p218 = pneg %p126
        $region26: #{tpu_custom_call.1} parent=11 // pred_check_branch
          %220 = sbr.rel (%p218) target = $region28
        $region27: #{tpu_custom_call.1} parent=11 // pred_region
          _
        $region28: #{tpu_custom_call.1} parent=11 // pred_fallthru
          _
        // Predicated region
        $region29: #{tpu_custom_call.1} parent=11 // pred_check
          %p221 = pneg %p147
        $region30: #{tpu_custom_call.1} parent=11 // pred_check_branch
          %223 = sbr.rel (%p221) target = $region32
        $region31: #{tpu_custom_call.1} parent=11 // pred_region
          _
        $region32: #{tpu_custom_call.1} parent=11 // pred_fallthru
          _
        // Predicated region
        $region33: #{tpu_custom_call.1} parent=11 // pred_check
          %p224 = pneg %p168
        $region34: #{tpu_custom_call.1} parent=11 // pred_check_branch
          %226 = sbr.rel (%p224) target = $region36
        $region35: #{tpu_custom_call.1} parent=11 // pred_region
          _
        $region36: #{tpu_custom_call.1} parent=11 // pred_fallthru
          _
      $region12: #{tpu_custom_call.1} parent=5 // pred_fallthru
        _
      %p227 = scmp.lt.s32.totalorder %s16, 2
      // Predicated region
      $region37: #{tpu_custom_call.1} parent=5 // pred_check
        %p228 = pneg %p227
      $region38: #{tpu_custom_call.1} parent=5 // pred_check_branch
        %230 = sbr.rel (%p228) target = $region40
      $region39: #{tpu_custom_call.1} parent=5 // pred_region
        // Predicated region
        $region41: #{tpu_custom_call.1} parent=39 // pred_check
          %p231 = pneg %p36
        $region42: #{tpu_custom_call.1} parent=39 // pred_check_branch
          %233 = sbr.rel (%p231) target = $region44
        $region43: #{tpu_custom_call.1} parent=39 // pred_region
          %p234 = scmp.lt.s32.totalorder %s16, 1
          %s235 = scalar_select %p234, %s16, 1
          %s236 = smul.addr %s235, 32
          %s237 = smul.addr %s236, 8
          %s238 = scalar_lea.vmem %s0, %s237
        $region44: #{tpu_custom_call.1} parent=39 // pred_fallthru
          _
      $region40: #{tpu_custom_call.1} parent=5 // pred_fallthru
        _
      %p239 = scmp.le.s32.totalorder 1, %s16
      %p240 = scmp.lt.s32.totalorder %s16, 3
      %p241 = pnand %p239, %p240
      %p242 = pneg %p241
      // Predicated region
      $region45: #{tpu_custom_call.1} parent=5 // pred_check
        _
      $region46: #{tpu_custom_call.1} parent=5 // pred_check_branch
        %244 = sbr.rel (%p241) target = $region48
      $region47: #{tpu_custom_call.1} parent=5 // pred_region
        %s245 = ssub.s32 %s16, 1
        %p246 = scmp.lt.s32.totalorder %s21, 1
        %s247 = scalar_select %p246, %s21, 1
        %s248 = smul.addr %s247, 32
        %s249 = smul.addr %s248, 8
        %s250 = scalar_lea.vmem %s0, %s249
        %p251 = pneg %p42
        %p252 = pneg %p39
        %p253 = pneg %p63
        %p254 = pneg %p60
        %p255 = pneg %p84
        %p256 = pneg %p81
        %p257 = pneg %p105
        %p258 = pneg %p102
        %p259 = pneg %p126
        %p260 = pneg %p123
        %p261 = pneg %p147
        %p262 = pneg %p144
        %p263 = pneg %p168
        %p264 = pneg %p165
        %p265 = pneg %p194
        %p266 = pneg %p191
        %s267 = sand.u32 %s181, 1
        %s268 = scalar_lea.sflag [#allocation5], %s267
        %s269 = sand.u32 %s181, 1
        %s270 = smul.addr %s269, 16
        %s271 = scalar_lea.vmem [#allocation4], %s270
        %p272 = scmp.lt.s32.totalorder %s21, 1
        %s273 = scalar_select %p272, %s21, 1
        %s274 = smul.addr %s273, 32
        %s275 = smul.addr %s274, 8
        %s276 = scalar_lea.vmem %s0, %s275
        %v277 = vld [vmem:[%s276] sm:$0xff]
        %v278 = vld [vmem:[%s276 + $0x8] sm:$0xff]
        %v279 = vld [vmem:[%s276 + $0x10] sm:$0xff]
        %v280 = vld [vmem:[%s276 + $0x18] sm:$0xff]
        %v281 = vld [vmem:[%s276 + $0x20] sm:$0xff]
        %v282 = vld [vmem:[%s276 + $0x28] sm:$0xff]
        %v283 = vld [vmem:[%s276 + $0x30] sm:$0xff]
        %v284 = vld [vmem:[%s276 + $0x38] sm:$0xff]
        %v285 = vld [vmem:[%s276 + $0x40] sm:$0xff]
        %v286 = vld [vmem:[%s276 + $0x48] sm:$0xff]
        %v287 = vld [vmem:[%s276 + $0x50] sm:$0xff]
        %v288 = vld [vmem:[%s276 + $0x58] sm:$0xff]
        %v289 = vld [vmem:[%s276 + $0x60] sm:$0xff]
        %v290 = vld [vmem:[%s276 + $0x68] sm:$0xff]
        %v291 = vld [vmem:[%s276 + $0x70] sm:$0xff]
        %v292 = vld [vmem:[%s276 + $0x78] sm:$0xff]
        %v293 = vld [vmem:[%s276 + $0x80] sm:$0xff]
        %v294 = vld [vmem:[%s276 + $0x88] sm:$0xff]
        %v295 = vld [vmem:[%s276 + $0x90] sm:$0xff]
        %v296 = vld [vmem:[%s276 + $0x98] sm:$0xff]
        %v297 = vld [vmem:[%s276 + $0xa0] sm:$0xff]
        %v298 = vld [vmem:[%s276 + $0xa8] sm:$0xff]
        %v299 = vld [vmem:[%s276 + $0xb0] sm:$0xff]
        %v300 = vld [vmem:[%s276 + $0xb8] sm:$0xff]
        %v301 = vld [vmem:[%s276 + $0xc0] sm:$0xff]
        %v302 = vld [vmem:[%s276 + $0xc8] sm:$0xff]
        %v303 = vld [vmem:[%s276 + $0xd0] sm:$0xff]
        %v304 = vld [vmem:[%s276 + $0xd8] sm:$0xff]
        %v305 = vld [vmem:[%s276 + $0xe0] sm:$0xff]
        %v306 = vld [vmem:[%s276 + $0xe8] sm:$0xff]
        %v307 = vld [vmem:[%s276 + $0xf0] sm:$0xff]
        %v308 = vld [vmem:[%s276 + $0xf8] sm:$0xff]
        %v309 = vld [vmem:[%s5] sm:$0xf]
        %v310 = vld [vmem:[%s6] sm:$0x1]
        %v312 = vlaneseq
        %v313 = vshrl.u32 %v312, 7
        %v314 = vsub.s32 0, %v313
        %v315 = vrot.slane %v310, %v314
        %vm317 = vcmask 31744
        %v319 = vsel %vm317, %v277, 0
        %v322 = vsel %vm317, %v278, 0
        %v325 = vsel %vm317, %v279, 0
        %v328 = vsel %vm317, %v280, 0
        %v331 = vsel %vm317, %v281, 0
        %v334 = vsel %vm317, %v282, 0
        %v337 = vsel %vm317, %v283, 0
        %v340 = vsel %vm317, %v284, 0
        %v343 = vsel %vm317, %v285, 0
        %v346 = vsel %vm317, %v286, 0
        %v349 = vsel %vm317, %v287, 0
        %v352 = vsel %vm317, %v288, 0
        %v355 = vsel %vm317, %v289, 0
        %v358 = vsel %vm317, %v290, 0
        %v361 = vsel %vm317, %v291, 0
        %v364 = vsel %vm317, %v292, 0
        %v367 = vsel %vm317, %v293, 0
        %v370 = vsel %vm317, %v294, 0
        %v373 = vsel %vm317, %v295, 0
        %v376 = vsel %vm317, %v296, 0
        %v379 = vsel %vm317, %v297, 0
        %v382 = vsel %vm317, %v298, 0
        %v385 = vsel %vm317, %v299, 0
        %v388 = vsel %vm317, %v300, 0
        %v391 = vsel %vm317, %v301, 0
        %v394 = vsel %vm317, %v302, 0
        %v397 = vsel %vm317, %v303, 0
        %v400 = vsel %vm317, %v304, 0
        %v403 = vsel %vm317, %v305, 0
        %v406 = vsel %vm317, %v306, 0
        %v409 = vsel %vm317, %v307, 0
        %v412 = vsel %vm317, %v308, 0
        %vm414 = vcmask 1043456
        %v416 = vsel %vm414, %v309, 0
        %418 = vmatprep.subr.mxu0 0.0
        %419 = vmatpush1.msra.mxu0 %v416
        %420 = vmatprep.subr.mxu0 0.0
        %421 = vmatpush1.msra.mxu0 0.0
        %422 = vmatprep.subr.mxu0 0.0
        %423 = vmatpush1.msra.mxu0 0.0
        %424 = vmatprep.subr.mxu0 0.0
        %425 = vmatpush1.msra.mxu0 0.0
        %426 = vmatprep.subr.mxu0 0.0
        %427 = vmatpush1.msra.mxu0 0.0
        %428 = vmatprep.subr.mxu0 0.0
        %429 = vmatpush1.msra.mxu0 0.0
        %430 = vmatprep.subr.mxu0 0.0
        %431 = vmatpush1.msra.mxu0 0.0
        %432 = vmatprep.subr.mxu0 0.0
        %433 = vmatpush1.msra.mxu0 0.0
        %434 = vmatprep.subr.mxu0 0.0
        %435 = vmatpush1.msra.mxu0 0.0
        %436 = vmatprep.subr.mxu0 0.0
        %437 = vmatpush1.msra.mxu0 0.0
        %438 = vmatprep.subr.mxu0 0.0
        %439 = vmatpush1.msra.mxu0 0.0
        %440 = vmatprep.subr.mxu0 0.0
        %441 = vmatpush1.msra.mxu0 0.0
        %442 = vmatprep.subr.mxu0 0.0
        %443 = vmatpush1.msra.mxu0 0.0
        %444 = vmatprep.subr.mxu0 0.0
        %445 = vmatpush1.msra.mxu0 0.0
        %446 = vmatprep.subr.mxu0 0.0
        %447 = vmatpush1.msra.mxu0 0.0
        %448 = vmatprep.subr.mxu0 0.0
        %449 = vmatpush1.msra.mxu0 0.0
        %450 = vmatprep.subr.mxu0 0.0
        %451 = vmatpush1.msra.mxu0 0.0
        %452 = vmatprep.subr.mxu0 0.0
        %453 = vmatpush1.msra.mxu0 0.0
        %454 = vmatprep.subr.mxu0 0.0
        %455 = vmatpush1.msra.mxu0 0.0
        %456 = vmatprep.subr.mxu0 0.0
        %457 = vmatpush1.msra.mxu0 0.0
        %458 = vmatprep.subr.mxu0 0.0
        %459 = vmatpush1.msra.mxu0 0.0
        %460 = vmatprep.subr.mxu0 0.0
        %461 = vmatpush1.msra.mxu0 0.0
        %462 = vmatprep.subr.mxu0 0.0
        %463 = vmatpush1.msra.mxu0 0.0
        %464 = vmatprep.subr.mxu0 0.0
        %465 = vmatpush1.msra.mxu0 0.0
        %466 = vmatprep.subr.mxu0 0.0
        %467 = vmatpush1.msra.mxu0 0.0
        %468 = vmatprep.subr.mxu0 0.0
        %469 = vmatpush1.msra.mxu0 0.0
        %470 = vmatprep.subr.mxu0 0.0
        %471 = vmatpush1.msra.mxu0 0.0
        %472 = vmatprep.subr.mxu0 0.0
        %473 = vmatpush1.msra.mxu0 0.0
        %474 = vmatprep.subr.mxu0 0.0
        %475 = vmatpush1.msra.mxu0 0.0
        %476 = vmatprep.subr.mxu0 0.0
        %477 = vmatpush1.msra.mxu0 0.0
        %478 = vmatprep.subr.mxu0 0.0
        %479 = vmatpush1.msra.mxu0 0.0
        %480 = vmatprep.subr.mxu0 0.0
        %481 = vmatpush1.msra.mxu0 0.0
        %482 = vmatprep.mubr.f32.mxu0 0.0
        %483 = vmatmul.mubr.f32.gmra.mrb[0].mxu0 %v319
        %v484 = vpop.f32.mrb[0].mxu0
        %v485 = vadd.f32 %v315, %v484
        %v486 = vpop.f32.mrb[0].mxu0
        %487 = vmatprep.mubr.f32.mxu0 0.0
        %488 = vmatmul.mubr.f32.gmra.mrb[0].mxu0 %v322
        %v489 = vpop.f32.mrb[0].mxu0
        %v490 = vadd.f32 %v315, %v489
        %v491 = vpop.f32.mrb[0].mxu0
        %492 = vmatprep.mubr.f32.mxu0 0.0
        %493 = vmatmul.mubr.f32.gmra.mrb[0].mxu0 %v325
        %v494 = vpop.f32.mrb[0].mxu0
        %v495 = vadd.f32 %v315, %v494
        %v496 = vpop.f32.mrb[0].mxu0
        %497 = vmatprep.mubr.f32.mxu0 0.0
        %498 = vmatmul.mubr.f32.gmra.mrb[0].mxu0 %v328
        %v499 = vpop.f32.mrb[0].mxu0
        %v500 = vadd.f32 %v315, %v499
        %v501 = vpop.f32.mrb[0].mxu0
        %502 = vmatprep.mubr.f32.mxu0 0.0
        %503 = vmatmul.mubr.f32.gmra.mrb[0].mxu0 %v331
        %v504 = vpop.f32.mrb[0].mxu0
        %v505 = vadd.f32 %v315, %v504
        %v506 = vpop.f32.mrb[0].mxu0
        %507 = vmatprep.mubr.f32.mxu0 0.0
        %508 = vmatmul.mubr.f32.gmra.mrb[0].mxu0 %v334
        %v509 = vpop.f32.mrb[0].mxu0
        %v510 = vadd.f32 %v315, %v509
        %v511 = vpop.f32.mrb[0].mxu0
        %512 = vmatprep.mubr.f32.mxu0 0.0
        %513 = vmatmul.mubr.f32.gmra.mrb[0].mxu0 %v337
        %v514 = vpop.f32.mrb[0].mxu0
        %v515 = vadd.f32 %v315, %v514
        %v516 = vpop.f32.mrb[0].mxu0
        %517 = vmatprep.mubr.f32.mxu0 0.0
        %518 = vmatmul.mubr.f32.gmra.mrb[0].mxu0 %v340
        %v519 = vpop.f32.mrb[0].mxu0
        %v520 = vadd.f32 %v315, %v519
        %v521 = vpop.f32.mrb[0].mxu0
        %522 = vmatprep.mubr.f32.mxu0 0.0
        %523 = vmatmul.mubr.f32.gmra.mrb[0].mxu0 %v343
        %v524 = vpop.f32.mrb[0].mxu0
        %v525 = vadd.f32 %v315, %v524
        %v526 = vpop.f32.mrb[0].mxu0
        %527 = vmatprep.mubr.f32.mxu0 0.0
        %528 = vmatmul.mubr.f32.gmra.mrb[0].mxu0 %v346
        %v529 = vpop.f32.mrb[0].mxu0
        %v530 = vadd.f32 %v315, %v529
        %v531 = vpop.f32.mrb[0].mxu0
        %532 = vmatprep.mubr.f32.mxu0 0.0
        %533 = vmatmul.mubr.f32.gmra.mrb[0].mxu0 %v349
        %v534 = vpop.f32.mrb[0].mxu0
        %v535 = vadd.f32 %v315, %v534
        %v536 = vpop.f32.mrb[0].mxu0
        %537 = vmatprep.mubr.f32.mxu0 0.0
        %538 = vmatmul.mubr.f32.gmra.mrb[0].mxu0 %v352
        %v539 = vpop.f32.mrb[0].mxu0
        %v540 = vadd.f32 %v315, %v539
        %v541 = vpop.f32.mrb[0].mxu0
        %542 = vmatprep.mubr.f32.mxu0 0.0
        %543 = vmatmul.mubr.f32.gmra.mrb[0].mxu0 %v355
        %v544 = vpop.f32.mrb[0].mxu0
        %v545 = vadd.f32 %v315, %v544
        %v546 = vpop.f32.mrb[0].mxu0
        %547 = vmatprep.mubr.f32.mxu0 0.0
        %548 = vmatmul.mubr.f32.gmra.mrb[0].mxu0 %v358
        %v549 = vpop.f32.mrb[0].mxu0
        %v550 = vadd.f32 %v315, %v549
        %v551 = vpop.f32.mrb[0].mxu0
        %552 = vmatprep.mubr.f32.mxu0 0.0
        %553 = vmatmul.mubr.f32.gmra.mrb[0].mxu0 %v361
        %v554 = vpop.f32.mrb[0].mxu0
        %v555 = vadd.f32 %v315, %v554
        %v556 = vpop.f32.mrb[0].mxu0
        %557 = vmatprep.mubr.f32.mxu0 0.0
        %558 = vmatmul.mubr.f32.gmra.mrb[0].mxu0 %v364
        %v559 = vpop.f32.mrb[0].mxu0
        %v560 = vadd.f32 %v315, %v559
        %v561 = vpop.f32.mrb[0].mxu0
        %562 = vmatprep.mubr.f32.mxu0 0.0
        %563 = vmatmul.mubr.f32.gmra.mrb[0].mxu0 %v367
        %v564 = vpop.f32.mrb[0].mxu0
        %v565 = vadd.f32 %v315, %v564
        %v566 = vpop.f32.mrb[0].mxu0
        %567 = vmatprep.mubr.f32.mxu0 0.0
        %568 = vmatmul.mubr.f32.gmra.mrb[0].mxu0 %v370
        %v569 = vpop.f32.mrb[0].mxu0
        %v570 = vadd.f32 %v315, %v569
        %v571 = vpop.f32.mrb[0].mxu0
        %572 = vmatprep.mubr.f32.mxu0 0.0
        %573 = vmatmul.mubr.f32.gmra.mrb[0].mxu0 %v373
        %v574 = vpop.f32.mrb[0].mxu0
        %v575 = vadd.f32 %v315, %v574
        %v576 = vpop.f32.mrb[0].mxu0
        %577 = vmatprep.mubr.f32.mxu0 0.0
        %578 = vmatmul.mubr.f32.gmra.mrb[0].mxu0 %v376
        %v579 = vpop.f32.mrb[0].mxu0
        %v580 = vadd.f32 %v315, %v579
        %v581 = vpop.f32.mrb[0].mxu0
        %582 = vmatprep.mubr.f32.mxu0 0.0
        %583 = vmatmul.mubr.f32.gmra.mrb[0].mxu0 %v379
        %v584 = vpop.f32.mrb[0].mxu0
        %v585 = vadd.f32 %v315, %v584
        %v586 = vpop.f32.mrb[0].mxu0
        %587 = vmatprep.mubr.f32.mxu0 0.0
        %588 = vmatmul.mubr.f32.gmra.mrb[0].mxu0 %v382
        %v589 = vpop.f32.mrb[0].mxu0
        %v590 = vadd.f32 %v315, %v589
        %v591 = vpop.f32.mrb[0].mxu0
        %592 = vmatprep.mubr.f32.mxu0 0.0
        %593 = vmatmul.mubr.f32.gmra.mrb[0].mxu0 %v385
        %v594 = vpop.f32.mrb[0].mxu0
        %v595 = vadd.f32 %v315, %v594
        %v596 = vpop.f32.mrb[0].mxu0
        %597 = vmatprep.mubr.f32.mxu0 0.0
        %598 = vmatmul.mubr.f32.gmra.mrb[0].mxu0 %v388
        %v599 = vpop.f32.mrb[0].mxu0
        %v600 = vadd.f32 %v315, %v599
        %v601 = vpop.f32.mrb[0].mxu0
        %602 = vmatprep.mubr.f32.mxu0 0.0
        %603 = vmatmul.mubr.f32.gmra.mrb[0].mxu0 %v391
        %v604 = vpop.f32.mrb[0].mxu0
        %v605 = vadd.f32 %v315, %v604
        %v606 = vpop.f32.mrb[0].mxu0
        %607 = vmatprep.mubr.f32.mxu0 0.0
        %608 = vmatmul.mubr.f32.gmra.mrb[0].mxu0 %v394
        %v609 = vpop.f32.mrb[0].mxu0
        %v610 = vadd.f32 %v315, %v609
        %v611 = vpop.f32.mrb[0].mxu0
        %612 = vmatprep.mubr.f32.mxu0 0.0
        %613 = vmatmul.mubr.f32.gmra.mrb[0].mxu0 %v397
        %v614 = vpop.f32.mrb[0].mxu0
        %v615 = vadd.f32 %v315, %v614
        %v616 = vpop.f32.mrb[0].mxu0
        %617 = vmatprep.mubr.f32.mxu0 0.0
        %618 = vmatmul.mubr.f32.gmra.mrb[0].mxu0 %v400
        %v619 = vpop.f32.mrb[0].mxu0
        %v620 = vadd.f32 %v315, %v619
        %v621 = vpop.f32.mrb[0].mxu0
        %622 = vmatprep.mubr.f32.mxu0 0.0
        %623 = vmatmul.mubr.f32.gmra.mrb[0].mxu0 %v403
        %v624 = vpop.f32.mrb[0].mxu0
        %v625 = vadd.f32 %v315, %v624
        %v626 = vpop.f32.mrb[0].mxu0
        %627 = vmatprep.mubr.f32.mxu0 0.0
        %628 = vmatmul.mubr.f32.gmra.mrb[0].mxu0 %v406
        %v629 = vpop.f32.mrb[0].mxu0
        %v630 = vadd.f32 %v315, %v629
        %v631 = vpop.f32.mrb[0].mxu0
        %632 = vmatprep.mubr.f32.mxu0 0.0
        %633 = vmatmul.mubr.f32.gmra.mrb[0].mxu0 %v409
        %v634 = vpop.f32.mrb[0].mxu0
        %v635 = vadd.f32 %v315, %v634
        %v636 = vpop.f32.mrb[0].mxu0
        %637 = vmatprep.mubr.f32.mxu0 0.0
        %638 = vmatmul.mubr.f32.gmra.mrb[0].mxu0 %v412
        %v639 = vpop.f32.mrb[0].mxu0
        %v640 = vadd.f32 %v315, %v639
        %v641 = vpop.f32.mrb[0].mxu0
        %642 = vdwg.mxu0
        %643 = vst.msk [vmem:[#allocation2] sm:$0xff] %vm317, 0.0
        %644 = vst.msk [vmem:[#allocation2 + $0x8] sm:$0xff] %vm317, 0.0
        %vm645 = vcmask 25600
        %646 = vst.msk [vmem:[#allocation2 + $0x10] sm:$0x3] %vm645, 0.0
        %647 = vst.msk [vmem:[#allocation2 + $0x18] sm:$0xff] %vm317, 0.0
        %648 = vst.msk [vmem:[#allocation2 + $0x20] sm:$0xff] %vm317, 0.0
        %649 = vst.msk [vmem:[#allocation2 + $0x28] sm:$0x3] %vm645, 0.0
        %650 = vst.msk [vmem:[#allocation2 + $0x30] sm:$0xff] %vm317, 0.0
        %651 = vst.msk [vmem:[#allocation2 + $0x38] sm:$0xff] %vm317, 0.0
        %652 = vst.msk [vmem:[#allocation2 + $0x40] sm:$0x3] %vm645, 0.0
        %653 = vst.msk [vmem:[#allocation2 + $0x48] sm:$0xff] %vm317, 0.0
        %654 = vst.msk [vmem:[#allocation2 + $0x50] sm:$0xff] %vm317, 0.0
        %655 = vst.msk [vmem:[#allocation2 + $0x58] sm:$0x3] %vm645, 0.0
        %656 = vst.msk [vmem:[#allocation2 + $0x60] sm:$0xff] %vm317, 0.0
        %657 = vst.msk [vmem:[#allocation2 + $0x68] sm:$0xff] %vm317, 0.0
        %658 = vst.msk [vmem:[#allocation2 + $0x70] sm:$0x3] %vm645, 0.0
        %659 = vst.msk [vmem:[#allocation2 + $0x78] sm:$0xff] %vm317, 0.0
        %660 = vst.msk [vmem:[#allocation2 + $0x80] sm:$0xff] %vm317, 0.0
        %661 = vst.msk [vmem:[#allocation2 + $0x88] sm:$0x3] %vm645, 0.0
        %662 = vst.msk [vmem:[#allocation2 + $0x90] sm:$0xff] %vm317, 0.0
        %663 = vst.msk [vmem:[#allocation2 + $0x98] sm:$0xff] %vm317, 0.0
        %664 = vst.msk [vmem:[#allocation2 + $0xa0] sm:$0x3] %vm645, 0.0
        %665 = vst.msk [vmem:[#allocation2 + $0xa8] sm:$0xff] %vm317, 0.0
        %666 = vst.msk [vmem:[#allocation2 + $0xb0] sm:$0xff] %vm317, 0.0
        %667 = vst.msk [vmem:[#allocation2 + $0xb8] sm:$0x3] %vm645, 0.0
        %668 = vst.msk [vmem:[#allocation2 + $0xc0] sm:$0xff] %vm317, 0.0
        %669 = vst.msk [vmem:[#allocation2 + $0xc8] sm:$0xff] %vm317, 0.0
        %670 = vst.msk [vmem:[#allocation2 + $0xd0] sm:$0x3] %vm645, 0.0
        %671 = vst.msk [vmem:[#allocation2 + $0xd8] sm:$0xff] %vm317, 0.0
        %672 = vst.msk [vmem:[#allocation2 + $0xe0] sm:$0xff] %vm317, 0.0
        %673 = vst.msk [vmem:[#allocation2 + $0xe8] sm:$0x3] %vm645, 0.0
        %674 = vst.msk [vmem:[#allocation2 + $0xf0] sm:$0xff] %vm317, 0.0
        %675 = vst.msk [vmem:[#allocation2 + $0xf8] sm:$0xff] %vm317, 0.0
        %676 = vst.msk [vmem:[#allocation2 + $0x100] sm:$0x3] %vm645, 0.0
        %677 = vst.msk [vmem:[#allocation2 + $0x108] sm:$0xff] %vm317, 0.0
        %678 = vst.msk [vmem:[#allocation2 + $0x110] sm:$0xff] %vm317, 0.0
        %679 = vst.msk [vmem:[#allocation2 + $0x118] sm:$0x3] %vm645, 0.0
        %680 = vst.msk [vmem:[#allocation2 + $0x120] sm:$0xff] %vm317, 0.0
        %681 = vst.msk [vmem:[#allocation2 + $0x128] sm:$0xff] %vm317, 0.0
        %682 = vst.msk [vmem:[#allocation2 + $0x130] sm:$0x3] %vm645, 0.0
        %683 = vst.msk [vmem:[#allocation2 + $0x138] sm:$0xff] %vm317, 0.0
        %684 = vst.msk [vmem:[#allocation2 + $0x140] sm:$0xff] %vm317, 0.0
        %685 = vst.msk [vmem:[#allocation2 + $0x148] sm:$0x3] %vm645, 0.0
        %686 = vst.msk [vmem:[#allocation2 + $0x150] sm:$0xff] %vm317, 0.0
        %687 = vst.msk [vmem:[#allocation2 + $0x158] sm:$0xff] %vm317, 0.0
        %688 = vst.msk [vmem:[#allocation2 + $0x160] sm:$0x3] %vm645, 0.0
        %689 = vst.msk [vmem:[#allocation2 + $0x168] sm:$0xff] %vm317, 0.0
        %690 = vst.msk [vmem:[#allocation2 + $0x170] sm:$0xff] %vm317, 0.0
        %691 = vst.msk [vmem:[#allocation2 + $0x178] sm:$0x3] %vm645, 0.0
        %692 = vst.msk [vmem:[#allocation2 + $0x180] sm:$0xff] %vm317, 0.0
        %693 = vst.msk [vmem:[#allocation2 + $0x188] sm:$0xff] %vm317, 0.0
        %694 = vst.msk [vmem:[#allocation2 + $0x190] sm:$0x3] %vm645, 0.0
        %695 = vst.msk [vmem:[#allocation2 + $0x198] sm:$0xff] %vm317, 0.0
        %696 = vst.msk [vmem:[#allocation2 + $0x1a0] sm:$0xff] %vm317, 0.0
        %697 = vst.msk [vmem:[#allocation2 + $0x1a8] sm:$0x3] %vm645, 0.0
        %s698 = scalar_lea.vmem [#allocation2], 24
        %699 = vst.msk [vmem:[%s698 + $0x1] sm:$0xff] %vm317, %v277
        %700 = vst.msk [vmem:[%s698 + $0x9] sm:$0xff] %vm317, %v278
        %701 = vst.msk [vmem:[%s698 + $0x19] sm:$0xff] %vm317, %v279
        %702 = vst.msk [vmem:[%s698 + $0x21] sm:$0xff] %vm317, %v280
        %703 = vst.msk [vmem:[%s698 + $0x31] sm:$0xff] %vm317, %v281
        %704 = vst.msk [vmem:[%s698 + $0x39] sm:$0xff] %vm317, %v282
        %705 = vst.msk [vmem:[%s698 + $0x49] sm:$0xff] %vm317, %v283
        %706 = vst.msk [vmem:[%s698 + $0x51] sm:$0xff] %vm317, %v284
        %707 = vst.msk [vmem:[%s698 + $0x61] sm:$0xff] %vm317, %v285
        %708 = vst.msk [vmem:[%s698 + $0x69] sm:$0xff] %vm317, %v286
        %709 = vst.msk [vmem:[%s698 + $0x79] sm:$0xff] %vm317, %v287
        %710 = vst.msk [vmem:[%s698 + $0x81] sm:$0xff] %vm317, %v288
        %711 = vst.msk [vmem:[%s698 + $0x91] sm:$0xff] %vm317, %v289
        %712 = vst.msk [vmem:[%s698 + $0x99] sm:$0xff] %vm317, %v290
        %713 = vst.msk [vmem:[%s698 + $0xa9] sm:$0xff] %vm317, %v291
        %714 = vst.msk [vmem:[%s698 + $0xb1] sm:$0xff] %vm317, %v292
        %715 = vst.msk [vmem:[%s698 + $0xc1] sm:$0xff] %vm317, %v293
        %716 = vst.msk [vmem:[%s698 + $0xc9] sm:$0xff] %vm317, %v294
        %717 = vst.msk [vmem:[%s698 + $0xd9] sm:$0xff] %vm317, %v295
        %718 = vst.msk [vmem:[%s698 + $0xe1] sm:$0xff] %vm317, %v296
        %719 = vst.msk [vmem:[%s698 + $0xf1] sm:$0xff] %vm317, %v297
        %720 = vst.msk [vmem:[%s698 + $0xf9] sm:$0xff] %vm317, %v298
        %721 = vst.msk [vmem:[%s698 + $0x109] sm:$0xff] %vm317, %v299
        %722 = vst.msk [vmem:[%s698 + $0x111] sm:$0xff] %vm317, %v300
        %723 = vst.msk [vmem:[%s698 + $0x121] sm:$0xff] %vm317, %v301
        %724 = vst.msk [vmem:[%s698 + $0x129] sm:$0xff] %vm317, %v302
        %725 = vst.msk [vmem:[%s698 + $0x139] sm:$0xff] %vm317, %v303
        %726 = vst.msk [vmem:[%s698 + $0x141] sm:$0xff] %vm317, %v304
        %727 = vst.msk [vmem:[%s698 + $0x151] sm:$0xff] %vm317, %v305
        %728 = vst.msk [vmem:[%s698 + $0x159] sm:$0xff] %vm317, %v306
        %729 = vst.msk [vmem:[%s698 + $0x169] sm:$0xff] %vm317, %v307
        %730 = vst.msk [vmem:[%s698 + $0x171] sm:$0xff] %vm317, %v308
        %v731 = vld [vmem:[#allocation2] sm:$0xff]
        %v732 = vld [vmem:[#allocation2 + $0x8] sm:$0xff]
        %v733 = vld [vmem:[#allocation2 + $0x10] sm:$0x3]
        %v734 = vld [vmem:[#allocation2 + $0x18] sm:$0xff]
        %v735 = vld [vmem:[#allocation2 + $0x20] sm:$0xff]
        %v736 = vld [vmem:[#allocation2 + $0x28] sm:$0x3]
        %v737 = vld [vmem:[#allocation2 + $0x30] sm:$0xff]
        %v738 = vld [vmem:[#allocation2 + $0x38] sm:$0xff]
        %v739 = vld [vmem:[#allocation2 + $0x40] sm:$0x3]
        %v740 = vld [vmem:[#allocation2 + $0x48] sm:$0xff]
        %v741 = vld [vmem:[#allocation2 + $0x50] sm:$0xff]
        %v742 = vld [vmem:[#allocation2 + $0x58] sm:$0x3]
        %v743 = vld [vmem:[#allocation2 + $0x60] sm:$0xff]
        %v744 = vld [vmem:[#allocation2 + $0x68] sm:$0xff]
        %v745 = vld [vmem:[#allocation2 + $0x70] sm:$0x3]
        %v746 = vld [vmem:[#allocation2 + $0x78] sm:$0xff]
        %v747 = vld [vmem:[#allocation2 + $0x80] sm:$0xff]
        %v748 = vld [vmem:[#allocation2 + $0x88] sm:$0x3]
        %v749 = vld [vmem:[#allocation2 + $0x90] sm:$0xff]
        %v750 = vld [vmem:[#allocation2 + $0x98] sm:$0xff]
        %v751 = vld [vmem:[#allocation2 + $0xa0] sm:$0x3]
        %v752 = vld [vmem:[#allocation2 + $0xa8] sm:$0xff]
        %v753 = vld [vmem:[#allocation2 + $0xb0] sm:$0xff]
        %v754 = vld [vmem:[#allocation2 + $0xb8] sm:$0x3]
        %v755 = vld [vmem:[#allocation2 + $0xc0] sm:$0xff]
        %v756 = vld [vmem:[#allocation2 + $0xc8] sm:$0xff]
        %v757 = vld [vmem:[#allocation2 + $0xd0] sm:$0x3]
        %v758 = vld [vmem:[#allocation2 + $0xd8] sm:$0xff]
        %v759 = vld [vmem:[#allocation2 + $0xe0] sm:$0xff]
        %v760 = vld [vmem:[#allocation2 + $0xe8] sm:$0x3]
        %v761 = vld [vmem:[#allocation2 + $0xf0] sm:$0xff]
        %v762 = vld [vmem:[#allocation2 + $0xf8] sm:$0xff]
        %v763 = vld [vmem:[#allocation2 + $0x100] sm:$0x3]
        %v764 = vld [vmem:[#allocation2 + $0x108] sm:$0xff]
        %v765 = vld [vmem:[#allocation2 + $0x110] sm:$0xff]
        %v766 = vld [vmem:[#allocation2 + $0x118] sm:$0x3]
        %v767 = vld [vmem:[#allocation2 + $0x120] sm:$0xff]
        %v768 = vld [vmem:[#allocation2 + $0x128] sm:$0xff]
        %v769 = vld [vmem:[#allocation2 + $0x130] sm:$0x3]
        %v770 = vld [vmem:[#allocation2 + $0x138] sm:$0xff]
        %v771 = vld [vmem:[#allocation2 + $0x140] sm:$0xff]
        %v772 = vld [vmem:[#allocation2 + $0x148] sm:$0x3]
        %v773 = vld [vmem:[#allocation2 + $0x150] sm:$0xff]
        %v774 = vld [vmem:[#allocation2 + $0x158] sm:$0xff]
        %v775 = vld [vmem:[#allocation2 + $0x160] sm:$0x3]
        %v776 = vld [vmem:[#allocation2 + $0x168] sm:$0xff]
        %v777 = vld [vmem:[#allocation2 + $0x170] sm:$0xff]
        %v778 = vld [vmem:[#allocation2 + $0x178] sm:$0x3]
        %v779 = vld [vmem:[#allocation2 + $0x180] sm:$0xff]
        %v780 = vld [vmem:[#allocation2 + $0x188] sm:$0xff]
        %v781 = vld [vmem:[#allocation2 + $0x190] sm:$0x3]
        %v782 = vld [vmem:[#allocation2 + $0x198] sm:$0xff]
        %v783 = vld [vmem:[#allocation2 + $0x1a0] sm:$0xff]
        %v784 = vld [vmem:[#allocation2 + $0x1a8] sm:$0x3]
        %vm833 = vcmask 1046528
        %v834 = vrot.slane %v731, 1
        %v835 = vrot.slane %v732, 1
        %v836 = vsel %vm833, %v834, %v835
        %v837 = vrot.slane %v733, 1
        %v838 = vsel %vm833, %v835, %v837
        %v839 = vrot.slane %v734, 1
        %v840 = vrot.slane %v735, 1
        %v841 = vsel %vm833, %v839, %v840
        %v842 = vrot.slane %v736, 1
        %v843 = vsel %vm833, %v840, %v842
        %v844 = vrot.slane %v737, 1
        %v845 = vrot.slane %v738, 1
        %v846 = vsel %vm833, %v844, %v845
        %v847 = vrot.slane %v739, 1
        %v848 = vsel %vm833, %v845, %v847
        %v849 = vrot.slane %v740, 1
        %v850 = vrot.slane %v741, 1
        %v851 = vsel %vm833, %v849, %v850
        %v852 = vrot.slane %v742, 1
        %v853 = vsel %vm833, %v850, %v852
        %v854 = vrot.slane %v743, 1
        %v855 = vrot.slane %v744, 1
        %v856 = vsel %vm833, %v854, %v855
        %v857 = vrot.slane %v745, 1
        %v858 = vsel %vm833, %v855, %v857
        %v859 = vrot.slane %v746, 1
        %v860 = vrot.slane %v747, 1
        %v861 = vsel %vm833, %v859, %v860
        %v862 = vrot.slane %v748, 1
        %v863 = vsel %vm833, %v860, %v862
        %v864 = vrot.slane %v749, 1
        %v865 = vrot.slane %v750, 1
        %v866 = vsel %vm833, %v864, %v865
        %v867 = vrot.slane %v751, 1
        %v868 = vsel %vm833, %v865, %v867
        %v869 = vrot.slane %v752, 1
        %v870 = vrot.slane %v753, 1
        %v871 = vsel %vm833, %v869, %v870
        %v872 = vrot.slane %v754, 1
        %v873 = vsel %vm833, %v870, %v872
        %v874 = vrot.slane %v755, 1
        %v875 = vrot.slane %v756, 1
        %v876 = vsel %vm833, %v874, %v875
        %v877 = vrot.slane %v757, 1
        %v878 = vsel %vm833, %v875, %v877
        %v879 = vrot.slane %v758, 1
        %v880 = vrot.slane %v759, 1
        %v881 = vsel %vm833, %v879, %v880
        %v882 = vrot.slane %v760, 1
        %v883 = vsel %vm833, %v880, %v882
        %v884 = vrot.slane %v761, 1
        %v885 = vrot.slane %v762, 1
        %v886 = vsel %vm833, %v884, %v885
        %v887 = vrot.slane %v763, 1
        %v888 = vsel %vm833, %v885, %v887
        %v889 = vrot.slane %v764, 1
        %v890 = vrot.slane %v765, 1
        %v891 = vsel %vm833, %v889, %v890
        %v892 = vrot.slane %v766, 1
        %v893 = vsel %vm833, %v890, %v892
        %v894 = vrot.slane %v767, 1
        %v895 = vrot.slane %v768, 1
        %v896 = vsel %vm833, %v894, %v895
        %v897 = vrot.slane %v769, 1
        %v898 = vsel %vm833, %v895, %v897
        %v899 = vrot.slane %v770, 1
        %v900 = vrot.slane %v771, 1
        %v901 = vsel %vm833, %v899, %v900
        %v902 = vrot.slane %v772, 1
        %v903 = vsel %vm833, %v900, %v902
        %v904 = vrot.slane %v773, 1
        %v905 = vrot.slane %v774, 1
        %v906 = vsel %vm833, %v904, %v905
        %v907 = vrot.slane %v775, 1
        %v908 = vsel %vm833, %v905, %v907
        %v909 = vrot.slane %v776, 1
        %v910 = vrot.slane %v777, 1
        %v911 = vsel %vm833, %v909, %v910
        %v912 = vrot.slane %v778, 1
        %v913 = vsel %vm833, %v910, %v912
        %vm914 = vcmask 1045504
        %v915 = vrot.slane %v731, 2
        %v916 = vrot.slane %v732, 2
        %v917 = vsel %vm914, %v915, %v916
        %v918 = vrot.slane %v733, 2
        %v919 = vsel %vm914, %v916, %v918
        %v920 = vrot.slane %v734, 2
        %v921 = vrot.slane %v735, 2
        %v922 = vsel %vm914, %v920, %v921
        %v923 = vrot.slane %v736, 2
        %v924 = vsel %vm914, %v921, %v923
        %v925 = vrot.slane %v737, 2
        %v926 = vrot.slane %v738, 2
        %v927 = vsel %vm914, %v925, %v926
        %v928 = vrot.slane %v739, 2
        %v929 = vsel %vm914, %v926, %v928
        %v930 = vrot.slane %v740, 2
        %v931 = vrot.slane %v741, 2
        %v932 = vsel %vm914, %v930, %v931
        %v933 = vrot.slane %v742, 2
        %v934 = vsel %vm914, %v931, %v933
        %v935 = vrot.slane %v743, 2
        %v936 = vrot.slane %v744, 2
        %v937 = vsel %vm914, %v935, %v936
        %v938 = vrot.slane %v745, 2
        %v939 = vsel %vm914, %v936, %v938
        %v940 = vrot.slane %v746, 2
        %v941 = vrot.slane %v747, 2
        %v942 = vsel %vm914, %v940, %v941
        %v943 = vrot.slane %v748, 2
        %v944 = vsel %vm914, %v941, %v943
        %v945 = vrot.slane %v749, 2
        %v946 = vrot.slane %v750, 2
        %v947 = vsel %vm914, %v945, %v946
        %v948 = vrot.slane %v751, 2
        %v949 = vsel %vm914, %v946, %v948
        %v950 = vrot.slane %v752, 2
        %v951 = vrot.slane %v753, 2
        %v952 = vsel %vm914, %v950, %v951
        %v953 = vrot.slane %v754, 2
        %v954 = vsel %vm914, %v951, %v953
        %v955 = vrot.slane %v755, 2
        %v956 = vrot.slane %v756, 2
        %v957 = vsel %vm914, %v955, %v956
        %v958 = vrot.slane %v757, 2
        %v959 = vsel %vm914, %v956, %v958
        %v960 = vrot.slane %v758, 2
        %v961 = vrot.slane %v759, 2
        %v962 = vsel %vm914, %v960, %v961
        %v963 = vrot.slane %v760, 2
        %v964 = vsel %vm914, %v961, %v963
        %v965 = vrot.slane %v761, 2
        %v966 = vrot.slane %v762, 2
        %v967 = vsel %vm914, %v965, %v966
        %v968 = vrot.slane %v763, 2
        %v969 = vsel %vm914, %v966, %v968
        %v970 = vrot.slane %v764, 2
        %v971 = vrot.slane %v765, 2
        %v972 = vsel %vm914, %v970, %v971
        %v973 = vrot.slane %v766, 2
        %v974 = vsel %vm914, %v971, %v973
        %v975 = vrot.slane %v767, 2
        %v976 = vrot.slane %v768, 2
        %v977 = vsel %vm914, %v975, %v976
        %v978 = vrot.slane %v769, 2
        %v979 = vsel %vm914, %v976, %v978
        %v980 = vrot.slane %v770, 2
        %v981 = vrot.slane %v771, 2
        %v982 = vsel %vm914, %v980, %v981
        %v983 = vrot.slane %v772, 2
        %v984 = vsel %vm914, %v981, %v983
        %v985 = vrot.slane %v773, 2
        %v986 = vrot.slane %v774, 2
        %v987 = vsel %vm914, %v985, %v986
        %v988 = vrot.slane %v775, 2
        %v989 = vsel %vm914, %v986, %v988
        %v990 = vrot.slane %v776, 2
        %v991 = vrot.slane %v777, 2
        %v992 = vsel %vm914, %v990, %v991
        %v993 = vrot.slane %v778, 2
        %v994 = vsel %vm914, %v991, %v993
        %v998 = vrot.slane %v779, 1
        %v999 = vrot.slane %v780, 1
        %v1000 = vsel %vm833, %v998, %v999
        %v1001 = vrot.slane %v781, 1
        %v1002 = vsel %vm833, %v999, %v1001
        %v1003 = vrot.slane %v779, 2
        %v1004 = vrot.slane %v780, 2
        %v1005 = vsel %vm914, %v1003, %v1004
        %v1006 = vrot.slane %v781, 2
        %v1007 = vsel %vm914, %v1004, %v1006
        %v1011 = vrot.slane %v782, 1
        %v1012 = vrot.slane %v783, 1
        %v1013 = vsel %vm833, %v1011, %v1012
        %v1014 = vrot.slane %v784, 1
        %v1015 = vsel %vm833, %v1012, %v1014
        %v1016 = vrot.slane %v782, 2
        %v1017 = vrot.slane %v783, 2
        %v1018 = vsel %vm914, %v1016, %v1017
        %v1019 = vrot.slane %v784, 2
        %v1020 = vsel %vm914, %v1017, %v1019
        %1021 = vrot.lane.b32.xlu0 %v836, 4
        %v1022 = vpop.permute.xlu0 %1021
        %1023 = vrot.lane.b32.xlu0 %v838, 4
        %v1024 = vpop.permute.xlu0 %1023
        %1025 = vrot.lane.b32.xlu0 %v841, 4
        %v1026 = vpop.permute.xlu0 %1025
        %1027 = vrot.lane.b32.xlu0 %v843, 4
        %v1028 = vpop.permute.xlu0 %1027
        %1029 = vrot.lane.b32.xlu0 %v846, 4
        %v1030 = vpop.permute.xlu0 %1029
        %1031 = vrot.lane.b32.xlu0 %v848, 4
        %v1032 = vpop.permute.xlu0 %1031
        %1033 = vrot.lane.b32.xlu0 %v851, 4
        %v1034 = vpop.permute.xlu0 %1033
        %1035 = vrot.lane.b32.xlu0 %v853, 4
        %v1036 = vpop.permute.xlu0 %1035
        %1037 = vrot.lane.b32.xlu0 %v856, 4
        %v1038 = vpop.permute.xlu0 %1037
        %1039 = vrot.lane.b32.xlu0 %v858, 4
        %v1040 = vpop.permute.xlu0 %1039
        %1041 = vrot.lane.b32.xlu0 %v861, 4
        %v1042 = vpop.permute.xlu0 %1041
        %1043 = vrot.lane.b32.xlu0 %v863, 4
        %v1044 = vpop.permute.xlu0 %1043
        %1045 = vrot.lane.b32.xlu0 %v866, 4
        %v1046 = vpop.permute.xlu0 %1045
        %1047 = vrot.lane.b32.xlu0 %v868, 4
        %v1048 = vpop.permute.xlu0 %1047
        %1049 = vrot.lane.b32.xlu0 %v871, 4
        %v1050 = vpop.permute.xlu0 %1049
        %1051 = vrot.lane.b32.xlu0 %v873, 4
        %v1052 = vpop.permute.xlu0 %1051
        %1053 = vrot.lane.b32.xlu0 %v876, 4
        %v1054 = vpop.permute.xlu0 %1053
        %1055 = vrot.lane.b32.xlu0 %v878, 4
        %v1056 = vpop.permute.xlu0 %1055
        %1057 = vrot.lane.b32.xlu0 %v881, 4
        %v1058 = vpop.permute.xlu0 %1057
        %1059 = vrot.lane.b32.xlu0 %v883, 4
        %v1060 = vpop.permute.xlu0 %1059
        %1061 = vrot.lane.b32.xlu0 %v886, 4
        %v1062 = vpop.permute.xlu0 %1061
        %1063 = vrot.lane.b32.xlu0 %v888, 4
        %v1064 = vpop.permute.xlu0 %1063
        %1065 = vrot.lane.b32.xlu0 %v891, 4
        %v1066 = vpop.permute.xlu0 %1065
        %1067 = vrot.lane.b32.xlu0 %v893, 4
        %v1068 = vpop.permute.xlu0 %1067
        %1069 = vrot.lane.b32.xlu0 %v896, 4
        %v1070 = vpop.permute.xlu0 %1069
        %1071 = vrot.lane.b32.xlu0 %v898, 4
        %v1072 = vpop.permute.xlu0 %1071
        %1073 = vrot.lane.b32.xlu0 %v901, 4
        %v1074 = vpop.permute.xlu0 %1073
        %1075 = vrot.lane.b32.xlu0 %v903, 4
        %v1076 = vpop.permute.xlu0 %1075
        %1077 = vrot.lane.b32.xlu0 %v906, 4
        %v1078 = vpop.permute.xlu0 %1077
        %1079 = vrot.lane.b32.xlu0 %v908, 4
        %v1080 = vpop.permute.xlu0 %1079
        %1081 = vrot.lane.b32.xlu0 %v911, 4
        %v1082 = vpop.permute.xlu0 %1081
        %1083 = vrot.lane.b32.xlu0 %v913, 4
        %v1084 = vpop.permute.xlu0 %1083
        %1117 = vrot.lane.b32.xlu0 %v917, 8
        %v1118 = vpop.permute.xlu0 %1117
        %1119 = vrot.lane.b32.xlu0 %v919, 8
        %v1120 = vpop.permute.xlu0 %1119
        %1121 = vrot.lane.b32.xlu0 %v922, 8
        %v1122 = vpop.permute.xlu0 %1121
        %1123 = vrot.lane.b32.xlu0 %v924, 8
        %v1124 = vpop.permute.xlu0 %1123
        %1125 = vrot.lane.b32.xlu0 %v927, 8
        %v1126 = vpop.permute.xlu0 %1125
        %1127 = vrot.lane.b32.xlu0 %v929, 8
        %v1128 = vpop.permute.xlu0 %1127
        %1129 = vrot.lane.b32.xlu0 %v932, 8
        %v1130 = vpop.permute.xlu0 %1129
        %1131 = vrot.lane.b32.xlu0 %v934, 8
        %v1132 = vpop.permute.xlu0 %1131
        %1133 = vrot.lane.b32.xlu0 %v937, 8
        %v1134 = vpop.permute.xlu0 %1133
        %1135 = vrot.lane.b32.xlu0 %v939, 8
        %v1136 = vpop.permute.xlu0 %1135
        %1137 = vrot.lane.b32.xlu0 %v942, 8
        %v1138 = vpop.permute.xlu0 %1137
        %1139 = vrot.lane.b32.xlu0 %v944, 8
        %v1140 = vpop.permute.xlu0 %1139
        %1141 = vrot.lane.b32.xlu0 %v947, 8
        %v1142 = vpop.permute.xlu0 %1141
        %1143 = vrot.lane.b32.xlu0 %v949, 8
        %v1144 = vpop.permute.xlu0 %1143
        %1145 = vrot.lane.b32.xlu0 %v952, 8
        %v1146 = vpop.permute.xlu0 %1145
        %1147 = vrot.lane.b32.xlu0 %v954, 8
        %v1148 = vpop.permute.xlu0 %1147
        %1149 = vrot.lane.b32.xlu0 %v957, 8
        %v1150 = vpop.permute.xlu0 %1149
        %1151 = vrot.lane.b32.xlu0 %v959, 8
        %v1152 = vpop.permute.xlu0 %1151
        %1153 = vrot.lane.b32.xlu0 %v962, 8
        %v1154 = vpop.permute.xlu0 %1153
        %1155 = vrot.lane.b32.xlu0 %v964, 8
        %v1156 = vpop.permute.xlu0 %1155
        %1157 = vrot.lane.b32.xlu0 %v967, 8
        %v1158 = vpop.permute.xlu0 %1157
        %1159 = vrot.lane.b32.xlu0 %v969, 8
        %v1160 = vpop.permute.xlu0 %1159
        %1161 = vrot.lane.b32.xlu0 %v972, 8
        %v1162 = vpop.permute.xlu0 %1161
        %1163 = vrot.lane.b32.xlu0 %v974, 8
        %v1164 = vpop.permute.xlu0 %1163
        %1165 = vrot.lane.b32.xlu0 %v977, 8
        %v1166 = vpop.permute.xlu0 %1165
        %1167 = vrot.lane.b32.xlu0 %v979, 8
        %v1168 = vpop.permute.xlu0 %1167
        %1169 = vrot.lane.b32.xlu0 %v982, 8
        %v1170 = vpop.permute.xlu0 %1169
        %1171 = vrot.lane.b32.xlu0 %v984, 8
        %v1172 = vpop.permute.xlu0 %1171
        %1173 = vrot.lane.b32.xlu0 %v987, 8
        %v1174 = vpop.permute.xlu0 %1173
        %1175 = vrot.lane.b32.xlu0 %v989, 8
        %v1176 = vpop.permute.xlu0 %1175
        %1177 = vrot.lane.b32.xlu0 %v992, 8
        %v1178 = vpop.permute.xlu0 %1177
        %1179 = vrot.lane.b32.xlu0 %v994, 8
        %v1180 = vpop.permute.xlu0 %1179
        %1213 = vrot.lane.b32.xlu0 %v734, 12
        %v1214 = vpop.permute.xlu0 %1213
        %1215 = vrot.lane.b32.xlu0 %v735, 12
        %v1216 = vpop.permute.xlu0 %1215
        %1217 = vrot.lane.b32.xlu0 %v737, 12
        %v1218 = vpop.permute.xlu0 %1217
        %1219 = vrot.lane.b32.xlu0 %v738, 12
        %v1220 = vpop.permute.xlu0 %1219
        %1221 = vrot.lane.b32.xlu0 %v740, 12
        %v1222 = vpop.permute.xlu0 %1221
        %1223 = vrot.lane.b32.xlu0 %v741, 12
        %v1224 = vpop.permute.xlu0 %1223
        %1225 = vrot.lane.b32.xlu0 %v743, 12
        %v1226 = vpop.permute.xlu0 %1225
        %1227 = vrot.lane.b32.xlu0 %v744, 12
        %v1228 = vpop.permute.xlu0 %1227
        %1229 = vrot.lane.b32.xlu0 %v746, 12
        %v1230 = vpop.permute.xlu0 %1229
        %1231 = vrot.lane.b32.xlu0 %v747, 12
        %v1232 = vpop.permute.xlu0 %1231
        %1233 = vrot.lane.b32.xlu0 %v749, 12
        %v1234 = vpop.permute.xlu0 %1233
        %1235 = vrot.lane.b32.xlu0 %v750, 12
        %v1236 = vpop.permute.xlu0 %1235
        %1237 = vrot.lane.b32.xlu0 %v752, 12
        %v1238 = vpop.permute.xlu0 %1237
        %1239 = vrot.lane.b32.xlu0 %v753, 12
        %v1240 = vpop.permute.xlu0 %1239
        %1241 = vrot.lane.b32.xlu0 %v755, 12
        %v1242 = vpop.permute.xlu0 %1241
        %1243 = vrot.lane.b32.xlu0 %v756, 12
        %v1244 = vpop.permute.xlu0 %1243
        %1245 = vrot.lane.b32.xlu0 %v758, 12
        %v1246 = vpop.permute.xlu0 %1245
        %1247 = vrot.lane.b32.xlu0 %v759, 12
        %v1248 = vpop.permute.xlu0 %1247
        %1249 = vrot.lane.b32.xlu0 %v761, 12
        %v1250 = vpop.permute.xlu0 %1249
        %1251 = vrot.lane.b32.xlu0 %v762, 12
        %v1252 = vpop.permute.xlu0 %1251
        %1253 = vrot.lane.b32.xlu0 %v764, 12
        %v1254 = vpop.permute.xlu0 %1253
        %1255 = vrot.lane.b32.xlu0 %v765, 12
        %v1256 = vpop.permute.xlu0 %1255
        %1257 = vrot.lane.b32.xlu0 %v767, 12
        %v1258 = vpop.permute.xlu0 %1257
        %1259 = vrot.lane.b32.xlu0 %v768, 12
        %v1260 = vpop.permute.xlu0 %1259
        %1261 = vrot.lane.b32.xlu0 %v770, 12
        %v1262 = vpop.permute.xlu0 %1261
        %1263 = vrot.lane.b32.xlu0 %v771, 12
        %v1264 = vpop.permute.xlu0 %1263
        %1265 = vrot.lane.b32.xlu0 %v773, 12
        %v1266 = vpop.permute.xlu0 %1265
        %1267 = vrot.lane.b32.xlu0 %v774, 12
        %v1268 = vpop.permute.xlu0 %1267
        %1269 = vrot.lane.b32.xlu0 %v776, 12
        %v1270 = vpop.permute.xlu0 %1269
        %1271 = vrot.lane.b32.xlu0 %v777, 12
        %v1272 = vpop.permute.xlu0 %1271
        %1273 = vrot.lane.b32.xlu0 %v779, 12
        %v1274 = vpop.permute.xlu0 %1273
        %1275 = vrot.lane.b32.xlu0 %v780, 12
        %v1276 = vpop.permute.xlu0 %1275
        %1309 = vrot.lane.b32.xlu0 %v841, 16
        %v1310 = vpop.permute.xlu0 %1309
        %1311 = vrot.lane.b32.xlu0 %v843, 16
        %v1312 = vpop.permute.xlu0 %1311
        %1313 = vrot.lane.b32.xlu0 %v846, 16
        %v1314 = vpop.permute.xlu0 %1313
        %1315 = vrot.lane.b32.xlu0 %v848, 16
        %v1316 = vpop.permute.xlu0 %1315
        %1317 = vrot.lane.b32.xlu0 %v851, 16
        %v1318 = vpop.permute.xlu0 %1317
        %1319 = vrot.lane.b32.xlu0 %v853, 16
        %v1320 = vpop.permute.xlu0 %1319
        %1321 = vrot.lane.b32.xlu0 %v856, 16
        %v1322 = vpop.permute.xlu0 %1321
        %1323 = vrot.lane.b32.xlu0 %v858, 16
        %v1324 = vpop.permute.xlu0 %1323
        %1325 = vrot.lane.b32.xlu0 %v861, 16
        %v1326 = vpop.permute.xlu0 %1325
        %1327 = vrot.lane.b32.xlu0 %v863, 16
        %v1328 = vpop.permute.xlu0 %1327
        %1329 = vrot.lane.b32.xlu0 %v866, 16
        %v1330 = vpop.permute.xlu0 %1329
        %1331 = vrot.lane.b32.xlu0 %v868, 16
        %v1332 = vpop.permute.xlu0 %1331
        %1333 = vrot.lane.b32.xlu0 %v871, 16
        %v1334 = vpop.permute.xlu0 %1333
        %1335 = vrot.lane.b32.xlu0 %v873, 16
        %v1336 = vpop.permute.xlu0 %1335
        %1337 = vrot.lane.b32.xlu0 %v876, 16
        %v1338 = vpop.permute.xlu0 %1337
        %1339 = vrot.lane.b32.xlu0 %v878, 16
        %v1340 = vpop.permute.xlu0 %1339
        %1341 = vrot.lane.b32.xlu0 %v881, 16
        %v1342 = vpop.permute.xlu0 %1341
        %1343 = vrot.lane.b32.xlu0 %v883, 16
        %v1344 = vpop.permute.xlu0 %1343
        %1345 = vrot.lane.b32.xlu0 %v886, 16
        %v1346 = vpop.permute.xlu0 %1345
        %1347 = vrot.lane.b32.xlu0 %v888, 16
        %v1348 = vpop.permute.xlu0 %1347
        %1349 = vrot.lane.b32.xlu0 %v891, 16
        %v1350 = vpop.permute.xlu0 %1349
        %1351 = vrot.lane.b32.xlu0 %v893, 16
        %v1352 = vpop.permute.xlu0 %1351
        %1353 = vrot.lane.b32.xlu0 %v896, 16
        %v1354 = vpop.permute.xlu0 %1353
        %1355 = vrot.lane.b32.xlu0 %v898, 16
        %v1356 = vpop.permute.xlu0 %1355
        %1357 = vrot.lane.b32.xlu0 %v901, 16
        %v1358 = vpop.permute.xlu0 %1357
        %1359 = vrot.lane.b32.xlu0 %v903, 16
        %v1360 = vpop.permute.xlu0 %1359
        %1361 = vrot.lane.b32.xlu0 %v906, 16
        %v1362 = vpop.permute.xlu0 %1361
        %1363 = vrot.lane.b32.xlu0 %v908, 16
        %v1364 = vpop.permute.xlu0 %1363
        %1365 = vrot.lane.b32.xlu0 %v911, 16
        %v1366 = vpop.permute.xlu0 %1365
        %1367 = vrot.lane.b32.xlu0 %v913, 16
        %v1368 = vpop.permute.xlu0 %1367
        %1369 = vrot.lane.b32.xlu0 %v1000, 16
        %v1370 = vpop.permute.xlu0 %1369
        %1371 = vrot.lane.b32.xlu0 %v1002, 16
        %v1372 = vpop.permute.xlu0 %1371
        %1405 = vrot.lane.b32.xlu0 %v922, 20
        %v1406 = vpop.permute.xlu0 %1405
        %1407 = vrot.lane.b32.xlu0 %v924, 20
        %v1408 = vpop.permute.xlu0 %1407
        %1409 = vrot.lane.b32.xlu0 %v927, 20
        %v1410 = vpop.permute.xlu0 %1409
        %1411 = vrot.lane.b32.xlu0 %v929, 20
        %v1412 = vpop.permute.xlu0 %1411
        %1413 = vrot.lane.b32.xlu0 %v932, 20
        %v1414 = vpop.permute.xlu0 %1413
        %1415 = vrot.lane.b32.xlu0 %v934, 20
        %v1416 = vpop.permute.xlu0 %1415
        %1417 = vrot.lane.b32.xlu0 %v937, 20
        %v1418 = vpop.permute.xlu0 %1417
        %1419 = vrot.lane.b32.xlu0 %v939, 20
        %v1420 = vpop.permute.xlu0 %1419
        %1421 = vrot.lane.b32.xlu0 %v942, 20
        %v1422 = vpop.permute.xlu0 %1421
        %1423 = vrot.lane.b32.xlu0 %v944, 20
        %v1424 = vpop.permute.xlu0 %1423
        %1425 = vrot.lane.b32.xlu0 %v947, 20
        %v1426 = vpop.permute.xlu0 %1425
        %1427 = vrot.lane.b32.xlu0 %v949, 20
        %v1428 = vpop.permute.xlu0 %1427
        %1429 = vrot.lane.b32.xlu0 %v952, 20
        %v1430 = vpop.permute.xlu0 %1429
        %1431 = vrot.lane.b32.xlu0 %v954, 20
        %v1432 = vpop.permute.xlu0 %1431
        %1433 = vrot.lane.b32.xlu0 %v957, 20
        %v1434 = vpop.permute.xlu0 %1433
        %1435 = vrot.lane.b32.xlu0 %v959, 20
        %v1436 = vpop.permute.xlu0 %1435
        %1437 = vrot.lane.b32.xlu0 %v962, 20
        %v1438 = vpop.permute.xlu0 %1437
        %1439 = vrot.lane.b32.xlu0 %v964, 20
        %v1440 = vpop.permute.xlu0 %1439
        %1441 = vrot.lane.b32.xlu0 %v967, 20
        %v1442 = vpop.permute.xlu0 %1441
        %1443 = vrot.lane.b32.xlu0 %v969, 20
        %v1444 = vpop.permute.xlu0 %1443
        %1445 = vrot.lane.b32.xlu0 %v972, 20
        %v1446 = vpop.permute.xlu0 %1445
        %1447 = vrot.lane.b32.xlu0 %v974, 20
        %v1448 = vpop.permute.xlu0 %1447
        %1449 = vrot.lane.b32.xlu0 %v977, 20
        %v1450 = vpop.permute.xlu0 %1449
        %1451 = vrot.lane.b32.xlu0 %v979, 20
        %v1452 = vpop.permute.xlu0 %1451
        %1453 = vrot.lane.b32.xlu0 %v982, 20
        %v1454 = vpop.permute.xlu0 %1453
        %1455 = vrot.lane.b32.xlu0 %v984, 20
        %v1456 = vpop.permute.xlu0 %1455
        %1457 = vrot.lane.b32.xlu0 %v987, 20
        %v1458 = vpop.permute.xlu0 %1457
        %1459 = vrot.lane.b32.xlu0 %v989, 20
        %v1460 = vpop.permute.xlu0 %1459
        %1461 = vrot.lane.b32.xlu0 %v992, 20
        %v1462 = vpop.permute.xlu0 %1461
        %1463 = vrot.lane.b32.xlu0 %v994, 20
        %v1464 = vpop.permute.xlu0 %1463
        %1465 = vrot.lane.b32.xlu0 %v1005, 20
        %v1466 = vpop.permute.xlu0 %1465
        %1467 = vrot.lane.b32.xlu0 %v1007, 20
        %v1468 = vpop.permute.xlu0 %1467
        %1501 = vrot.lane.b32.xlu0 %v737, 24
        %v1502 = vpop.permute.xlu0 %1501
        %1503 = vrot.lane.b32.xlu0 %v738, 24
        %v1504 = vpop.permute.xlu0 %1503
        %1505 = vrot.lane.b32.xlu0 %v740, 24
        %v1506 = vpop.permute.xlu0 %1505
        %1507 = vrot.lane.b32.xlu0 %v741, 24
        %v1508 = vpop.permute.xlu0 %1507
        %1509 = vrot.lane.b32.xlu0 %v743, 24
        %v1510 = vpop.permute.xlu0 %1509
        %1511 = vrot.lane.b32.xlu0 %v744, 24
        %v1512 = vpop.permute.xlu0 %1511
        %1513 = vrot.lane.b32.xlu0 %v746, 24
        %v1514 = vpop.permute.xlu0 %1513
        %1515 = vrot.lane.b32.xlu0 %v747, 24
        %v1516 = vpop.permute.xlu0 %1515
        %1517 = vrot.lane.b32.xlu0 %v749, 24
        %v1518 = vpop.permute.xlu0 %1517
        %1519 = vrot.lane.b32.xlu0 %v750, 24
        %v1520 = vpop.permute.xlu0 %1519
        %1521 = vrot.lane.b32.xlu0 %v752, 24
        %v1522 = vpop.permute.xlu0 %1521
        %1523 = vrot.lane.b32.xlu0 %v753, 24
        %v1524 = vpop.permute.xlu0 %1523
        %1525 = vrot.lane.b32.xlu0 %v755, 24
        %v1526 = vpop.permute.xlu0 %1525
        %1527 = vrot.lane.b32.xlu0 %v756, 24
        %v1528 = vpop.permute.xlu0 %1527
        %1529 = vrot.lane.b32.xlu0 %v758, 24
        %v1530 = vpop.permute.xlu0 %1529
        %1531 = vrot.lane.b32.xlu0 %v759, 24
        %v1532 = vpop.permute.xlu0 %1531
        %1533 = vrot.lane.b32.xlu0 %v761, 24
        %v1534 = vpop.permute.xlu0 %1533
        %1535 = vrot.lane.b32.xlu0 %v762, 24
        %v1536 = vpop.permute.xlu0 %1535
        %1537 = vrot.lane.b32.xlu0 %v764, 24
        %v1538 = vpop.permute.xlu0 %1537
        %1539 = vrot.lane.b32.xlu0 %v765, 24
        %v1540 = vpop.permute.xlu0 %1539
        %1541 = vrot.lane.b32.xlu0 %v767, 24
        %v1542 = vpop.permute.xlu0 %1541
        %1543 = vrot.lane.b32.xlu0 %v768, 24
        %v1544 = vpop.permute.xlu0 %1543
        %1545 = vrot.lane.b32.xlu0 %v770, 24
        %v1546 = vpop.permute.xlu0 %1545
        %1547 = vrot.lane.b32.xlu0 %v771, 24
        %v1548 = vpop.permute.xlu0 %1547
        %1549 = vrot.lane.b32.xlu0 %v773, 24
        %v1550 = vpop.permute.xlu0 %1549
        %1551 = vrot.lane.b32.xlu0 %v774, 24
        %v1552 = vpop.permute.xlu0 %1551
        %1553 = vrot.lane.b32.xlu0 %v776, 24
        %v1554 = vpop.permute.xlu0 %1553
        %1555 = vrot.lane.b32.xlu0 %v777, 24
        %v1556 = vpop.permute.xlu0 %1555
        %1557 = vrot.lane.b32.xlu0 %v779, 24
        %v1558 = vpop.permute.xlu0 %1557
        %1559 = vrot.lane.b32.xlu0 %v780, 24
        %v1560 = vpop.permute.xlu0 %1559
        %1561 = vrot.lane.b32.xlu0 %v782, 24
        %v1562 = vpop.permute.xlu0 %1561
        %1563 = vrot.lane.b32.xlu0 %v783, 24
        %v1564 = vpop.permute.xlu0 %1563
        %1597 = vrot.lane.b32.xlu0 %v846, 28
        %v1598 = vpop.permute.xlu0 %1597
        %1599 = vrot.lane.b32.xlu0 %v848, 28
        %v1600 = vpop.permute.xlu0 %1599
        %1601 = vrot.lane.b32.xlu0 %v851, 28
        %v1602 = vpop.permute.xlu0 %1601
        %1603 = vrot.lane.b32.xlu0 %v853, 28
        %v1604 = vpop.permute.xlu0 %1603
        %1605 = vrot.lane.b32.xlu0 %v856, 28
        %v1606 = vpop.permute.xlu0 %1605
        %1607 = vrot.lane.b32.xlu0 %v858, 28
        %v1608 = vpop.permute.xlu0 %1607
        %1609 = vrot.lane.b32.xlu0 %v861, 28
        %v1610 = vpop.permute.xlu0 %1609
        %1611 = vrot.lane.b32.xlu0 %v863, 28
        %v1612 = vpop.permute.xlu0 %1611
        %1613 = vrot.lane.b32.xlu0 %v866, 28
        %v1614 = vpop.permute.xlu0 %1613
        %1615 = vrot.lane.b32.xlu0 %v868, 28
        %v1616 = vpop.permute.xlu0 %1615
        %1617 = vrot.lane.b32.xlu0 %v871, 28
        %v1618 = vpop.permute.xlu0 %1617
        %1619 = vrot.lane.b32.xlu0 %v873, 28
        %v1620 = vpop.permute.xlu0 %1619
        %1621 = vrot.lane.b32.xlu0 %v876, 28
        %v1622 = vpop.permute.xlu0 %1621
        %1623 = vrot.lane.b32.xlu0 %v878, 28
        %v1624 = vpop.permute.xlu0 %1623
        %1625 = vrot.lane.b32.xlu0 %v881, 28
        %v1626 = vpop.permute.xlu0 %1625
        %1627 = vrot.lane.b32.xlu0 %v883, 28
        %v1628 = vpop.permute.xlu0 %1627
        %1629 = vrot.lane.b32.xlu0 %v886, 28
        %v1630 = vpop.permute.xlu0 %1629
        %1631 = vrot.lane.b32.xlu0 %v888, 28
        %v1632 = vpop.permute.xlu0 %1631
        %1633 = vrot.lane.b32.xlu0 %v891, 28
        %v1634 = vpop.permute.xlu0 %1633
        %1635 = vrot.lane.b32.xlu0 %v893, 28
        %v1636 = vpop.permute.xlu0 %1635
        %1637 = vrot.lane.b32.xlu0 %v896, 28
        %v1638 = vpop.permute.xlu0 %1637
        %1639 = vrot.lane.b32.xlu0 %v898, 28
        %v1640 = vpop.permute.xlu0 %1639
        %1641 = vrot.lane.b32.xlu0 %v901, 28
        %v1642 = vpop.permute.xlu0 %1641
        %1643 = vrot.lane.b32.xlu0 %v903, 28
        %v1644 = vpop.permute.xlu0 %1643
        %1645 = vrot.lane.b32.xlu0 %v906, 28
        %v1646 = vpop.permute.xlu0 %1645
        %1647 = vrot.lane.b32.xlu0 %v908, 28
        %v1648 = vpop.permute.xlu0 %1647
        %1649 = vrot.lane.b32.xlu0 %v911, 28
        %v1650 = vpop.permute.xlu0 %1649
        %1651 = vrot.lane.b32.xlu0 %v913, 28
        %v1652 = vpop.permute.xlu0 %1651
        %1653 = vrot.lane.b32.xlu0 %v1000, 28
        %v1654 = vpop.permute.xlu0 %1653
        %1655 = vrot.lane.b32.xlu0 %v1002, 28
        %v1656 = vpop.permute.xlu0 %1655
        %1657 = vrot.lane.b32.xlu0 %v1013, 28
        %v1658 = vpop.permute.xlu0 %1657
        %1659 = vrot.lane.b32.xlu0 %v1015, 28
        %v1660 = vpop.permute.xlu0 %1659
        %1693 = vrot.lane.b32.xlu0 %v927, 32
        %v1694 = vpop.permute.xlu0 %1693
        %1695 = vrot.lane.b32.xlu0 %v929, 32
        %v1696 = vpop.permute.xlu0 %1695
        %1697 = vrot.lane.b32.xlu0 %v932, 32
        %v1698 = vpop.permute.xlu0 %1697
        %1699 = vrot.lane.b32.xlu0 %v934, 32
        %v1700 = vpop.permute.xlu0 %1699
        %1701 = vrot.lane.b32.xlu0 %v937, 32
        %v1702 = vpop.permute.xlu0 %1701
        %1703 = vrot.lane.b32.xlu0 %v939, 32
        %v1704 = vpop.permute.xlu0 %1703
        %1705 = vrot.lane.b32.xlu0 %v942, 32
        %v1706 = vpop.permute.xlu0 %1705
        %1707 = vrot.lane.b32.xlu0 %v944, 32
        %v1708 = vpop.permute.xlu0 %1707
        %1709 = vrot.lane.b32.xlu0 %v947, 32
        %v1710 = vpop.permute.xlu0 %1709
        %1711 = vrot.lane.b32.xlu0 %v949, 32
        %v1712 = vpop.permute.xlu0 %1711
        %1713 = vrot.lane.b32.xlu0 %v952, 32
        %v1714 = vpop.permute.xlu0 %1713
        %1715 = vrot.lane.b32.xlu0 %v954, 32
        %v1716 = vpop.permute.xlu0 %1715
        %1717 = vrot.lane.b32.xlu0 %v957, 32
        %v1718 = vpop.permute.xlu0 %1717
        %1719 = vrot.lane.b32.xlu0 %v959, 32
        %v1720 = vpop.permute.xlu0 %1719
        %1721 = vrot.lane.b32.xlu0 %v962, 32
        %v1722 = vpop.permute.xlu0 %1721
        %1723 = vrot.lane.b32.xlu0 %v964, 32
        %v1724 = vpop.permute.xlu0 %1723
        %1725 = vrot.lane.b32.xlu0 %v967, 32
        %v1726 = vpop.permute.xlu0 %1725
        %1727 = vrot.lane.b32.xlu0 %v969, 32
        %v1728 = vpop.permute.xlu0 %1727
        %1729 = vrot.lane.b32.xlu0 %v972, 32
        %v1730 = vpop.permute.xlu0 %1729
        %1731 = vrot.lane.b32.xlu0 %v974, 32
        %v1732 = vpop.permute.xlu0 %1731
        %1733 = vrot.lane.b32.xlu0 %v977, 32
        %v1734 = vpop.permute.xlu0 %1733
        %1735 = vrot.lane.b32.xlu0 %v979, 32
        %v1736 = vpop.permute.xlu0 %1735
        %1737 = vrot.lane.b32.xlu0 %v982, 32
        %v1738 = vpop.permute.xlu0 %1737
        %1739 = vrot.lane.b32.xlu0 %v984, 32
        %v1740 = vpop.permute.xlu0 %1739
        %1741 = vrot.lane.b32.xlu0 %v987, 32
        %v1742 = vpop.permute.xlu0 %1741
        %1743 = vrot.lane.b32.xlu0 %v989, 32
        %v1744 = vpop.permute.xlu0 %1743
        %1745 = vrot.lane.b32.xlu0 %v992, 32
        %v1746 = vpop.permute.xlu0 %1745
        %1747 = vrot.lane.b32.xlu0 %v994, 32
        %v1748 = vpop.permute.xlu0 %1747
        %1749 = vrot.lane.b32.xlu0 %v1005, 32
        %v1750 = vpop.permute.xlu0 %1749
        %1751 = vrot.lane.b32.xlu0 %v1007, 32
        %v1752 = vpop.permute.xlu0 %1751
        %1753 = vrot.lane.b32.xlu0 %v1018, 32
        %v1754 = vpop.permute.xlu0 %1753
        %1755 = vrot.lane.b32.xlu0 %v1020, 32
        %v1756 = vpop.permute.xlu0 %1755
        %v1789 = vsel %vm317, %v731, %v1022
        %v1790 = vsel %vm317, %v732, %v1024
        %v1791 = vsel %vm317, %v734, %v1026
        %v1792 = vsel %vm317, %v735, %v1028
        %v1793 = vsel %vm317, %v737, %v1030
        %v1794 = vsel %vm317, %v738, %v1032
        %v1795 = vsel %vm317, %v740, %v1034
        %v1796 = vsel %vm317, %v741, %v1036
        %v1797 = vsel %vm317, %v743, %v1038
        %v1798 = vsel %vm317, %v744, %v1040
        %v1799 = vsel %vm317, %v746, %v1042
        %v1800 = vsel %vm317, %v747, %v1044
        %v1801 = vsel %vm317, %v749, %v1046
        %v1802 = vsel %vm317, %v750, %v1048
        %v1803 = vsel %vm317, %v752, %v1050
        %v1804 = vsel %vm317, %v753, %v1052
        %v1805 = vsel %vm317, %v755, %v1054
        %v1806 = vsel %vm317, %v756, %v1056
        %v1807 = vsel %vm317, %v758, %v1058
        %v1808 = vsel %vm317, %v759, %v1060
        %v1809 = vsel %vm317, %v761, %v1062
        %v1810 = vsel %vm317, %v762, %v1064
        %v1811 = vsel %vm317, %v764, %v1066
        %v1812 = vsel %vm317, %v765, %v1068
        %v1813 = vsel %vm317, %v767, %v1070
        %v1814 = vsel %vm317, %v768, %v1072
        %v1815 = vsel %vm317, %v770, %v1074
        %v1816 = vsel %vm317, %v771, %v1076
        %v1817 = vsel %vm317, %v773, %v1078
        %v1818 = vsel %vm317, %v774, %v1080
        %v1819 = vsel %vm317, %v776, %v1082
        %v1820 = vsel %vm317, %v777, %v1084
        %vm1821 = vcmask 64512
        %v1822 = vsel %vm1821, %v1789, %v1118
        %v1823 = vsel %vm1821, %v1790, %v1120
        %v1824 = vsel %vm1821, %v1791, %v1122
        %v1825 = vsel %vm1821, %v1792, %v1124
        %v1826 = vsel %vm1821, %v1793, %v1126
        %v1827 = vsel %vm1821, %v1794, %v1128
        %v1828 = vsel %vm1821, %v1795, %v1130
        %v1829 = vsel %vm1821, %v1796, %v1132
        %v1830 = vsel %vm1821, %v1797, %v1134
        %v1831 = vsel %vm1821, %v1798, %v1136
        %v1832 = vsel %vm1821, %v1799, %v1138
        %v1833 = vsel %vm1821, %v1800, %v1140
        %v1834 = vsel %vm1821, %v1801, %v1142
        %v1835 = vsel %vm1821, %v1802, %v1144
        %v1836 = vsel %vm1821, %v1803, %v1146
        %v1837 = vsel %vm1821, %v1804, %v1148
        %v1838 = vsel %vm1821, %v1805, %v1150
        %v1839 = vsel %vm1821, %v1806, %v1152
        %v1840 = vsel %vm1821, %v1807, %v1154
        %v1841 = vsel %vm1821, %v1808, %v1156
        %v1842 = vsel %vm1821, %v1809, %v1158
        %v1843 = vsel %vm1821, %v1810, %v1160
        %v1844 = vsel %vm1821, %v1811, %v1162
        %v1845 = vsel %vm1821, %v1812, %v1164
        %v1846 = vsel %vm1821, %v1813, %v1166
        %v1847 = vsel %vm1821, %v1814, %v1168
        %v1848 = vsel %vm1821, %v1815, %v1170
        %v1849 = vsel %vm1821, %v1816, %v1172
        %v1850 = vsel %vm1821, %v1817, %v1174
        %v1851 = vsel %vm1821, %v1818, %v1176
        %v1852 = vsel %vm1821, %v1819, %v1178
        %v1853 = vsel %vm1821, %v1820, %v1180
        %vm1854 = vcmask 97280
        %v1855 = vsel %vm1854, %v1822, %v1214
        %v1856 = vsel %vm1854, %v1823, %v1216
        %v1857 = vsel %vm1854, %v1824, %v1218
        %v1858 = vsel %vm1854, %v1825, %v1220
        %v1859 = vsel %vm1854, %v1826, %v1222
        %v1860 = vsel %vm1854, %v1827, %v1224
        %v1861 = vsel %vm1854, %v1828, %v1226
        %v1862 = vsel %vm1854, %v1829, %v1228
        %v1863 = vsel %vm1854, %v1830, %v1230
        %v1864 = vsel %vm1854, %v1831, %v1232
        %v1865 = vsel %vm1854, %v1832, %v1234
        %v1866 = vsel %vm1854, %v1833, %v1236
        %v1867 = vsel %vm1854, %v1834, %v1238
        %v1868 = vsel %vm1854, %v1835, %v1240
        %v1869 = vsel %vm1854, %v1836, %v1242
        %v1870 = vsel %vm1854, %v1837, %v1244
        %v1871 = vsel %vm1854, %v1838, %v1246
        %v1872 = vsel %vm1854, %v1839, %v1248
        %v1873 = vsel %vm1854, %v1840, %v1250
        %v1874 = vsel %vm1854, %v1841, %v1252
        %v1875 = vsel %vm1854, %v1842, %v1254
        %v1876 = vsel %vm1854, %v1843, %v1256
        %v1877 = vsel %vm1854, %v1844, %v1258
        %v1878 = vsel %vm1854, %v1845, %v1260
        %v1879 = vsel %vm1854, %v1846, %v1262
        %v1880 = vsel %vm1854, %v1847, %v1264
        %v1881 = vsel %vm1854, %v1848, %v1266
        %v1882 = vsel %vm1854, %v1849, %v1268
        %v1883 = vsel %vm1854, %v1850, %v1270
        %v1884 = vsel %vm1854, %v1851, %v1272
        %v1885 = vsel %vm1854, %v1852, %v1274
        %v1886 = vsel %vm1854, %v1853, %v1276
        %vm1887 = vcmask 130048
        %v1888 = vsel %vm1887, %v1855, %v1310
        %v1889 = vsel %vm1887, %v1856, %v1312
        %v1890 = vsel %vm1887, %v1857, %v1314
        %v1891 = vsel %vm1887, %v1858, %v1316
        %v1892 = vsel %vm1887, %v1859, %v1318
        %v1893 = vsel %vm1887, %v1860, %v1320
        %v1894 = vsel %vm1887, %v1861, %v1322
        %v1895 = vsel %vm1887, %v1862, %v1324
        %v1896 = vsel %vm1887, %v1863, %v1326
        %v1897 = vsel %vm1887, %v1864, %v1328
        %v1898 = vsel %vm1887, %v1865, %v1330
        %v1899 = vsel %vm1887, %v1866, %v1332
        %v1900 = vsel %vm1887, %v1867, %v1334
        %v1901 = vsel %vm1887, %v1868, %v1336
        %v1902 = vsel %vm1887, %v1869, %v1338
        %v1903 = vsel %vm1887, %v1870, %v1340
        %v1904 = vsel %vm1887, %v1871, %v1342
        %v1905 = vsel %vm1887, %v1872, %v1344
        %v1906 = vsel %vm1887, %v1873, %v1346
        %v1907 = vsel %vm1887, %v1874, %v1348
        %v1908 = vsel %vm1887, %v1875, %v1350
        %v1909 = vsel %vm1887, %v1876, %v1352
        %v1910 = vsel %vm1887, %v1877, %v1354
        %v1911 = vsel %vm1887, %v1878, %v1356
        %v1912 = vsel %vm1887, %v1879, %v1358
        %v1913 = vsel %vm1887, %v1880, %v1360
        %v1914 = vsel %vm1887, %v1881, %v1362
        %v1915 = vsel %vm1887, %v1882, %v1364
        %v1916 = vsel %vm1887, %v1883, %v1366
        %v1917 = vsel %vm1887, %v1884, %v1368
        %v1918 = vsel %vm1887, %v1885, %v1370
        %v1919 = vsel %vm1887, %v1886, %v1372
        %vm1920 = vcmask 162816
        %v1921 = vsel %vm1920, %v1888, %v1406
        %v1922 = vsel %vm1920, %v1889, %v1408
        %v1923 = vsel %vm1920, %v1890, %v1410
        %v1924 = vsel %vm1920, %v1891, %v1412
        %v1925 = vsel %vm1920, %v1892, %v1414
        %v1926 = vsel %vm1920, %v1893, %v1416
        %v1927 = vsel %vm1920, %v1894, %v1418
        %v1928 = vsel %vm1920, %v1895, %v1420
        %v1929 = vsel %vm1920, %v1896, %v1422
        %v1930 = vsel %vm1920, %v1897, %v1424
        %v1931 = vsel %vm1920, %v1898, %v1426
        %v1932 = vsel %vm1920, %v1899, %v1428
        %v1933 = vsel %vm1920, %v1900, %v1430
        %v1934 = vsel %vm1920, %v1901, %v1432
        %v1935 = vsel %vm1920, %v1902, %v1434
        %v1936 = vsel %vm1920, %v1903, %v1436
        %v1937 = vsel %vm1920, %v1904, %v1438
        %v1938 = vsel %vm1920, %v1905, %v1440
        %v1939 = vsel %vm1920, %v1906, %v1442
        %v1940 = vsel %vm1920, %v1907, %v1444
        %v1941 = vsel %vm1920, %v1908, %v1446
        %v1942 = vsel %vm1920, %v1909, %v1448
        %v1943 = vsel %vm1920, %v1910, %v1450
        %v1944 = vsel %vm1920, %v1911, %v1452
        %v1945 = vsel %vm1920, %v1912, %v1454
        %v1946 = vsel %vm1920, %v1913, %v1456
        %v1947 = vsel %vm1920, %v1914, %v1458
        %v1948 = vsel %vm1920, %v1915, %v1460
        %v1949 = vsel %vm1920, %v1916, %v1462
        %v1950 = vsel %vm1920, %v1917, %v1464
        %v1951 = vsel %vm1920, %v1918, %v1466
        %v1952 = vsel %vm1920, %v1919, %v1468
        %vm1953 = vcmask 195584
        %v1954 = vsel %vm1953, %v1921, %v1502
        %v1955 = vsel %vm1953, %v1922, %v1504
        %v1956 = vsel %vm1953, %v1923, %v1506
        %v1957 = vsel %vm1953, %v1924, %v1508
        %v1958 = vsel %vm1953, %v1925, %v1510
        %v1959 = vsel %vm1953, %v1926, %v1512
        %v1960 = vsel %vm1953, %v1927, %v1514
        %v1961 = vsel %vm1953, %v1928, %v1516
        %v1962 = vsel %vm1953, %v1929, %v1518
        %v1963 = vsel %vm1953, %v1930, %v1520
        %v1964 = vsel %vm1953, %v1931, %v1522
        %v1965 = vsel %vm1953, %v1932, %v1524
        %v1966 = vsel %vm1953, %v1933, %v1526
        %v1967 = vsel %vm1953, %v1934, %v1528
        %v1968 = vsel %vm1953, %v1935, %v1530
        %v1969 = vsel %vm1953, %v1936, %v1532
        %v1970 = vsel %vm1953, %v1937, %v1534
        %v1971 = vsel %vm1953, %v1938, %v1536
        %v1972 = vsel %vm1953, %v1939, %v1538
        %v1973 = vsel %vm1953, %v1940, %v1540
        %v1974 = vsel %vm1953, %v1941, %v1542
        %v1975 = vsel %vm1953, %v1942, %v1544
        %v1976 = vsel %vm1953, %v1943, %v1546
        %v1977 = vsel %vm1953, %v1944, %v1548
        %v1978 = vsel %vm1953, %v1945, %v1550
        %v1979 = vsel %vm1953, %v1946, %v1552
        %v1980 = vsel %vm1953, %v1947, %v1554
        %v1981 = vsel %vm1953, %v1948, %v1556
        %v1982 = vsel %vm1953, %v1949, %v1558
        %v1983 = vsel %vm1953, %v1950, %v1560
        %v1984 = vsel %vm1953, %v1951, %v1562
        %v1985 = vsel %vm1953, %v1952, %v1564
        %vm1986 = vcmask 228352
        %v1987 = vsel %vm1986, %v1954, %v1598
        %v1988 = vsel %vm1986, %v1955, %v1600
        %v1989 = vsel %vm1986, %v1956, %v1602
        %v1990 = vsel %vm1986, %v1957, %v1604
        %v1991 = vsel %vm1986, %v1958, %v1606
        %v1992 = vsel %vm1986, %v1959, %v1608
        %v1993 = vsel %vm1986, %v1960, %v1610
        %v1994 = vsel %vm1986, %v1961, %v1612
        %v1995 = vsel %vm1986, %v1962, %v1614
        %v1996 = vsel %vm1986, %v1963, %v1616
        %v1997 = vsel %vm1986, %v1964, %v1618
        %v1998 = vsel %vm1986, %v1965, %v1620
        %v1999 = vsel %vm1986, %v1966, %v1622
        %v2000 = vsel %vm1986, %v1967, %v1624
        %v2001 = vsel %vm1986, %v1968, %v1626
        %v2002 = vsel %vm1986, %v1969, %v1628
        %v2003 = vsel %vm1986, %v1970, %v1630
        %v2004 = vsel %vm1986, %v1971, %v1632
        %v2005 = vsel %vm1986, %v1972, %v1634
        %v2006 = vsel %vm1986, %v1973, %v1636
        %v2007 = vsel %vm1986, %v1974, %v1638
        %v2008 = vsel %vm1986, %v1975, %v1640
        %v2009 = vsel %vm1986, %v1976, %v1642
        %v2010 = vsel %vm1986, %v1977, %v1644
        %v2011 = vsel %vm1986, %v1978, %v1646
        %v2012 = vsel %vm1986, %v1979, %v1648
        %v2013 = vsel %vm1986, %v1980, %v1650
        %v2014 = vsel %vm1986, %v1981, %v1652
        %v2015 = vsel %vm1986, %v1982, %v1654
        %v2016 = vsel %vm1986, %v1983, %v1656
        %v2017 = vsel %vm1986, %v1984, %v1658
        %v2018 = vsel %vm1986, %v1985, %v1660
        %vm2019 = vcmask 261120
        %v2020 = vsel %vm2019, %v1987, %v1694
        %v2021 = vsel %vm2019, %v1988, %v1696
        %v2022 = vsel %vm2019, %v1989, %v1698
        %v2023 = vsel %vm2019, %v1990, %v1700
        %v2024 = vsel %vm2019, %v1991, %v1702
        %v2025 = vsel %vm2019, %v1992, %v1704
        %v2026 = vsel %vm2019, %v1993, %v1706
        %v2027 = vsel %vm2019, %v1994, %v1708
        %v2028 = vsel %vm2019, %v1995, %v1710
        %v2029 = vsel %vm2019, %v1996, %v1712
        %v2030 = vsel %vm2019, %v1997, %v1714
        %v2031 = vsel %vm2019, %v1998, %v1716
        %v2032 = vsel %vm2019, %v1999, %v1718
        %v2033 = vsel %vm2019, %v2000, %v1720
        %v2034 = vsel %vm2019, %v2001, %v1722
        %v2035 = vsel %vm2019, %v2002, %v1724
        %v2036 = vsel %vm2019, %v2003, %v1726
        %v2037 = vsel %vm2019, %v2004, %v1728
        %v2038 = vsel %vm2019, %v2005, %v1730
        %v2039 = vsel %vm2019, %v2006, %v1732
        %v2040 = vsel %vm2019, %v2007, %v1734
        %v2041 = vsel %vm2019, %v2008, %v1736
        %v2042 = vsel %vm2019, %v2009, %v1738
        %v2043 = vsel %vm2019, %v2010, %v1740
        %v2044 = vsel %vm2019, %v2011, %v1742
        %v2045 = vsel %vm2019, %v2012, %v1744
        %v2046 = vsel %vm2019, %v2013, %v1746
        %v2047 = vsel %vm2019, %v2014, %v1748
        %v2048 = vsel %vm2019, %v2015, %v1750
        %v2049 = vsel %vm2019, %v2016, %v1752
        %v2050 = vsel %vm2019, %v2017, %v1754
        %v2051 = vsel %vm2019, %v2018, %v1756
        %v2052 = vld [vmem:[%s1] sm:$0xff]
        %v2053 = vld [vmem:[%s1 + $0x8] sm:$0xff]
        %v2054 = vld [vmem:[%s1 + $0x10] sm:$0xff]
        %v2055 = vld [vmem:[%s1 + $0x18] sm:$0xff]
        %v2056 = vld [vmem:[%s1 + $0x20] sm:$0xf]
        %v2057 = vld [vmem:[%s2] sm:$0x1]
        %v2059 = vlaneseq
        %v2060 = vshrl.u32 %v2059, 7
        %v2061 = vsub.s32 0, %v2060
        %v2062 = vrot.slane %v2057, %v2061
        %vm2064 = vcmask 293888
        %v2066 = vsel %vm2064, %v2020, 0
        %v2069 = vsel %vm2064, %v2021, 0
        %v2072 = vsel %vm2064, %v2022, 0
        %v2075 = vsel %vm2064, %v2023, 0
        %v2078 = vsel %vm2064, %v2024, 0
        %v2081 = vsel %vm2064, %v2025, 0
        %v2084 = vsel %vm2064, %v2026, 0
        %v2087 = vsel %vm2064, %v2027, 0
        %v2090 = vsel %vm2064, %v2028, 0
        %v2093 = vsel %vm2064, %v2029, 0
        %v2096 = vsel %vm2064, %v2030, 0
        %v2099 = vsel %vm2064, %v2031, 0
        %v2102 = vsel %vm2064, %v2032, 0
        %v2105 = vsel %vm2064, %v2033, 0
        %v2108 = vsel %vm2064, %v2034, 0
        %v2111 = vsel %vm2064, %v2035, 0
        %v2114 = vsel %vm2064, %v2036, 0
        %v2117 = vsel %vm2064, %v2037, 0
        %v2120 = vsel %vm2064, %v2038, 0
        %v2123 = vsel %vm2064, %v2039, 0
        %v2126 = vsel %vm2064, %v2040, 0
        %v2129 = vsel %vm2064, %v2041, 0
        %v2132 = vsel %vm2064, %v2042, 0
        %v2135 = vsel %vm2064, %v2043, 0
        %v2138 = vsel %vm2064, %v2044, 0
        %v2141 = vsel %vm2064, %v2045, 0
        %v2144 = vsel %vm2064, %v2046, 0
        %v2147 = vsel %vm2064, %v2047, 0
        %v2150 = vsel %vm2064, %v2048, 0
        %v2153 = vsel %vm2064, %v2049, 0
        %v2156 = vsel %vm2064, %v2050, 0
        %v2159 = vsel %vm2064, %v2051, 0
        %v2162 = vsel %vm414, %v2056, 0
        %2164 = vmatprep.subr.mxu0 0.0
        %2165 = vmatpush1.msra.mxu0 %v2052
        %2166 = vmatprep.subr.mxu0 0.0
        %2167 = vmatpush1.msra.mxu0 %v2053
        %2168 = vmatprep.subr.mxu0 0.0
        %2169 = vmatpush1.msra.mxu0 %v2054
        %2170 = vmatprep.subr.mxu0 0.0
        %2171 = vmatpush1.msra.mxu0 %v2055
        %2172 = vmatprep.subr.mxu0 0.0
        %2173 = vmatpush1.msra.mxu0 %v2162
        %2174 = vmatprep.subr.mxu0 0.0
        %2175 = vmatpush1.msra.mxu0 0.0
        %2176 = vmatprep.subr.mxu0 0.0
        %2177 = vmatpush1.msra.mxu0 0.0
        %2178 = vmatprep.subr.mxu0 0.0
        %2179 = vmatpush1.msra.mxu0 0.0
        %2180 = vmatprep.subr.mxu0 0.0
        %2181 = vmatpush1.msra.mxu0 0.0
        %2182 = vmatprep.subr.mxu0 0.0
        %2183 = vmatpush1.msra.mxu0 0.0
        %2184 = vmatprep.subr.mxu0 0.0
        %2185 = vmatpush1.msra.mxu0 0.0
        %2186 = vmatprep.subr.mxu0 0.0
        %2187 = vmatpush1.msra.mxu0 0.0
        %2188 = vmatprep.subr.mxu0 0.0
        %2189 = vmatpush1.msra.mxu0 0.0
        %2190 = vmatprep.subr.mxu0 0.0
        %2191 = vmatpush1.msra.mxu0 0.0
        %2192 = vmatprep.subr.mxu0 0.0
        %2193 = vmatpush1.msra.mxu0 0.0
        %2194 = vmatprep.subr.mxu0 0.0
        %2195 = vmatpush1.msra.mxu0 0.0
        %2196 = vmatprep.subr.mxu0 0.0
        %2197 = vmatpush1.msra.mxu0 0.0
        %2198 = vmatprep.subr.mxu0 0.0
        %2199 = vmatpush1.msra.mxu0 0.0
        %2200 = vmatprep.subr.mxu0 0.0
        %2201 = vmatpush1.msra.mxu0 0.0
        %2202 = vmatprep.subr.mxu0 0.0
        %2203 = vmatpush1.msra.mxu0 0.0
        %2204 = vmatprep.subr.mxu0 0.0
        %2205 = vmatpush1.msra.mxu0 0.0
        %2206 = vmatprep.subr.mxu0 0.0
        %2207 = vmatpush1.msra.mxu0 0.0
        %2208 = vmatprep.subr.mxu0 0.0
        %2209 = vmatpush1.msra.mxu0 0.0
        %2210 = vmatprep.subr.mxu0 0.0
        %2211 = vmatpush1.msra.mxu0 0.0
        %2212 = vmatprep.subr.mxu0 0.0
        %2213 = vmatpush1.msra.mxu0 0.0
        %2214 = vmatprep.subr.mxu0 0.0
        %2215 = vmatpush1.msra.mxu0 0.0
        %2216 = vmatprep.subr.mxu0 0.0
        %2217 = vmatpush1.msra.mxu0 0.0
        %2218 = vmatprep.subr.mxu0 0.0
        %2219 = vmatpush1.msra.mxu0 0.0
        %2220 = vmatprep.subr.mxu0 0.0
        %2221 = vmatpush1.msra.mxu0 0.0
        %2222 = vmatprep.subr.mxu0 0.0
        %2223 = vmatpush1.msra.mxu0 0.0
        %2224 = vmatprep.subr.mxu0 0.0
        %2225 = vmatpush1.msra.mxu0 0.0
        %2226 = vmatprep.subr.mxu0 0.0
        %2227 = vmatpush1.msra.mxu0 0.0
        %2228 = vmatprep.mubr.f32.mxu0 0.0
        %2229 = vmatmul.mubr.f32.gmra.mrb[0].mxu0 %v2066
        %v2230 = vpop.f32.mrb[0].mxu0
        %v2231 = vadd.f32 %v2062, %v2230
        %v2232 = vpop.f32.mrb[0].mxu0
        %2233 = vmatprep.mubr.f32.mxu0 0.0
        %2234 = vmatmul.mubr.f32.gmra.mrb[0].mxu0 %v2069
        %v2235 = vpop.f32.mrb[0].mxu0
        %v2236 = vadd.f32 %v2062, %v2235
        %v2237 = vpop.f32.mrb[0].mxu0
        %2238 = vmatprep.mubr.f32.mxu0 0.0
        %2239 = vmatmul.mubr.f32.gmra.mrb[0].mxu0 %v2072
        %v2240 = vpop.f32.mrb[0].mxu0
        %v2241 = vadd.f32 %v2062, %v2240
        %v2242 = vpop.f32.mrb[0].mxu0
        %2243 = vmatprep.mubr.f32.mxu0 0.0
        %2244 = vmatmul.mubr.f32.gmra.mrb[0].mxu0 %v2075
        %v2245 = vpop.f32.mrb[0].mxu0
        %v2246 = vadd.f32 %v2062, %v2245
        %v2247 = vpop.f32.mrb[0].mxu0
        %2248 = vmatprep.mubr.f32.mxu0 0.0
        %2249 = vmatmul.mubr.f32.gmra.mrb[0].mxu0 %v2078
        %v2250 = vpop.f32.mrb[0].mxu0
        %v2251 = vadd.f32 %v2062, %v2250
        %v2252 = vpop.f32.mrb[0].mxu0
        %2253 = vmatprep.mubr.f32.mxu0 0.0
        %2254 = vmatmul.mubr.f32.gmra.mrb[0].mxu0 %v2081
        %v2255 = vpop.f32.mrb[0].mxu0
        %v2256 = vadd.f32 %v2062, %v2255
        %v2257 = vpop.f32.mrb[0].mxu0
        %2258 = vmatprep.mubr.f32.mxu0 0.0
        %2259 = vmatmul.mubr.f32.gmra.mrb[0].mxu0 %v2084
        %v2260 = vpop.f32.mrb[0].mxu0
        %v2261 = vadd.f32 %v2062, %v2260
        %v2262 = vpop.f32.mrb[0].mxu0
        %2263 = vmatprep.mubr.f32.mxu0 0.0
        %2264 = vmatmul.mubr.f32.gmra.mrb[0].mxu0 %v2087
        %v2265 = vpop.f32.mrb[0].mxu0
        %v2266 = vadd.f32 %v2062, %v2265
        %v2267 = vpop.f32.mrb[0].mxu0
        %2268 = vmatprep.mubr.f32.mxu0 0.0
        %2269 = vmatmul.mubr.f32.gmra.mrb[0].mxu0 %v2090
        %v2270 = vpop.f32.mrb[0].mxu0
        %v2271 = vadd.f32 %v2062, %v2270
        %v2272 = vpop.f32.mrb[0].mxu0
        %2273 = vmatprep.mubr.f32.mxu0 0.0
        %2274 = vmatmul.mubr.f32.gmra.mrb[0].mxu0 %v2093
        %v2275 = vpop.f32.mrb[0].mxu0
        %v2276 = vadd.f32 %v2062, %v2275
        %v2277 = vpop.f32.mrb[0].mxu0
        %2278 = vmatprep.mubr.f32.mxu0 0.0
        %2279 = vmatmul.mubr.f32.gmra.mrb[0].mxu0 %v2096
        %v2280 = vpop.f32.mrb[0].mxu0
        %v2281 = vadd.f32 %v2062, %v2280
        %v2282 = vpop.f32.mrb[0].mxu0
        %2283 = vmatprep.mubr.f32.mxu0 0.0
        %2284 = vmatmul.mubr.f32.gmra.mrb[0].mxu0 %v2099
        %v2285 = vpop.f32.mrb[0].mxu0
        %v2286 = vadd.f32 %v2062, %v2285
        %v2287 = vpop.f32.mrb[0].mxu0
        %2288 = vmatprep.mubr.f32.mxu0 0.0
        %2289 = vmatmul.mubr.f32.gmra.mrb[0].mxu0 %v2102
        %v2290 = vpop.f32.mrb[0].mxu0
        %v2291 = vadd.f32 %v2062, %v2290
        %v2292 = vpop.f32.mrb[0].mxu0
        %2293 = vmatprep.mubr.f32.mxu0 0.0
        %2294 = vmatmul.mubr.f32.gmra.mrb[0].mxu0 %v2105
        %v2295 = vpop.f32.mrb[0].mxu0
        %v2296 = vadd.f32 %v2062, %v2295
        %v2297 = vpop.f32.mrb[0].mxu0
        %2298 = vmatprep.mubr.f32.mxu0 0.0
        %2299 = vmatmul.mubr.f32.gmra.mrb[0].mxu0 %v2108
        %v2300 = vpop.f32.mrb[0].mxu0
        %v2301 = vadd.f32 %v2062, %v2300
        %v2302 = vpop.f32.mrb[0].mxu0
        %2303 = vmatprep.mubr.f32.mxu0 0.0
        %2304 = vmatmul.mubr.f32.gmra.mrb[0].mxu0 %v2111
        %v2305 = vpop.f32.mrb[0].mxu0
        %v2306 = vadd.f32 %v2062, %v2305
        %v2307 = vpop.f32.mrb[0].mxu0
        %2308 = vmatprep.mubr.f32.mxu0 0.0
        %2309 = vmatmul.mubr.f32.gmra.mrb[0].mxu0 %v2114
        %v2310 = vpop.f32.mrb[0].mxu0
        %v2311 = vadd.f32 %v2062, %v2310
        %v2312 = vpop.f32.mrb[0].mxu0
        %2313 = vmatprep.mubr.f32.mxu0 0.0
        %2314 = vmatmul.mubr.f32.gmra.mrb[0].mxu0 %v2117
        %v2315 = vpop.f32.mrb[0].mxu0
        %v2316 = vadd.f32 %v2062, %v2315
        %v2317 = vpop.f32.mrb[0].mxu0
        %2318 = vmatprep.mubr.f32.mxu0 0.0
        %2319 = vmatmul.mubr.f32.gmra.mrb[0].mxu0 %v2120
        %v2320 = vpop.f32.mrb[0].mxu0
        %v2321 = vadd.f32 %v2062, %v2320
        %v2322 = vpop.f32.mrb[0].mxu0
        %2323 = vmatprep.mubr.f32.mxu0 0.0
        %2324 = vmatmul.mubr.f32.gmra.mrb[0].mxu0 %v2123
        %v2325 = vpop.f32.mrb[0].mxu0
        %v2326 = vadd.f32 %v2062, %v2325
        %v2327 = vpop.f32.mrb[0].mxu0
        %2328 = vmatprep.mubr.f32.mxu0 0.0
        %2329 = vmatmul.mubr.f32.gmra.mrb[0].mxu0 %v2126
        %v2330 = vpop.f32.mrb[0].mxu0
        %v2331 = vadd.f32 %v2062, %v2330
        %v2332 = vpop.f32.mrb[0].mxu0
        %2333 = vmatprep.mubr.f32.mxu0 0.0
        %2334 = vmatmul.mubr.f32.gmra.mrb[0].mxu0 %v2129
        %v2335 = vpop.f32.mrb[0].mxu0
        %v2336 = vadd.f32 %v2062, %v2335
        %v2337 = vpop.f32.mrb[0].mxu0
        %2338 = vmatprep.mubr.f32.mxu0 0.0
        %2339 = vmatmul.mubr.f32.gmra.mrb[0].mxu0 %v2132
        %v2340 = vpop.f32.mrb[0].mxu0
        %v2341 = vadd.f32 %v2062, %v2340
        %v2342 = vpop.f32.mrb[0].mxu0
        %2343 = vmatprep.mubr.f32.mxu0 0.0
        %2344 = vmatmul.mubr.f32.gmra.mrb[0].mxu0 %v2135
        %v2345 = vpop.f32.mrb[0].mxu0
        %v2346 = vadd.f32 %v2062, %v2345
        %v2347 = vpop.f32.mrb[0].mxu0
        %2348 = vmatprep.mubr.f32.mxu0 0.0
        %2349 = vmatmul.mubr.f32.gmra.mrb[0].mxu0 %v2138
        %v2350 = vpop.f32.mrb[0].mxu0
        %v2351 = vadd.f32 %v2062, %v2350
        %v2352 = vpop.f32.mrb[0].mxu0
        %2353 = vmatprep.mubr.f32.mxu0 0.0
        %2354 = vmatmul.mubr.f32.gmra.mrb[0].mxu0 %v2141
        %v2355 = vpop.f32.mrb[0].mxu0
        %v2356 = vadd.f32 %v2062, %v2355
        %v2357 = vpop.f32.mrb[0].mxu0
        %2358 = vmatprep.mubr.f32.mxu0 0.0
        %2359 = vmatmul.mubr.f32.gmra.mrb[0].mxu0 %v2144
        %v2360 = vpop.f32.mrb[0].mxu0
        %v2361 = vadd.f32 %v2062, %v2360
        %v2362 = vpop.f32.mrb[0].mxu0
        %2363 = vmatprep.mubr.f32.mxu0 0.0
        %2364 = vmatmul.mubr.f32.gmra.mrb[0].mxu0 %v2147
        %v2365 = vpop.f32.mrb[0].mxu0
        %v2366 = vadd.f32 %v2062, %v2365
        %v2367 = vpop.f32.mrb[0].mxu0
        %2368 = vmatprep.mubr.f32.mxu0 0.0
        %2369 = vmatmul.mubr.f32.gmra.mrb[0].mxu0 %v2150
        %v2370 = vpop.f32.mrb[0].mxu0
        %v2371 = vadd.f32 %v2062, %v2370
        %v2372 = vpop.f32.mrb[0].mxu0
        %2373 = vmatprep.mubr.f32.mxu0 0.0
        %2374 = vmatmul.mubr.f32.gmra.mrb[0].mxu0 %v2153
        %v2375 = vpop.f32.mrb[0].mxu0
        %v2376 = vadd.f32 %v2062, %v2375
        %v2377 = vpop.f32.mrb[0].mxu0
        %2378 = vmatprep.mubr.f32.mxu0 0.0
        %2379 = vmatmul.mubr.f32.gmra.mrb[0].mxu0 %v2156
        %v2380 = vpop.f32.mrb[0].mxu0
        %v2381 = vadd.f32 %v2062, %v2380
        %v2382 = vpop.f32.mrb[0].mxu0
        %2383 = vmatprep.mubr.f32.mxu0 0.0
        %2384 = vmatmul.mubr.f32.gmra.mrb[0].mxu0 %v2159
        %v2385 = vpop.f32.mrb[0].mxu0
        %v2386 = vadd.f32 %v2062, %v2385
        %v2387 = vpop.f32.mrb[0].mxu0
        %2388 = vdwg.mxu0
        %v2389 = vmax.f32 %v2231, 0.0
        %v2390 = vmax.f32 %v2236, 0.0
        %v2391 = vmax.f32 %v2241, 0.0
        %v2392 = vmax.f32 %v2246, 0.0
        %v2393 = vmax.f32 %v2251, 0.0
        %v2394 = vmax.f32 %v2256, 0.0
        %v2395 = vmax.f32 %v2261, 0.0
        %v2396 = vmax.f32 %v2266, 0.0
        %v2397 = vmax.f32 %v2271, 0.0
        %v2398 = vmax.f32 %v2276, 0.0
        %v2399 = vmax.f32 %v2281, 0.0
        %v2400 = vmax.f32 %v2286, 0.0
        %v2401 = vmax.f32 %v2291, 0.0
        %v2402 = vmax.f32 %v2296, 0.0
        %v2403 = vmax.f32 %v2301, 0.0
        %v2404 = vmax.f32 %v2306, 0.0
        %v2405 = vmax.f32 %v2311, 0.0
        %v2406 = vmax.f32 %v2316, 0.0
        %v2407 = vmax.f32 %v2321, 0.0
        %v2408 = vmax.f32 %v2326, 0.0
        %v2409 = vmax.f32 %v2331, 0.0
        %v2410 = vmax.f32 %v2336, 0.0
        %v2411 = vmax.f32 %v2341, 0.0
        %v2412 = vmax.f32 %v2346, 0.0
        %v2413 = vmax.f32 %v2351, 0.0
        %v2414 = vmax.f32 %v2356, 0.0
        %v2415 = vmax.f32 %v2361, 0.0
        %v2416 = vmax.f32 %v2366, 0.0
        %v2417 = vmax.f32 %v2371, 0.0
        %v2418 = vmax.f32 %v2376, 0.0
        %v2419 = vmax.f32 %v2381, 0.0
        %v2420 = vmax.f32 %v2386, 0.0
        %2421 = vst.msk [vmem:[#allocation3] sm:$0xff] %vm1821, 0.0
        %2422 = vst.msk [vmem:[#allocation3 + $0x8] sm:$0xff] %vm1821, 0.0
        %vm2423 = vcmask 58368
        %2424 = vst.msk [vmem:[#allocation3 + $0x10] sm:$0x3] %vm2423, 0.0
        %2425 = vst.msk [vmem:[#allocation3 + $0x18] sm:$0xff] %vm1821, 0.0
        %2426 = vst.msk [vmem:[#allocation3 + $0x20] sm:$0xff] %vm1821, 0.0
        %2427 = vst.msk [vmem:[#allocation3 + $0x28] sm:$0x3] %vm2423, 0.0
        %2428 = vst.msk [vmem:[#allocation3 + $0x30] sm:$0xff] %vm1821, 0.0
        %2429 = vst.msk [vmem:[#allocation3 + $0x38] sm:$0xff] %vm1821, 0.0
        %2430 = vst.msk [vmem:[#allocation3 + $0x40] sm:$0x3] %vm2423, 0.0
        %2431 = vst.msk [vmem:[#allocation3 + $0x48] sm:$0xff] %vm1821, 0.0
        %2432 = vst.msk [vmem:[#allocation3 + $0x50] sm:$0xff] %vm1821, 0.0
        %2433 = vst.msk [vmem:[#allocation3 + $0x58] sm:$0x3] %vm2423, 0.0
        %2434 = vst.msk [vmem:[#allocation3 + $0x60] sm:$0xff] %vm1821, 0.0
        %2435 = vst.msk [vmem:[#allocation3 + $0x68] sm:$0xff] %vm1821, 0.0
        %2436 = vst.msk [vmem:[#allocation3 + $0x70] sm:$0x3] %vm2423, 0.0
        %2437 = vst.msk [vmem:[#allocation3 + $0x78] sm:$0xff] %vm1821, 0.0
        %2438 = vst.msk [vmem:[#allocation3 + $0x80] sm:$0xff] %vm1821, 0.0
        %2439 = vst.msk [vmem:[#allocation3 + $0x88] sm:$0x3] %vm2423, 0.0
        %2440 = vst.msk [vmem:[#allocation3 + $0x90] sm:$0xff] %vm1821, 0.0
        %2441 = vst.msk [vmem:[#allocation3 + $0x98] sm:$0xff] %vm1821, 0.0
        %2442 = vst.msk [vmem:[#allocation3 + $0xa0] sm:$0x3] %vm2423, 0.0
        %2443 = vst.msk [vmem:[#allocation3 + $0xa8] sm:$0xff] %vm1821, 0.0
        %2444 = vst.msk [vmem:[#allocation3 + $0xb0] sm:$0xff] %vm1821, 0.0
        %2445 = vst.msk [vmem:[#allocation3 + $0xb8] sm:$0x3] %vm2423, 0.0
        %2446 = vst.msk [vmem:[#allocation3 + $0xc0] sm:$0xff] %vm1821, 0.0
        %2447 = vst.msk [vmem:[#allocation3 + $0xc8] sm:$0xff] %vm1821, 0.0
        %2448 = vst.msk [vmem:[#allocation3 + $0xd0] sm:$0x3] %vm2423, 0.0
        %2449 = vst.msk [vmem:[#allocation3 + $0xd8] sm:$0xff] %vm1821, 0.0
        %2450 = vst.msk [vmem:[#allocation3 + $0xe0] sm:$0xff] %vm1821, 0.0
        %2451 = vst.msk [vmem:[#allocation3 + $0xe8] sm:$0x3] %vm2423, 0.0
        %2452 = vst.msk [vmem:[#allocation3 + $0xf0] sm:$0xff] %vm1821, 0.0
        %2453 = vst.msk [vmem:[#allocation3 + $0xf8] sm:$0xff] %vm1821, 0.0
        %2454 = vst.msk [vmem:[#allocation3 + $0x100] sm:$0x3] %vm2423, 0.0
        %2455 = vst.msk [vmem:[#allocation3 + $0x108] sm:$0xff] %vm1821, 0.0
        %2456 = vst.msk [vmem:[#allocation3 + $0x110] sm:$0xff] %vm1821, 0.0
        %2457 = vst.msk [vmem:[#allocation3 + $0x118] sm:$0x3] %vm2423, 0.0
        %2458 = vst.msk [vmem:[#allocation3 + $0x120] sm:$0xff] %vm1821, 0.0
        %2459 = vst.msk [vmem:[#allocation3 + $0x128] sm:$0xff] %vm1821, 0.0
        %2460 = vst.msk [vmem:[#allocation3 + $0x130] sm:$0x3] %vm2423, 0.0
        %2461 = vst.msk [vmem:[#allocation3 + $0x138] sm:$0xff] %vm1821, 0.0
        %2462 = vst.msk [vmem:[#allocation3 + $0x140] sm:$0xff] %vm1821, 0.0
        %2463 = vst.msk [vmem:[#allocation3 + $0x148] sm:$0x3] %vm2423, 0.0
        %2464 = vst.msk [vmem:[#allocation3 + $0x150] sm:$0xff] %vm1821, 0.0
        %2465 = vst.msk [vmem:[#allocation3 + $0x158] sm:$0xff] %vm1821, 0.0
        %2466 = vst.msk [vmem:[#allocation3 + $0x160] sm:$0x3] %vm2423, 0.0
        %2467 = vst.msk [vmem:[#allocation3 + $0x168] sm:$0xff] %vm1821, 0.0
        %2468 = vst.msk [vmem:[#allocation3 + $0x170] sm:$0xff] %vm1821, 0.0
        %2469 = vst.msk [vmem:[#allocation3 + $0x178] sm:$0x3] %vm2423, 0.0
        %2470 = vst.msk [vmem:[#allocation3 + $0x180] sm:$0xff] %vm1821, 0.0
        %2471 = vst.msk [vmem:[#allocation3 + $0x188] sm:$0xff] %vm1821, 0.0
        %2472 = vst.msk [vmem:[#allocation3 + $0x190] sm:$0x3] %vm2423, 0.0
        %2473 = vst.msk [vmem:[#allocation3 + $0x198] sm:$0xff] %vm1821, 0.0
        %2474 = vst.msk [vmem:[#allocation3 + $0x1a0] sm:$0xff] %vm1821, 0.0
        %2475 = vst.msk [vmem:[#allocation3 + $0x1a8] sm:$0x3] %vm2423, 0.0
        %s2476 = scalar_lea.vmem [#allocation3], 24
        %2477 = vst.msk [vmem:[%s2476 + $0x1] sm:$0xff] %vm1821, %v2389
        %2478 = vst.msk [vmem:[%s2476 + $0x9] sm:$0xff] %vm1821, %v2390
        %2479 = vst.msk [vmem:[%s2476 + $0x19] sm:$0xff] %vm1821, %v2391
        %2480 = vst.msk [vmem:[%s2476 + $0x21] sm:$0xff] %vm1821, %v2392
        %2481 = vst.msk [vmem:[%s2476 + $0x31] sm:$0xff] %vm1821, %v2393
        %2482 = vst.msk [vmem:[%s2476 + $0x39] sm:$0xff] %vm1821, %v2394
        %2483 = vst.msk [vmem:[%s2476 + $0x49] sm:$0xff] %vm1821, %v2395
        %2484 = vst.msk [vmem:[%s2476 + $0x51] sm:$0xff] %vm1821, %v2396
        %2485 = vst.msk [vmem:[%s2476 + $0x61] sm:$0xff] %vm1821, %v2397
        %2486 = vst.msk [vmem:[%s2476 + $0x69] sm:$0xff] %vm1821, %v2398
        %2487 = vst.msk [vmem:[%s2476 + $0x79] sm:$0xff] %vm1821, %v2399
        %2488 = vst.msk [vmem:[%s2476 + $0x81] sm:$0xff] %vm1821, %v2400
        %2489 = vst.msk [vmem:[%s2476 + $0x91] sm:$0xff] %vm1821, %v2401
        %2490 = vst.msk [vmem:[%s2476 + $0x99] sm:$0xff] %vm1821, %v2402
        %2491 = vst.msk [vmem:[%s2476 + $0xa9] sm:$0xff] %vm1821, %v2403
        %2492 = vst.msk [vmem:[%s2476 + $0xb1] sm:$0xff] %vm1821, %v2404
        %2493 = vst.msk [vmem:[%s2476 + $0xc1] sm:$0xff] %vm1821, %v2405
        %2494 = vst.msk [vmem:[%s2476 + $0xc9] sm:$0xff] %vm1821, %v2406
        %2495 = vst.msk [vmem:[%s2476 + $0xd9] sm:$0xff] %vm1821, %v2407
        %2496 = vst.msk [vmem:[%s2476 + $0xe1] sm:$0xff] %vm1821, %v2408
        %2497 = vst.msk [vmem:[%s2476 + $0xf1] sm:$0xff] %vm1821, %v2409
        %2498 = vst.msk [vmem:[%s2476 + $0xf9] sm:$0xff] %vm1821, %v2410
        %2499 = vst.msk [vmem:[%s2476 + $0x109] sm:$0xff] %vm1821, %v2411
        %2500 = vst.msk [vmem:[%s2476 + $0x111] sm:$0xff] %vm1821, %v2412
        %2501 = vst.msk [vmem:[%s2476 + $0x121] sm:$0xff] %vm1821, %v2413
        %2502 = vst.msk [vmem:[%s2476 + $0x129] sm:$0xff] %vm1821, %v2414
        %2503 = vst.msk [vmem:[%s2476 + $0x139] sm:$0xff] %vm1821, %v2415
        %2504 = vst.msk [vmem:[%s2476 + $0x141] sm:$0xff] %vm1821, %v2416
        %2505 = vst.msk [vmem:[%s2476 + $0x151] sm:$0xff] %vm1821, %v2417
        %2506 = vst.msk [vmem:[%s2476 + $0x159] sm:$0xff] %vm1821, %v2418
        %2507 = vst.msk [vmem:[%s2476 + $0x169] sm:$0xff] %vm1821, %v2419
        %2508 = vst.msk [vmem:[%s2476 + $0x171] sm:$0xff] %vm1821, %v2420
        %v2509 = vld [vmem:[#allocation3] sm:$0xff]
        %v2510 = vld [vmem:[#allocation3 + $0x8] sm:$0xff]
        %v2511 = vld [vmem:[#allocation3 + $0x10] sm:$0x3]
        %v2512 = vld [vmem:[#allocation3 + $0x18] sm:$0xff]
        %v2513 = vld [vmem:[#allocation3 + $0x20] sm:$0xff]
        %v2514 = vld [vmem:[#allocation3 + $0x28] sm:$0x3]
        %v2515 = vld [vmem:[#allocation3 + $0x30] sm:$0xff]
        %v2516 = vld [vmem:[#allocation3 + $0x38] sm:$0xff]
        %v2517 = vld [vmem:[#allocation3 + $0x40] sm:$0x3]
        %v2518 = vld [vmem:[#allocation3 + $0x48] sm:$0xff]
        %v2519 = vld [vmem:[#allocation3 + $0x50] sm:$0xff]
        %v2520 = vld [vmem:[#allocation3 + $0x58] sm:$0x3]
        %v2521 = vld [vmem:[#allocation3 + $0x60] sm:$0xff]
        %v2522 = vld [vmem:[#allocation3 + $0x68] sm:$0xff]
        %v2523 = vld [vmem:[#allocation3 + $0x70] sm:$0x3]
        %v2524 = vld [vmem:[#allocation3 + $0x78] sm:$0xff]
        %v2525 = vld [vmem:[#allocation3 + $0x80] sm:$0xff]
        %v2526 = vld [vmem:[#allocation3 + $0x88] sm:$0x3]
        %v2527 = vld [vmem:[#allocation3 + $0x90] sm:$0xff]
        %v2528 = vld [vmem:[#allocation3 + $0x98] sm:$0xff]
        %v2529 = vld [vmem:[#allocation3 + $0xa0] sm:$0x3]
        %v2530 = vld [vmem:[#allocation3 + $0xa8] sm:$0xff]
        %v2531 = vld [vmem:[#allocation3 + $0xb0] sm:$0xff]
        %v2532 = vld [vmem:[#allocation3 + $0xb8] sm:$0x3]
        %v2533 = vld [vmem:[#allocation3 + $0xc0] sm:$0xff]
        %v2534 = vld [vmem:[#allocation3 + $0xc8] sm:$0xff]
        %v2535 = vld [vmem:[#allocation3 + $0xd0] sm:$0x3]
        %v2536 = vld [vmem:[#allocation3 + $0xd8] sm:$0xff]
        %v2537 = vld [vmem:[#allocation3 + $0xe0] sm:$0xff]
        %v2538 = vld [vmem:[#allocation3 + $0xe8] sm:$0x3]
        %v2539 = vld [vmem:[#allocation3 + $0xf0] sm:$0xff]
        %v2540 = vld [vmem:[#allocation3 + $0xf8] sm:$0xff]
        %v2541 = vld [vmem:[#allocation3 + $0x100] sm:$0x3]
        %v2542 = vld [vmem:[#allocation3 + $0x108] sm:$0xff]
        %v2543 = vld [vmem:[#allocation3 + $0x110] sm:$0xff]
        %v2544 = vld [vmem:[#allocation3 + $0x118] sm:$0x3]
        %v2545 = vld [vmem:[#allocation3 + $0x120] sm:$0xff]
        %v2546 = vld [vmem:[#allocation3 + $0x128] sm:$0xff]
        %v2547 = vld [vmem:[#allocation3 + $0x130] sm:$0x3]
        %v2548 = vld [vmem:[#allocation3 + $0x138] sm:$0xff]
        %v2549 = vld [vmem:[#allocation3 + $0x140] sm:$0xff]
        %v2550 = vld [vmem:[#allocation3 + $0x148] sm:$0x3]
        %v2551 = vld [vmem:[#allocation3 + $0x150] sm:$0xff]
        %v2552 = vld [vmem:[#allocation3 + $0x158] sm:$0xff]
        %v2553 = vld [vmem:[#allocation3 + $0x160] sm:$0x3]
        %v2554 = vld [vmem:[#allocation3 + $0x168] sm:$0xff]
        %v2555 = vld [vmem:[#allocation3 + $0x170] sm:$0xff]
        %v2556 = vld [vmem:[#allocation3 + $0x178] sm:$0x3]
        %v2557 = vld [vmem:[#allocation3 + $0x180] sm:$0xff]
        %v2558 = vld [vmem:[#allocation3 + $0x188] sm:$0xff]
        %v2559 = vld [vmem:[#allocation3 + $0x190] sm:$0x3]
        %v2560 = vld [vmem:[#allocation3 + $0x198] sm:$0xff]
        %v2561 = vld [vmem:[#allocation3 + $0x1a0] sm:$0xff]
        %v2562 = vld [vmem:[#allocation3 + $0x1a8] sm:$0x3]
        %v2611 = vrot.slane %v2509, 1
        %v2612 = vrot.slane %v2510, 1
        %v2613 = vsel %vm833, %v2611, %v2612
        %v2614 = vrot.slane %v2511, 1
        %v2615 = vsel %vm833, %v2612, %v2614
        %v2616 = vrot.slane %v2512, 1
        %v2617 = vrot.slane %v2513, 1
        %v2618 = vsel %vm833, %v2616, %v2617
        %v2619 = vrot.slane %v2514, 1
        %v2620 = vsel %vm833, %v2617, %v2619
        %v2621 = vrot.slane %v2515, 1
        %v2622 = vrot.slane %v2516, 1
        %v2623 = vsel %vm833, %v2621, %v2622
        %v2624 = vrot.slane %v2517, 1
        %v2625 = vsel %vm833, %v2622, %v2624
        %v2626 = vrot.slane %v2518, 1
        %v2627 = vrot.slane %v2519, 1
        %v2628 = vsel %vm833, %v2626, %v2627
        %v2629 = vrot.slane %v2520, 1
        %v2630 = vsel %vm833, %v2627, %v2629
        %v2631 = vrot.slane %v2521, 1
        %v2632 = vrot.slane %v2522, 1
        %v2633 = vsel %vm833, %v2631, %v2632
        %v2634 = vrot.slane %v2523, 1
        %v2635 = vsel %vm833, %v2632, %v2634
        %v2636 = vrot.slane %v2524, 1
        %v2637 = vrot.slane %v2525, 1
        %v2638 = vsel %vm833, %v2636, %v2637
        %v2639 = vrot.slane %v2526, 1
        %v2640 = vsel %vm833, %v2637, %v2639
        %v2641 = vrot.slane %v2527, 1
        %v2642 = vrot.slane %v2528, 1
        %v2643 = vsel %vm833, %v2641, %v2642
        %v2644 = vrot.slane %v2529, 1
        %v2645 = vsel %vm833, %v2642, %v2644
        %v2646 = vrot.slane %v2530, 1
        %v2647 = vrot.slane %v2531, 1
        %v2648 = vsel %vm833, %v2646, %v2647
        %v2649 = vrot.slane %v2532, 1
        %v2650 = vsel %vm833, %v2647, %v2649
        %v2651 = vrot.slane %v2533, 1
        %v2652 = vrot.slane %v2534, 1
        %v2653 = vsel %vm833, %v2651, %v2652
        %v2654 = vrot.slane %v2535, 1
        %v2655 = vsel %vm833, %v2652, %v2654
        %v2656 = vrot.slane %v2536, 1
        %v2657 = vrot.slane %v2537, 1
        %v2658 = vsel %vm833, %v2656, %v2657
        %v2659 = vrot.slane %v2538, 1
        %v2660 = vsel %vm833, %v2657, %v2659
        %v2661 = vrot.slane %v2539, 1
        %v2662 = vrot.slane %v2540, 1
        %v2663 = vsel %vm833, %v2661, %v2662
        %v2664 = vrot.slane %v2541, 1
        %v2665 = vsel %vm833, %v2662, %v2664
        %v2666 = vrot.slane %v2542, 1
        %v2667 = vrot.slane %v2543, 1
        %v2668 = vsel %vm833, %v2666, %v2667
        %v2669 = vrot.slane %v2544, 1
        %v2670 = vsel %vm833, %v2667, %v2669
        %v2671 = vrot.slane %v2545, 1
        %v2672 = vrot.slane %v2546, 1
        %v2673 = vsel %vm833, %v2671, %v2672
        %v2674 = vrot.slane %v2547, 1
        %v2675 = vsel %vm833, %v2672, %v2674
        %v2676 = vrot.slane %v2548, 1
        %v2677 = vrot.slane %v2549, 1
        %v2678 = vsel %vm833, %v2676, %v2677
        %v2679 = vrot.slane %v2550, 1
        %v2680 = vsel %vm833, %v2677, %v2679
        %v2681 = vrot.slane %v2551, 1
        %v2682 = vrot.slane %v2552, 1
        %v2683 = vsel %vm833, %v2681, %v2682
        %v2684 = vrot.slane %v2553, 1
        %v2685 = vsel %vm833, %v2682, %v2684
        %v2686 = vrot.slane %v2554, 1
        %v2687 = vrot.slane %v2555, 1
        %v2688 = vsel %vm833, %v2686, %v2687
        %v2689 = vrot.slane %v2556, 1
        %v2690 = vsel %vm833, %v2687, %v2689
        %v2691 = vrot.slane %v2509, 2
        %v2692 = vrot.slane %v2510, 2
        %v2693 = vsel %vm914, %v2691, %v2692
        %v2694 = vrot.slane %v2511, 2
        %v2695 = vsel %vm914, %v2692, %v2694
        %v2696 = vrot.slane %v2512, 2
        %v2697 = vrot.slane %v2513, 2
        %v2698 = vsel %vm914, %v2696, %v2697
        %v2699 = vrot.slane %v2514, 2
        %v2700 = vsel %vm914, %v2697, %v2699
        %v2701 = vrot.slane %v2515, 2
        %v2702 = vrot.slane %v2516, 2
        %v2703 = vsel %vm914, %v2701, %v2702
        %v2704 = vrot.slane %v2517, 2
        %v2705 = vsel %vm914, %v2702, %v2704
        %v2706 = vrot.slane %v2518, 2
        %v2707 = vrot.slane %v2519, 2
        %v2708 = vsel %vm914, %v2706, %v2707
        %v2709 = vrot.slane %v2520, 2
        %v2710 = vsel %vm914, %v2707, %v2709
        %v2711 = vrot.slane %v2521, 2
        %v2712 = vrot.slane %v2522, 2
        %v2713 = vsel %vm914, %v2711, %v2712
        %v2714 = vrot.slane %v2523, 2
        %v2715 = vsel %vm914, %v2712, %v2714
        %v2716 = vrot.slane %v2524, 2
        %v2717 = vrot.slane %v2525, 2
        %v2718 = vsel %vm914, %v2716, %v2717
        %v2719 = vrot.slane %v2526, 2
        %v2720 = vsel %vm914, %v2717, %v2719
        %v2721 = vrot.slane %v2527, 2
        %v2722 = vrot.slane %v2528, 2
        %v2723 = vsel %vm914, %v2721, %v2722
        %v2724 = vrot.slane %v2529, 2
        %v2725 = vsel %vm914, %v2722, %v2724
        %v2726 = vrot.slane %v2530, 2
        %v2727 = vrot.slane %v2531, 2
        %v2728 = vsel %vm914, %v2726, %v2727
        %v2729 = vrot.slane %v2532, 2
        %v2730 = vsel %vm914, %v2727, %v2729
        %v2731 = vrot.slane %v2533, 2
        %v2732 = vrot.slane %v2534, 2
        %v2733 = vsel %vm914, %v2731, %v2732
        %v2734 = vrot.slane %v2535, 2
        %v2735 = vsel %vm914, %v2732, %v2734
        %v2736 = vrot.slane %v2536, 2
        %v2737 = vrot.slane %v2537, 2
        %v2738 = vsel %vm914, %v2736, %v2737
        %v2739 = vrot.slane %v2538, 2
        %v2740 = vsel %vm914, %v2737, %v2739
        %v2741 = vrot.slane %v2539, 2
        %v2742 = vrot.slane %v2540, 2
        %v2743 = vsel %vm914, %v2741, %v2742
        %v2744 = vrot.slane %v2541, 2
        %v2745 = vsel %vm914, %v2742, %v2744
        %v2746 = vrot.slane %v2542, 2
        %v2747 = vrot.slane %v2543, 2
        %v2748 = vsel %vm914, %v2746, %v2747
        %v2749 = vrot.slane %v2544, 2
        %v2750 = vsel %vm914, %v2747, %v2749
        %v2751 = vrot.slane %v2545, 2
        %v2752 = vrot.slane %v2546, 2
        %v2753 = vsel %vm914, %v2751, %v2752
        %v2754 = vrot.slane %v2547, 2
        %v2755 = vsel %vm914, %v2752, %v2754
        %v2756 = vrot.slane %v2548, 2
        %v2757 = vrot.slane %v2549, 2
        %v2758 = vsel %vm914, %v2756, %v2757
        %v2759 = vrot.slane %v2550, 2
        %v2760 = vsel %vm914, %v2757, %v2759
        %v2761 = vrot.slane %v2551, 2
        %v2762 = vrot.slane %v2552, 2
        %v2763 = vsel %vm914, %v2761, %v2762
        %v2764 = vrot.slane %v2553, 2
        %v2765 = vsel %vm914, %v2762, %v2764
        %v2766 = vrot.slane %v2554, 2
        %v2767 = vrot.slane %v2555, 2
        %v2768 = vsel %vm914, %v2766, %v2767
        %v2769 = vrot.slane %v2556, 2
        %v2770 = vsel %vm914, %v2767, %v2769
        %v2774 = vrot.slane %v2557, 1
        %v2775 = vrot.slane %v2558, 1
        %v2776 = vsel %vm833, %v2774, %v2775
        %v2777 = vrot.slane %v2559, 1
        %v2778 = vsel %vm833, %v2775, %v2777
        %v2779 = vrot.slane %v2557, 2
        %v2780 = vrot.slane %v2558, 2
        %v2781 = vsel %vm914, %v2779, %v2780
        %v2782 = vrot.slane %v2559, 2
        %v2783 = vsel %vm914, %v2780, %v2782
        %v2787 = vrot.slane %v2560, 1
        %v2788 = vrot.slane %v2561, 1
        %v2789 = vsel %vm833, %v2787, %v2788
        %v2790 = vrot.slane %v2562, 1
        %v2791 = vsel %vm833, %v2788, %v2790
        %v2792 = vrot.slane %v2560, 2
        %v2793 = vrot.slane %v2561, 2
        %v2794 = vsel %vm914, %v2792, %v2793
        %v2795 = vrot.slane %v2562, 2
        %v2796 = vsel %vm914, %v2793, %v2795
        %2797 = vrot.lane.b32.xlu0 %v2613, 8
        %v2798 = vpop.permute.xlu0 %2797
        %2799 = vrot.lane.b32.xlu0 %v2615, 8
        %v2800 = vpop.permute.xlu0 %2799
        %2801 = vrot.lane.b32.xlu0 %v2618, 8
        %v2802 = vpop.permute.xlu0 %2801
        %2803 = vrot.lane.b32.xlu0 %v2620, 8
        %v2804 = vpop.permute.xlu0 %2803
        %2805 = vrot.lane.b32.xlu0 %v2623, 8
        %v2806 = vpop.permute.xlu0 %2805
        %2807 = vrot.lane.b32.xlu0 %v2625, 8
        %v2808 = vpop.permute.xlu0 %2807
        %2809 = vrot.lane.b32.xlu0 %v2628, 8
        %v2810 = vpop.permute.xlu0 %2809
        %2811 = vrot.lane.b32.xlu0 %v2630, 8
        %v2812 = vpop.permute.xlu0 %2811
        %2813 = vrot.lane.b32.xlu0 %v2633, 8
        %v2814 = vpop.permute.xlu0 %2813
        %2815 = vrot.lane.b32.xlu0 %v2635, 8
        %v2816 = vpop.permute.xlu0 %2815
        %2817 = vrot.lane.b32.xlu0 %v2638, 8
        %v2818 = vpop.permute.xlu0 %2817
        %2819 = vrot.lane.b32.xlu0 %v2640, 8
        %v2820 = vpop.permute.xlu0 %2819
        %2821 = vrot.lane.b32.xlu0 %v2643, 8
        %v2822 = vpop.permute.xlu0 %2821
        %2823 = vrot.lane.b32.xlu0 %v2645, 8
        %v2824 = vpop.permute.xlu0 %2823
        %2825 = vrot.lane.b32.xlu0 %v2648, 8
        %v2826 = vpop.permute.xlu0 %2825
        %2827 = vrot.lane.b32.xlu0 %v2650, 8
        %v2828 = vpop.permute.xlu0 %2827
        %2829 = vrot.lane.b32.xlu0 %v2653, 8
        %v2830 = vpop.permute.xlu0 %2829
        %2831 = vrot.lane.b32.xlu0 %v2655, 8
        %v2832 = vpop.permute.xlu0 %2831
        %2833 = vrot.lane.b32.xlu0 %v2658, 8
        %v2834 = vpop.permute.xlu0 %2833
        %2835 = vrot.lane.b32.xlu0 %v2660, 8
        %v2836 = vpop.permute.xlu0 %2835
        %2837 = vrot.lane.b32.xlu0 %v2663, 8
        %v2838 = vpop.permute.xlu0 %2837
        %2839 = vrot.lane.b32.xlu0 %v2665, 8
        %v2840 = vpop.permute.xlu0 %2839
        %2841 = vrot.lane.b32.xlu0 %v2668, 8
        %v2842 = vpop.permute.xlu0 %2841
        %2843 = vrot.lane.b32.xlu0 %v2670, 8
        %v2844 = vpop.permute.xlu0 %2843
        %2845 = vrot.lane.b32.xlu0 %v2673, 8
        %v2846 = vpop.permute.xlu0 %2845
        %2847 = vrot.lane.b32.xlu0 %v2675, 8
        %v2848 = vpop.permute.xlu0 %2847
        %2849 = vrot.lane.b32.xlu0 %v2678, 8
        %v2850 = vpop.permute.xlu0 %2849
        %2851 = vrot.lane.b32.xlu0 %v2680, 8
        %v2852 = vpop.permute.xlu0 %2851
        %2853 = vrot.lane.b32.xlu0 %v2683, 8
        %v2854 = vpop.permute.xlu0 %2853
        %2855 = vrot.lane.b32.xlu0 %v2685, 8
        %v2856 = vpop.permute.xlu0 %2855
        %2857 = vrot.lane.b32.xlu0 %v2688, 8
        %v2858 = vpop.permute.xlu0 %2857
        %2859 = vrot.lane.b32.xlu0 %v2690, 8
        %v2860 = vpop.permute.xlu0 %2859
        %2893 = vrot.lane.b32.xlu0 %v2693, 16
        %v2894 = vpop.permute.xlu0 %2893
        %2895 = vrot.lane.b32.xlu0 %v2695, 16
        %v2896 = vpop.permute.xlu0 %2895
        %2897 = vrot.lane.b32.xlu0 %v2698, 16
        %v2898 = vpop.permute.xlu0 %2897
        %2899 = vrot.lane.b32.xlu0 %v2700, 16
        %v2900 = vpop.permute.xlu0 %2899
        %2901 = vrot.lane.b32.xlu0 %v2703, 16
        %v2902 = vpop.permute.xlu0 %2901
        %2903 = vrot.lane.b32.xlu0 %v2705, 16
        %v2904 = vpop.permute.xlu0 %2903
        %2905 = vrot.lane.b32.xlu0 %v2708, 16
        %v2906 = vpop.permute.xlu0 %2905
        %2907 = vrot.lane.b32.xlu0 %v2710, 16
        %v2908 = vpop.permute.xlu0 %2907
        %2909 = vrot.lane.b32.xlu0 %v2713, 16
        %v2910 = vpop.permute.xlu0 %2909
        %2911 = vrot.lane.b32.xlu0 %v2715, 16
        %v2912 = vpop.permute.xlu0 %2911
        %2913 = vrot.lane.b32.xlu0 %v2718, 16
        %v2914 = vpop.permute.xlu0 %2913
        %2915 = vrot.lane.b32.xlu0 %v2720, 16
        %v2916 = vpop.permute.xlu0 %2915
        %2917 = vrot.lane.b32.xlu0 %v2723, 16
        %v2918 = vpop.permute.xlu0 %2917
        %2919 = vrot.lane.b32.xlu0 %v2725, 16
        %v2920 = vpop.permute.xlu0 %2919
        %2921 = vrot.lane.b32.xlu0 %v2728, 16
        %v2922 = vpop.permute.xlu0 %2921
        %2923 = vrot.lane.b32.xlu0 %v2730, 16
        %v2924 = vpop.permute.xlu0 %2923
        %2925 = vrot.lane.b32.xlu0 %v2733, 16
        %v2926 = vpop.permute.xlu0 %2925
        %2927 = vrot.lane.b32.xlu0 %v2735, 16
        %v2928 = vpop.permute.xlu0 %2927
        %2929 = vrot.lane.b32.xlu0 %v2738, 16
        %v2930 = vpop.permute.xlu0 %2929
        %2931 = vrot.lane.b32.xlu0 %v2740, 16
        %v2932 = vpop.permute.xlu0 %2931
        %2933 = vrot.lane.b32.xlu0 %v2743, 16
        %v2934 = vpop.permute.xlu0 %2933
        %2935 = vrot.lane.b32.xlu0 %v2745, 16
        %v2936 = vpop.permute.xlu0 %2935
        %2937 = vrot.lane.b32.xlu0 %v2748, 16
        %v2938 = vpop.permute.xlu0 %2937
        %2939 = vrot.lane.b32.xlu0 %v2750, 16
        %v2940 = vpop.permute.xlu0 %2939
        %2941 = vrot.lane.b32.xlu0 %v2753, 16
        %v2942 = vpop.permute.xlu0 %2941
        %2943 = vrot.lane.b32.xlu0 %v2755, 16
        %v2944 = vpop.permute.xlu0 %2943
        %2945 = vrot.lane.b32.xlu0 %v2758, 16
        %v2946 = vpop.permute.xlu0 %2945
        %2947 = vrot.lane.b32.xlu0 %v2760, 16
        %v2948 = vpop.permute.xlu0 %2947
        %2949 = vrot.lane.b32.xlu0 %v2763, 16
        %v2950 = vpop.permute.xlu0 %2949
        %2951 = vrot.lane.b32.xlu0 %v2765, 16
        %v2952 = vpop.permute.xlu0 %2951
        %2953 = vrot.lane.b32.xlu0 %v2768, 16
        %v2954 = vpop.permute.xlu0 %2953
        %2955 = vrot.lane.b32.xlu0 %v2770, 16
        %v2956 = vpop.permute.xlu0 %2955
        %2989 = vrot.lane.b32.xlu0 %v2512, 24
        %v2990 = vpop.permute.xlu0 %2989
        %2991 = vrot.lane.b32.xlu0 %v2513, 24
        %v2992 = vpop.permute.xlu0 %2991
        %2993 = vrot.lane.b32.xlu0 %v2515, 24
        %v2994 = vpop.permute.xlu0 %2993
        %2995 = vrot.lane.b32.xlu0 %v2516, 24
        %v2996 = vpop.permute.xlu0 %2995
        %2997 = vrot.lane.b32.xlu0 %v2518, 24
        %v2998 = vpop.permute.xlu0 %2997
        %2999 = vrot.lane.b32.xlu0 %v2519, 24
        %v3000 = vpop.permute.xlu0 %2999
        %3001 = vrot.lane.b32.xlu0 %v2521, 24
        %v3002 = vpop.permute.xlu0 %3001
        %3003 = vrot.lane.b32.xlu0 %v2522, 24
        %v3004 = vpop.permute.xlu0 %3003
        %3005 = vrot.lane.b32.xlu0 %v2524, 24
        %v3006 = vpop.permute.xlu0 %3005
        %3007 = vrot.lane.b32.xlu0 %v2525, 24
        %v3008 = vpop.permute.xlu0 %3007
        %3009 = vrot.lane.b32.xlu0 %v2527, 24
        %v3010 = vpop.permute.xlu0 %3009
        %3011 = vrot.lane.b32.xlu0 %v2528, 24
        %v3012 = vpop.permute.xlu0 %3011
        %3013 = vrot.lane.b32.xlu0 %v2530, 24
        %v3014 = vpop.permute.xlu0 %3013
        %3015 = vrot.lane.b32.xlu0 %v2531, 24
        %v3016 = vpop.permute.xlu0 %3015
        %3017 = vrot.lane.b32.xlu0 %v2533, 24
        %v3018 = vpop.permute.xlu0 %3017
        %3019 = vrot.lane.b32.xlu0 %v2534, 24
        %v3020 = vpop.permute.xlu0 %3019
        %3021 = vrot.lane.b32.xlu0 %v2536, 24
        %v3022 = vpop.permute.xlu0 %3021
        %3023 = vrot.lane.b32.xlu0 %v2537, 24
        %v3024 = vpop.permute.xlu0 %3023
        %3025 = vrot.lane.b32.xlu0 %v2539, 24
        %v3026 = vpop.permute.xlu0 %3025
        %3027 = vrot.lane.b32.xlu0 %v2540, 24
        %v3028 = vpop.permute.xlu0 %3027
        %3029 = vrot.lane.b32.xlu0 %v2542, 24
        %v3030 = vpop.permute.xlu0 %3029
        %3031 = vrot.lane.b32.xlu0 %v2543, 24
        %v3032 = vpop.permute.xlu0 %3031
        %3033 = vrot.lane.b32.xlu0 %v2545, 24
        %v3034 = vpop.permute.xlu0 %3033
        %3035 = vrot.lane.b32.xlu0 %v2546, 24
        %v3036 = vpop.permute.xlu0 %3035
        %3037 = vrot.lane.b32.xlu0 %v2548, 24
        %v3038 = vpop.permute.xlu0 %3037
        %3039 = vrot.lane.b32.xlu0 %v2549, 24
        %v3040 = vpop.permute.xlu0 %3039
        %3041 = vrot.lane.b32.xlu0 %v2551, 24
        %v3042 = vpop.permute.xlu0 %3041
        %3043 = vrot.lane.b32.xlu0 %v2552, 24
        %v3044 = vpop.permute.xlu0 %3043
        %3045 = vrot.lane.b32.xlu0 %v2554, 24
        %v3046 = vpop.permute.xlu0 %3045
        %3047 = vrot.lane.b32.xlu0 %v2555, 24
        %v3048 = vpop.permute.xlu0 %3047
        %3049 = vrot.lane.b32.xlu0 %v2557, 24
        %v3050 = vpop.permute.xlu0 %3049
        %3051 = vrot.lane.b32.xlu0 %v2558, 24
        %v3052 = vpop.permute.xlu0 %3051
        %3085 = vrot.lane.b32.xlu0 %v2618, 32
        %v3086 = vpop.permute.xlu0 %3085
        %3087 = vrot.lane.b32.xlu0 %v2620, 32
        %v3088 = vpop.permute.xlu0 %3087
        %3089 = vrot.lane.b32.xlu0 %v2623, 32
        %v3090 = vpop.permute.xlu0 %3089
        %3091 = vrot.lane.b32.xlu0 %v2625, 32
        %v3092 = vpop.permute.xlu0 %3091
        %3093 = vrot.lane.b32.xlu0 %v2628, 32
        %v3094 = vpop.permute.xlu0 %3093
        %3095 = vrot.lane.b32.xlu0 %v2630, 32
        %v3096 = vpop.permute.xlu0 %3095
        %3097 = vrot.lane.b32.xlu0 %v2633, 32
        %v3098 = vpop.permute.xlu0 %3097
        %3099 = vrot.lane.b32.xlu0 %v2635, 32
        %v3100 = vpop.permute.xlu0 %3099
        %3101 = vrot.lane.b32.xlu0 %v2638, 32
        %v3102 = vpop.permute.xlu0 %3101
        %3103 = vrot.lane.b32.xlu0 %v2640, 32
        %v3104 = vpop.permute.xlu0 %3103
        %3105 = vrot.lane.b32.xlu0 %v2643, 32
        %v3106 = vpop.permute.xlu0 %3105
        %3107 = vrot.lane.b32.xlu0 %v2645, 32
        %v3108 = vpop.permute.xlu0 %3107
        %3109 = vrot.lane.b32.xlu0 %v2648, 32
        %v3110 = vpop.permute.xlu0 %3109
        %3111 = vrot.lane.b32.xlu0 %v2650, 32
        %v3112 = vpop.permute.xlu0 %3111
        %3113 = vrot.lane.b32.xlu0 %v2653, 32
        %v3114 = vpop.permute.xlu0 %3113
        %3115 = vrot.lane.b32.xlu0 %v2655, 32
        %v3116 = vpop.permute.xlu0 %3115
        %3117 = vrot.lane.b32.xlu0 %v2658, 32
        %v3118 = vpop.permute.xlu0 %3117
        %3119 = vrot.lane.b32.xlu0 %v2660, 32
        %v3120 = vpop.permute.xlu0 %3119
        %3121 = vrot.lane.b32.xlu0 %v2663, 32
        %v3122 = vpop.permute.xlu0 %3121
        %3123 = vrot.lane.b32.xlu0 %v2665, 32
        %v3124 = vpop.permute.xlu0 %3123
        %3125 = vrot.lane.b32.xlu0 %v2668, 32
        %v3126 = vpop.permute.xlu0 %3125
        %3127 = vrot.lane.b32.xlu0 %v2670, 32
        %v3128 = vpop.permute.xlu0 %3127
        %3129 = vrot.lane.b32.xlu0 %v2673, 32
        %v3130 = vpop.permute.xlu0 %3129
        %3131 = vrot.lane.b32.xlu0 %v2675, 32
        %v3132 = vpop.permute.xlu0 %3131
        %3133 = vrot.lane.b32.xlu0 %v2678, 32
        %v3134 = vpop.permute.xlu0 %3133
        %3135 = vrot.lane.b32.xlu0 %v2680, 32
        %v3136 = vpop.permute.xlu0 %3135
        %3137 = vrot.lane.b32.xlu0 %v2683, 32
        %v3138 = vpop.permute.xlu0 %3137
        %3139 = vrot.lane.b32.xlu0 %v2685, 32
        %v3140 = vpop.permute.xlu0 %3139
        %3141 = vrot.lane.b32.xlu0 %v2688, 32
        %v3142 = vpop.permute.xlu0 %3141
        %3143 = vrot.lane.b32.xlu0 %v2690, 32
        %v3144 = vpop.permute.xlu0 %3143
        %3145 = vrot.lane.b32.xlu0 %v2776, 32
        %v3146 = vpop.permute.xlu0 %3145
        %3147 = vrot.lane.b32.xlu0 %v2778, 32
        %v3148 = vpop.permute.xlu0 %3147
        %3181 = vrot.lane.b32.xlu0 %v2698, 40
        %v3182 = vpop.permute.xlu0 %3181
        %3183 = vrot.lane.b32.xlu0 %v2700, 40
        %v3184 = vpop.permute.xlu0 %3183
        %3185 = vrot.lane.b32.xlu0 %v2703, 40
        %v3186 = vpop.permute.xlu0 %3185
        %3187 = vrot.lane.b32.xlu0 %v2705, 40
        %v3188 = vpop.permute.xlu0 %3187
        %3189 = vrot.lane.b32.xlu0 %v2708, 40
        %v3190 = vpop.permute.xlu0 %3189
        %3191 = vrot.lane.b32.xlu0 %v2710, 40
        %v3192 = vpop.permute.xlu0 %3191
        %3193 = vrot.lane.b32.xlu0 %v2713, 40
        %v3194 = vpop.permute.xlu0 %3193
        %3195 = vrot.lane.b32.xlu0 %v2715, 40
        %v3196 = vpop.permute.xlu0 %3195
        %3197 = vrot.lane.b32.xlu0 %v2718, 40
        %v3198 = vpop.permute.xlu0 %3197
        %3199 = vrot.lane.b32.xlu0 %v2720, 40
        %v3200 = vpop.permute.xlu0 %3199
        %3201 = vrot.lane.b32.xlu0 %v2723, 40
        %v3202 = vpop.permute.xlu0 %3201
        %3203 = vrot.lane.b32.xlu0 %v2725, 40
        %v3204 = vpop.permute.xlu0 %3203
        %3205 = vrot.lane.b32.xlu0 %v2728, 40
        %v3206 = vpop.permute.xlu0 %3205
        %3207 = vrot.lane.b32.xlu0 %v2730, 40
        %v3208 = vpop.permute.xlu0 %3207
        %3209 = vrot.lane.b32.xlu0 %v2733, 40
        %v3210 = vpop.permute.xlu0 %3209
        %3211 = vrot.lane.b32.xlu0 %v2735, 40
        %v3212 = vpop.permute.xlu0 %3211
        %3213 = vrot.lane.b32.xlu0 %v2738, 40
        %v3214 = vpop.permute.xlu0 %3213
        %3215 = vrot.lane.b32.xlu0 %v2740, 40
        %v3216 = vpop.permute.xlu0 %3215
        %3217 = vrot.lane.b32.xlu0 %v2743, 40
        %v3218 = vpop.permute.xlu0 %3217
        %3219 = vrot.lane.b32.xlu0 %v2745, 40
        %v3220 = vpop.permute.xlu0 %3219
        %3221 = vrot.lane.b32.xlu0 %v2748, 40
        %v3222 = vpop.permute.xlu0 %3221
        %3223 = vrot.lane.b32.xlu0 %v2750, 40
        %v3224 = vpop.permute.xlu0 %3223
        %3225 = vrot.lane.b32.xlu0 %v2753, 40
        %v3226 = vpop.permute.xlu0 %3225
        %3227 = vrot.lane.b32.xlu0 %v2755, 40
        %v3228 = vpop.permute.xlu0 %3227
        %3229 = vrot.lane.b32.xlu0 %v2758, 40
        %v3230 = vpop.permute.xlu0 %3229
        %3231 = vrot.lane.b32.xlu0 %v2760, 40
        %v3232 = vpop.permute.xlu0 %3231
        %3233 = vrot.lane.b32.xlu0 %v2763, 40
        %v3234 = vpop.permute.xlu0 %3233
        %3235 = vrot.lane.b32.xlu0 %v2765, 40
        %v3236 = vpop.permute.xlu0 %3235
        %3237 = vrot.lane.b32.xlu0 %v2768, 40
        %v3238 = vpop.permute.xlu0 %3237
        %3239 = vrot.lane.b32.xlu0 %v2770, 40
        %v3240 = vpop.permute.xlu0 %3239
        %3241 = vrot.lane.b32.xlu0 %v2781, 40
        %v3242 = vpop.permute.xlu0 %3241
        %3243 = vrot.lane.b32.xlu0 %v2783, 40
        %v3244 = vpop.permute.xlu0 %3243
        %3277 = vrot.lane.b32.xlu0 %v2515, 48
        %v3278 = vpop.permute.xlu0 %3277
        %3279 = vrot.lane.b32.xlu0 %v2516, 48
        %v3280 = vpop.permute.xlu0 %3279
        %3281 = vrot.lane.b32.xlu0 %v2518, 48
        %v3282 = vpop.permute.xlu0 %3281
        %3283 = vrot.lane.b32.xlu0 %v2519, 48
        %v3284 = vpop.permute.xlu0 %3283
        %3285 = vrot.lane.b32.xlu0 %v2521, 48
        %v3286 = vpop.permute.xlu0 %3285
        %3287 = vrot.lane.b32.xlu0 %v2522, 48
        %v3288 = vpop.permute.xlu0 %3287
        %3289 = vrot.lane.b32.xlu0 %v2524, 48
        %v3290 = vpop.permute.xlu0 %3289
        %3291 = vrot.lane.b32.xlu0 %v2525, 48
        %v3292 = vpop.permute.xlu0 %3291
        %3293 = vrot.lane.b32.xlu0 %v2527, 48
        %v3294 = vpop.permute.xlu0 %3293
        %3295 = vrot.lane.b32.xlu0 %v2528, 48
        %v3296 = vpop.permute.xlu0 %3295
        %3297 = vrot.lane.b32.xlu0 %v2530, 48
        %v3298 = vpop.permute.xlu0 %3297
        %3299 = vrot.lane.b32.xlu0 %v2531, 48
        %v3300 = vpop.permute.xlu0 %3299
        %3301 = vrot.lane.b32.xlu0 %v2533, 48
        %v3302 = vpop.permute.xlu0 %3301
        %3303 = vrot.lane.b32.xlu0 %v2534, 48
        %v3304 = vpop.permute.xlu0 %3303
        %3305 = vrot.lane.b32.xlu0 %v2536, 48
        %v3306 = vpop.permute.xlu0 %3305
        %3307 = vrot.lane.b32.xlu0 %v2537, 48
        %v3308 = vpop.permute.xlu0 %3307
        %3309 = vrot.lane.b32.xlu0 %v2539, 48
        %v3310 = vpop.permute.xlu0 %3309
        %3311 = vrot.lane.b32.xlu0 %v2540, 48
        %v3312 = vpop.permute.xlu0 %3311
        %3313 = vrot.lane.b32.xlu0 %v2542, 48
        %v3314 = vpop.permute.xlu0 %3313
        %3315 = vrot.lane.b32.xlu0 %v2543, 48
        %v3316 = vpop.permute.xlu0 %3315
        %3317 = vrot.lane.b32.xlu0 %v2545, 48
        %v3318 = vpop.permute.xlu0 %3317
        %3319 = vrot.lane.b32.xlu0 %v2546, 48
        %v3320 = vpop.permute.xlu0 %3319
        %3321 = vrot.lane.b32.xlu0 %v2548, 48
        %v3322 = vpop.permute.xlu0 %3321
        %3323 = vrot.lane.b32.xlu0 %v2549, 48
        %v3324 = vpop.permute.xlu0 %3323
        %3325 = vrot.lane.b32.xlu0 %v2551, 48
        %v3326 = vpop.permute.xlu0 %3325
        %3327 = vrot.lane.b32.xlu0 %v2552, 48
        %v3328 = vpop.permute.xlu0 %3327
        %3329 = vrot.lane.b32.xlu0 %v2554, 48
        %v3330 = vpop.permute.xlu0 %3329
        %3331 = vrot.lane.b32.xlu0 %v2555, 48
        %v3332 = vpop.permute.xlu0 %3331
        %3333 = vrot.lane.b32.xlu0 %v2557, 48
        %v3334 = vpop.permute.xlu0 %3333
        %3335 = vrot.lane.b32.xlu0 %v2558, 48
        %v3336 = vpop.permute.xlu0 %3335
        %3337 = vrot.lane.b32.xlu0 %v2560, 48
        %v3338 = vpop.permute.xlu0 %3337
        %3339 = vrot.lane.b32.xlu0 %v2561, 48
        %v3340 = vpop.permute.xlu0 %3339
        %3373 = vrot.lane.b32.xlu0 %v2623, 56
        %v3374 = vpop.permute.xlu0 %3373
        %3375 = vrot.lane.b32.xlu0 %v2625, 56
        %v3376 = vpop.permute.xlu0 %3375
        %3377 = vrot.lane.b32.xlu0 %v2628, 56
        %v3378 = vpop.permute.xlu0 %3377
        %3379 = vrot.lane.b32.xlu0 %v2630, 56
        %v3380 = vpop.permute.xlu0 %3379
        %3381 = vrot.lane.b32.xlu0 %v2633, 56
        %v3382 = vpop.permute.xlu0 %3381
        %3383 = vrot.lane.b32.xlu0 %v2635, 56
        %v3384 = vpop.permute.xlu0 %3383
        %3385 = vrot.lane.b32.xlu0 %v2638, 56
        %v3386 = vpop.permute.xlu0 %3385
        %3387 = vrot.lane.b32.xlu0 %v2640, 56
        %v3388 = vpop.permute.xlu0 %3387
        %3389 = vrot.lane.b32.xlu0 %v2643, 56
        %v3390 = vpop.permute.xlu0 %3389
        %3391 = vrot.lane.b32.xlu0 %v2645, 56
        %v3392 = vpop.permute.xlu0 %3391
        %3393 = vrot.lane.b32.xlu0 %v2648, 56
        %v3394 = vpop.permute.xlu0 %3393
        %3395 = vrot.lane.b32.xlu0 %v2650, 56
        %v3396 = vpop.permute.xlu0 %3395
        %3397 = vrot.lane.b32.xlu0 %v2653, 56
        %v3398 = vpop.permute.xlu0 %3397
        %3399 = vrot.lane.b32.xlu0 %v2655, 56
        %v3400 = vpop.permute.xlu0 %3399
        %3401 = vrot.lane.b32.xlu0 %v2658, 56
        %v3402 = vpop.permute.xlu0 %3401
        %3403 = vrot.lane.b32.xlu0 %v2660, 56
        %v3404 = vpop.permute.xlu0 %3403
        %3405 = vrot.lane.b32.xlu0 %v2663, 56
        %v3406 = vpop.permute.xlu0 %3405
        %3407 = vrot.lane.b32.xlu0 %v2665, 56
        %v3408 = vpop.permute.xlu0 %3407
        %3409 = vrot.lane.b32.xlu0 %v2668, 56
        %v3410 = vpop.permute.xlu0 %3409
        %3411 = vrot.lane.b32.xlu0 %v2670, 56
        %v3412 = vpop.permute.xlu0 %3411
        %3413 = vrot.lane.b32.xlu0 %v2673, 56
        %v3414 = vpop.permute.xlu0 %3413
        %3415 = vrot.lane.b32.xlu0 %v2675, 56
        %v3416 = vpop.permute.xlu0 %3415
        %3417 = vrot.lane.b32.xlu0 %v2678, 56
        %v3418 = vpop.permute.xlu0 %3417
        %3419 = vrot.lane.b32.xlu0 %v2680, 56
        %v3420 = vpop.permute.xlu0 %3419
        %3421 = vrot.lane.b32.xlu0 %v2683, 56
        %v3422 = vpop.permute.xlu0 %3421
        %3423 = vrot.lane.b32.xlu0 %v2685, 56
        %v3424 = vpop.permute.xlu0 %3423
        %3425 = vrot.lane.b32.xlu0 %v2688, 56
        %v3426 = vpop.permute.xlu0 %3425
        %3427 = vrot.lane.b32.xlu0 %v2690, 56
        %v3428 = vpop.permute.xlu0 %3427
        %3429 = vrot.lane.b32.xlu0 %v2776, 56
        %v3430 = vpop.permute.xlu0 %3429
        %3431 = vrot.lane.b32.xlu0 %v2778, 56
        %v3432 = vpop.permute.xlu0 %3431
        %3433 = vrot.lane.b32.xlu0 %v2789, 56
        %v3434 = vpop.permute.xlu0 %3433
        %3435 = vrot.lane.b32.xlu0 %v2791, 56
        %v3436 = vpop.permute.xlu0 %3435
        %3469 = vrot.lane.b32.xlu0 %v2703, 64
        %v3470 = vpop.permute.xlu0 %3469
        %3471 = vrot.lane.b32.xlu0 %v2705, 64
        %v3472 = vpop.permute.xlu0 %3471
        %3473 = vrot.lane.b32.xlu0 %v2708, 64
        %v3474 = vpop.permute.xlu0 %3473
        %3475 = vrot.lane.b32.xlu0 %v2710, 64
        %v3476 = vpop.permute.xlu0 %3475
        %3477 = vrot.lane.b32.xlu0 %v2713, 64
        %v3478 = vpop.permute.xlu0 %3477
        %3479 = vrot.lane.b32.xlu0 %v2715, 64
        %v3480 = vpop.permute.xlu0 %3479
        %3481 = vrot.lane.b32.xlu0 %v2718, 64
        %v3482 = vpop.permute.xlu0 %3481
        %3483 = vrot.lane.b32.xlu0 %v2720, 64
        %v3484 = vpop.permute.xlu0 %3483
        %3485 = vrot.lane.b32.xlu0 %v2723, 64
        %v3486 = vpop.permute.xlu0 %3485
        %3487 = vrot.lane.b32.xlu0 %v2725, 64
        %v3488 = vpop.permute.xlu0 %3487
        %3489 = vrot.lane.b32.xlu0 %v2728, 64
        %v3490 = vpop.permute.xlu0 %3489
        %3491 = vrot.lane.b32.xlu0 %v2730, 64
        %v3492 = vpop.permute.xlu0 %3491
        %3493 = vrot.lane.b32.xlu0 %v2733, 64
        %v3494 = vpop.permute.xlu0 %3493
        %3495 = vrot.lane.b32.xlu0 %v2735, 64
        %v3496 = vpop.permute.xlu0 %3495
        %3497 = vrot.lane.b32.xlu0 %v2738, 64
        %v3498 = vpop.permute.xlu0 %3497
        %3499 = vrot.lane.b32.xlu0 %v2740, 64
        %v3500 = vpop.permute.xlu0 %3499
        %3501 = vrot.lane.b32.xlu0 %v2743, 64
        %v3502 = vpop.permute.xlu0 %3501
        %3503 = vrot.lane.b32.xlu0 %v2745, 64
        %v3504 = vpop.permute.xlu0 %3503
        %3505 = vrot.lane.b32.xlu0 %v2748, 64
        %v3506 = vpop.permute.xlu0 %3505
        %3507 = vrot.lane.b32.xlu0 %v2750, 64
        %v3508 = vpop.permute.xlu0 %3507
        %3509 = vrot.lane.b32.xlu0 %v2753, 64
        %v3510 = vpop.permute.xlu0 %3509
        %3511 = vrot.lane.b32.xlu0 %v2755, 64
        %v3512 = vpop.permute.xlu0 %3511
        %3513 = vrot.lane.b32.xlu0 %v2758, 64
        %v3514 = vpop.permute.xlu0 %3513
        %3515 = vrot.lane.b32.xlu0 %v2760, 64
        %v3516 = vpop.permute.xlu0 %3515
        %3517 = vrot.lane.b32.xlu0 %v2763, 64
        %v3518 = vpop.permute.xlu0 %3517
        %3519 = vrot.lane.b32.xlu0 %v2765, 64
        %v3520 = vpop.permute.xlu0 %3519
        %3521 = vrot.lane.b32.xlu0 %v2768, 64
        %v3522 = vpop.permute.xlu0 %3521
        %3523 = vrot.lane.b32.xlu0 %v2770, 64
        %v3524 = vpop.permute.xlu0 %3523
        %3525 = vrot.lane.b32.xlu0 %v2781, 64
        %v3526 = vpop.permute.xlu0 %3525
        %3527 = vrot.lane.b32.xlu0 %v2783, 64
        %v3528 = vpop.permute.xlu0 %3527
        %3529 = vrot.lane.b32.xlu0 %v2794, 64
        %v3530 = vpop.permute.xlu0 %3529
        %3531 = vrot.lane.b32.xlu0 %v2796, 64
        %v3532 = vpop.permute.xlu0 %3531
        %v3565 = vsel %vm1821, %v2509, %v2798
        %v3566 = vsel %vm1821, %v2510, %v2800
        %v3567 = vsel %vm1821, %v2512, %v2802
        %v3568 = vsel %vm1821, %v2513, %v2804
        %v3569 = vsel %vm1821, %v2515, %v2806
        %v3570 = vsel %vm1821, %v2516, %v2808
        %v3571 = vsel %vm1821, %v2518, %v2810
        %v3572 = vsel %vm1821, %v2519, %v2812
        %v3573 = vsel %vm1821, %v2521, %v2814
        %v3574 = vsel %vm1821, %v2522, %v2816
        %v3575 = vsel %vm1821, %v2524, %v2818
        %v3576 = vsel %vm1821, %v2525, %v2820
        %v3577 = vsel %vm1821, %v2527, %v2822
        %v3578 = vsel %vm1821, %v2528, %v2824
        %v3579 = vsel %vm1821, %v2530, %v2826
        %v3580 = vsel %vm1821, %v2531, %v2828
        %v3581 = vsel %vm1821, %v2533, %v2830
        %v3582 = vsel %vm1821, %v2534, %v2832
        %v3583 = vsel %vm1821, %v2536, %v2834
        %v3584 = vsel %vm1821, %v2537, %v2836
        %v3585 = vsel %vm1821, %v2539, %v2838
        %v3586 = vsel %vm1821, %v2540, %v2840
        %v3587 = vsel %vm1821, %v2542, %v2842
        %v3588 = vsel %vm1821, %v2543, %v2844
        %v3589 = vsel %vm1821, %v2545, %v2846
        %v3590 = vsel %vm1821, %v2546, %v2848
        %v3591 = vsel %vm1821, %v2548, %v2850
        %v3592 = vsel %vm1821, %v2549, %v2852
        %v3593 = vsel %vm1821, %v2551, %v2854
        %v3594 = vsel %vm1821, %v2552, %v2856
        %v3595 = vsel %vm1821, %v2554, %v2858
        %v3596 = vsel %vm1821, %v2555, %v2860
        %v3597 = vsel %vm1887, %v3565, %v2894
        %v3598 = vsel %vm1887, %v3566, %v2896
        %v3599 = vsel %vm1887, %v3567, %v2898
        %v3600 = vsel %vm1887, %v3568, %v2900
        %v3601 = vsel %vm1887, %v3569, %v2902
        %v3602 = vsel %vm1887, %v3570, %v2904
        %v3603 = vsel %vm1887, %v3571, %v2906
        %v3604 = vsel %vm1887, %v3572, %v2908
        %v3605 = vsel %vm1887, %v3573, %v2910
        %v3606 = vsel %vm1887, %v3574, %v2912
        %v3607 = vsel %vm1887, %v3575, %v2914
        %v3608 = vsel %vm1887, %v3576, %v2916
        %v3609 = vsel %vm1887, %v3577, %v2918
        %v3610 = vsel %vm1887, %v3578, %v2920
        %v3611 = vsel %vm1887, %v3579, %v2922
        %v3612 = vsel %vm1887, %v3580, %v2924
        %v3613 = vsel %vm1887, %v3581, %v2926
        %v3614 = vsel %vm1887, %v3582, %v2928
        %v3615 = vsel %vm1887, %v3583, %v2930
        %v3616 = vsel %vm1887, %v3584, %v2932
        %v3617 = vsel %vm1887, %v3585, %v2934
        %v3618 = vsel %vm1887, %v3586, %v2936
        %v3619 = vsel %vm1887, %v3587, %v2938
        %v3620 = vsel %vm1887, %v3588, %v2940
        %v3621 = vsel %vm1887, %v3589, %v2942
        %v3622 = vsel %vm1887, %v3590, %v2944
        %v3623 = vsel %vm1887, %v3591, %v2946
        %v3624 = vsel %vm1887, %v3592, %v2948
        %v3625 = vsel %vm1887, %v3593, %v2950
        %v3626 = vsel %vm1887, %v3594, %v2952
        %v3627 = vsel %vm1887, %v3595, %v2954
        %v3628 = vsel %vm1887, %v3596, %v2956
        %v3629 = vsel %vm1953, %v3597, %v2990
        %v3630 = vsel %vm1953, %v3598, %v2992
        %v3631 = vsel %vm1953, %v3599, %v2994
        %v3632 = vsel %vm1953, %v3600, %v2996
        %v3633 = vsel %vm1953, %v3601, %v2998
        %v3634 = vsel %vm1953, %v3602, %v3000
        %v3635 = vsel %vm1953, %v3603, %v3002
        %v3636 = vsel %vm1953, %v3604, %v3004
        %v3637 = vsel %vm1953, %v3605, %v3006
        %v3638 = vsel %vm1953, %v3606, %v3008
        %v3639 = vsel %vm1953, %v3607, %v3010
        %v3640 = vsel %vm1953, %v3608, %v3012
        %v3641 = vsel %vm1953, %v3609, %v3014
        %v3642 = vsel %vm1953, %v3610, %v3016
        %v3643 = vsel %vm1953, %v3611, %v3018
        %v3644 = vsel %vm1953, %v3612, %v3020
        %v3645 = vsel %vm1953, %v3613, %v3022
        %v3646 = vsel %vm1953, %v3614, %v3024
        %v3647 = vsel %vm1953, %v3615, %v3026
        %v3648 = vsel %vm1953, %v3616, %v3028
        %v3649 = vsel %vm1953, %v3617, %v3030
        %v3650 = vsel %vm1953, %v3618, %v3032
        %v3651 = vsel %vm1953, %v3619, %v3034
        %v3652 = vsel %vm1953, %v3620, %v3036
        %v3653 = vsel %vm1953, %v3621, %v3038
        %v3654 = vsel %vm1953, %v3622, %v3040
        %v3655 = vsel %vm1953, %v3623, %v3042
        %v3656 = vsel %vm1953, %v3624, %v3044
        %v3657 = vsel %vm1953, %v3625, %v3046
        %v3658 = vsel %vm1953, %v3626, %v3048
        %v3659 = vsel %vm1953, %v3627, %v3050
        %v3660 = vsel %vm1953, %v3628, %v3052
        %v3661 = vsel %vm2019, %v3629, %v3086
        %v3662 = vsel %vm2019, %v3630, %v3088
        %v3663 = vsel %vm2019, %v3631, %v3090
        %v3664 = vsel %vm2019, %v3632, %v3092
        %v3665 = vsel %vm2019, %v3633, %v3094
        %v3666 = vsel %vm2019, %v3634, %v3096
        %v3667 = vsel %vm2019, %v3635, %v3098
        %v3668 = vsel %vm2019, %v3636, %v3100
        %v3669 = vsel %vm2019, %v3637, %v3102
        %v3670 = vsel %vm2019, %v3638, %v3104
        %v3671 = vsel %vm2019, %v3639, %v3106
        %v3672 = vsel %vm2019, %v3640, %v3108
        %v3673 = vsel %vm2019, %v3641, %v3110
        %v3674 = vsel %vm2019, %v3642, %v3112
        %v3675 = vsel %vm2019, %v3643, %v3114
        %v3676 = vsel %vm2019, %v3644, %v3116
        %v3677 = vsel %vm2019, %v3645, %v3118
        %v3678 = vsel %vm2019, %v3646, %v3120
        %v3679 = vsel %vm2019, %v3647, %v3122
        %v3680 = vsel %vm2019, %v3648, %v3124
        %v3681 = vsel %vm2019, %v3649, %v3126
        %v3682 = vsel %vm2019, %v3650, %v3128
        %v3683 = vsel %vm2019, %v3651, %v3130
        %v3684 = vsel %vm2019, %v3652, %v3132
        %v3685 = vsel %vm2019, %v3653, %v3134
        %v3686 = vsel %vm2019, %v3654, %v3136
        %v3687 = vsel %vm2019, %v3655, %v3138
        %v3688 = vsel %vm2019, %v3656, %v3140
        %v3689 = vsel %vm2019, %v3657, %v3142
        %v3690 = vsel %vm2019, %v3658, %v3144
        %v3691 = vsel %vm2019, %v3659, %v3146
        %v3692 = vsel %vm2019, %v3660, %v3148
        %vm3693 = vcmask 326656
        %v3694 = vsel %vm3693, %v3661, %v3182
        %v3695 = vsel %vm3693, %v3662, %v3184
        %v3696 = vsel %vm3693, %v3663, %v3186
        %v3697 = vsel %vm3693, %v3664, %v3188
        %v3698 = vsel %vm3693, %v3665, %v3190
        %v3699 = vsel %vm3693, %v3666, %v3192
        %v3700 = vsel %vm3693, %v3667, %v3194
        %v3701 = vsel %vm3693, %v3668, %v3196
        %v3702 = vsel %vm3693, %v3669, %v3198
        %v3703 = vsel %vm3693, %v3670, %v3200
        %v3704 = vsel %vm3693, %v3671, %v3202
        %v3705 = vsel %vm3693, %v3672, %v3204
        %v3706 = vsel %vm3693, %v3673, %v3206
        %v3707 = vsel %vm3693, %v3674, %v3208
        %v3708 = vsel %vm3693, %v3675, %v3210
        %v3709 = vsel %vm3693, %v3676, %v3212
        %v3710 = vsel %vm3693, %v3677, %v3214
        %v3711 = vsel %vm3693, %v3678, %v3216
        %v3712 = vsel %vm3693, %v3679, %v3218
        %v3713 = vsel %vm3693, %v3680, %v3220
        %v3714 = vsel %vm3693, %v3681, %v3222
        %v3715 = vsel %vm3693, %v3682, %v3224
        %v3716 = vsel %vm3693, %v3683, %v3226
        %v3717 = vsel %vm3693, %v3684, %v3228
        %v3718 = vsel %vm3693, %v3685, %v3230
        %v3719 = vsel %vm3693, %v3686, %v3232
        %v3720 = vsel %vm3693, %v3687, %v3234
        %v3721 = vsel %vm3693, %v3688, %v3236
        %v3722 = vsel %vm3693, %v3689, %v3238
        %v3723 = vsel %vm3693, %v3690, %v3240
        %v3724 = vsel %vm3693, %v3691, %v3242
        %v3725 = vsel %vm3693, %v3692, %v3244
        %vm3726 = vcmask 392192
        %v3727 = vsel %vm3726, %v3694, %v3278
        %v3728 = vsel %vm3726, %v3695, %v3280
        %v3729 = vsel %vm3726, %v3696, %v3282
        %v3730 = vsel %vm3726, %v3697, %v3284
        %v3731 = vsel %vm3726, %v3698, %v3286
        %v3732 = vsel %vm3726, %v3699, %v3288
        %v3733 = vsel %vm3726, %v3700, %v3290
        %v3734 = vsel %vm3726, %v3701, %v3292
        %v3735 = vsel %vm3726, %v3702, %v3294
        %v3736 = vsel %vm3726, %v3703, %v3296
        %v3737 = vsel %vm3726, %v3704, %v3298
        %v3738 = vsel %vm3726, %v3705, %v3300
        %v3739 = vsel %vm3726, %v3706, %v3302
        %v3740 = vsel %vm3726, %v3707, %v3304
        %v3741 = vsel %vm3726, %v3708, %v3306
        %v3742 = vsel %vm3726, %v3709, %v3308
        %v3743 = vsel %vm3726, %v3710, %v3310
        %v3744 = vsel %vm3726, %v3711, %v3312
        %v3745 = vsel %vm3726, %v3712, %v3314
        %v3746 = vsel %vm3726, %v3713, %v3316
        %v3747 = vsel %vm3726, %v3714, %v3318
        %v3748 = vsel %vm3726, %v3715, %v3320
        %v3749 = vsel %vm3726, %v3716, %v3322
        %v3750 = vsel %vm3726, %v3717, %v3324
        %v3751 = vsel %vm3726, %v3718, %v3326
        %v3752 = vsel %vm3726, %v3719, %v3328
        %v3753 = vsel %vm3726, %v3720, %v3330
        %v3754 = vsel %vm3726, %v3721, %v3332
        %v3755 = vsel %vm3726, %v3722, %v3334
        %v3756 = vsel %vm3726, %v3723, %v3336
        %v3757 = vsel %vm3726, %v3724, %v3338
        %v3758 = vsel %vm3726, %v3725, %v3340
        %vm3759 = vcmask 457728
        %v3760 = vsel %vm3759, %v3727, %v3374
        %v3761 = vsel %vm3759, %v3728, %v3376
        %v3762 = vsel %vm3759, %v3729, %v3378
        %v3763 = vsel %vm3759, %v3730, %v3380
        %v3764 = vsel %vm3759, %v3731, %v3382
        %v3765 = vsel %vm3759, %v3732, %v3384
        %v3766 = vsel %vm3759, %v3733, %v3386
        %v3767 = vsel %vm3759, %v3734, %v3388
        %v3768 = vsel %vm3759, %v3735, %v3390
        %v3769 = vsel %vm3759, %v3736, %v3392
        %v3770 = vsel %vm3759, %v3737, %v3394
        %v3771 = vsel %vm3759, %v3738, %v3396
        %v3772 = vsel %vm3759, %v3739, %v3398
        %v3773 = vsel %vm3759, %v3740, %v3400
        %v3774 = vsel %vm3759, %v3741, %v3402
        %v3775 = vsel %vm3759, %v3742, %v3404
        %v3776 = vsel %vm3759, %v3743, %v3406
        %v3777 = vsel %vm3759, %v3744, %v3408
        %v3778 = vsel %vm3759, %v3745, %v3410
        %v3779 = vsel %vm3759, %v3746, %v3412
        %v3780 = vsel %vm3759, %v3747, %v3414
        %v3781 = vsel %vm3759, %v3748, %v3416
        %v3782 = vsel %vm3759, %v3749, %v3418
        %v3783 = vsel %vm3759, %v3750, %v3420
        %v3784 = vsel %vm3759, %v3751, %v3422
        %v3785 = vsel %vm3759, %v3752, %v3424
        %v3786 = vsel %vm3759, %v3753, %v3426
        %v3787 = vsel %vm3759, %v3754, %v3428
        %v3788 = vsel %vm3759, %v3755, %v3430
        %v3789 = vsel %vm3759, %v3756, %v3432
        %v3790 = vsel %vm3759, %v3757, %v3434
        %v3791 = vsel %vm3759, %v3758, %v3436
        %vm3792 = vcmask 523264
        %v3793 = vsel %vm3792, %v3760, %v3470
        %v3794 = vsel %vm3792, %v3761, %v3472
        %v3795 = vsel %vm3792, %v3762, %v3474
        %v3796 = vsel %vm3792, %v3763, %v3476
        %v3797 = vsel %vm3792, %v3764, %v3478
        %v3798 = vsel %vm3792, %v3765, %v3480
        %v3799 = vsel %vm3792, %v3766, %v3482
        %v3800 = vsel %vm3792, %v3767, %v3484
        %v3801 = vsel %vm3792, %v3768, %v3486
        %v3802 = vsel %vm3792, %v3769, %v3488
        %v3803 = vsel %vm3792, %v3770, %v3490
        %v3804 = vsel %vm3792, %v3771, %v3492
        %v3805 = vsel %vm3792, %v3772, %v3494
        %v3806 = vsel %vm3792, %v3773, %v3496
        %v3807 = vsel %vm3792, %v3774, %v3498
        %v3808 = vsel %vm3792, %v3775, %v3500
        %v3809 = vsel %vm3792, %v3776, %v3502
        %v3810 = vsel %vm3792, %v3777, %v3504
        %v3811 = vsel %vm3792, %v3778, %v3506
        %v3812 = vsel %vm3792, %v3779, %v3508
        %v3813 = vsel %vm3792, %v3780, %v3510
        %v3814 = vsel %vm3792, %v3781, %v3512
        %v3815 = vsel %vm3792, %v3782, %v3514
        %v3816 = vsel %vm3792, %v3783, %v3516
        %v3817 = vsel %vm3792, %v3784, %v3518
        %v3818 = vsel %vm3792, %v3785, %v3520
        %v3819 = vsel %vm3792, %v3786, %v3522
        %v3820 = vsel %vm3792, %v3787, %v3524
        %v3821 = vsel %vm3792, %v3788, %v3526
        %v3822 = vsel %vm3792, %v3789, %v3528
        %v3823 = vsel %vm3792, %v3790, %v3530
        %v3824 = vsel %vm3792, %v3791, %v3532
        %v3825 = vld [vmem:[%s3] sm:$0xff]
        %v3826 = vld [vmem:[%s3 + $0x8] sm:$0xff]
        %v3827 = vld [vmem:[%s3 + $0x10] sm:$0xff]
        %v3828 = vld [vmem:[%s3 + $0x18] sm:$0xff]
        %v3829 = vld [vmem:[%s3 + $0x20] sm:$0xff]
        %v3830 = vld [vmem:[%s3 + $0x28] sm:$0xff]
        %v3831 = vld [vmem:[%s3 + $0x30] sm:$0xff]
        %v3832 = vld [vmem:[%s3 + $0x38] sm:$0xff]
        %v3833 = vld [vmem:[%s3 + $0x40] sm:$0xff]
        %v3834 = vld [vmem:[%s4] sm:$0x1]
        %v3836 = vlaneseq
        %v3837 = vshrl.u32 %v3836, 7
        %v3838 = vsub.s32 0, %v3837
        %v3839 = vrot.slane %v3834, %v3838
        %vm3841 = vcmask 588800
        %v3843 = vsel %vm3841, %v3793, 0
        %v3846 = vsel %vm3841, %v3794, 0
        %v3849 = vsel %vm3841, %v3795, 0
        %v3852 = vsel %vm3841, %v3796, 0
        %v3855 = vsel %vm3841, %v3797, 0
        %v3858 = vsel %vm3841, %v3798, 0
        %v3861 = vsel %vm3841, %v3799, 0
        %v3864 = vsel %vm3841, %v3800, 0
        %v3867 = vsel %vm3841, %v3801, 0
        %v3870 = vsel %vm3841, %v3802, 0
        %v3873 = vsel %vm3841, %v3803, 0
        %v3876 = vsel %vm3841, %v3804, 0
        %v3879 = vsel %vm3841, %v3805, 0
        %v3882 = vsel %vm3841, %v3806, 0
        %v3885 = vsel %vm3841, %v3807, 0
        %v3888 = vsel %vm3841, %v3808, 0
        %v3891 = vsel %vm3841, %v3809, 0
        %v3894 = vsel %vm3841, %v3810, 0
        %v3897 = vsel %vm3841, %v3811, 0
        %v3900 = vsel %vm3841, %v3812, 0
        %v3903 = vsel %vm3841, %v3813, 0
        %v3906 = vsel %vm3841, %v3814, 0
        %v3909 = vsel %vm3841, %v3815, 0
        %v3912 = vsel %vm3841, %v3816, 0
        %v3915 = vsel %vm3841, %v3817, 0
        %v3918 = vsel %vm3841, %v3818, 0
        %v3921 = vsel %vm3841, %v3819, 0
        %v3924 = vsel %vm3841, %v3820, 0
        %v3927 = vsel %vm3841, %v3821, 0
        %v3930 = vsel %vm3841, %v3822, 0
        %v3933 = vsel %vm3841, %v3823, 0
        %v3936 = vsel %vm3841, %v3824, 0
        %3938 = vmatprep.subr.mxu0 0.0
        %3939 = vmatpush1.msra.mxu0 %v3825
        %3940 = vmatprep.subr.mxu0 0.0
        %3941 = vmatpush1.msra.mxu0 %v3826
        %3942 = vmatprep.subr.mxu0 0.0
        %3943 = vmatpush1.msra.mxu0 %v3827
        %3944 = vmatprep.subr.mxu0 0.0
        %3945 = vmatpush1.msra.mxu0 %v3828
        %3946 = vmatprep.subr.mxu0 0.0
        %3947 = vmatpush1.msra.mxu0 %v3829
        %3948 = vmatprep.subr.mxu0 0.0
        %3949 = vmatpush1.msra.mxu0 %v3830
        %3950 = vmatprep.subr.mxu0 0.0
        %3951 = vmatpush1.msra.mxu0 %v3831
        %3952 = vmatprep.subr.mxu0 0.0
        %3953 = vmatpush1.msra.mxu0 %v3832
        %3954 = vmatprep.subr.mxu0 0.0
        %3955 = vmatpush1.msra.mxu0 %v3833
        %3956 = vmatprep.subr.mxu0 0.0
        %3957 = vmatpush1.msra.mxu0 0.0
        %3958 = vmatprep.subr.mxu0 0.0
        %3959 = vmatpush1.msra.mxu0 0.0
        %3960 = vmatprep.subr.mxu0 0.0
        %3961 = vmatpush1.msra.mxu0 0.0
        %3962 = vmatprep.subr.mxu0 0.0
        %3963 = vmatpush1.msra.mxu0 0.0
        %3964 = vmatprep.subr.mxu0 0.0
        %3965 = vmatpush1.msra.mxu0 0.0
        %3966 = vmatprep.subr.mxu0 0.0
        %3967 = vmatpush1.msra.mxu0 0.0
        %3968 = vmatprep.subr.mxu0 0.0
        %3969 = vmatpush1.msra.mxu0 0.0
        %3970 = vmatprep.subr.mxu0 0.0
        %3971 = vmatpush1.msra.mxu0 0.0
        %3972 = vmatprep.subr.mxu0 0.0
        %3973 = vmatpush1.msra.mxu0 0.0
        %3974 = vmatprep.subr.mxu0 0.0
        %3975 = vmatpush1.msra.mxu0 0.0
        %3976 = vmatprep.subr.mxu0 0.0
        %3977 = vmatpush1.msra.mxu0 0.0
        %3978 = vmatprep.subr.mxu0 0.0
        %3979 = vmatpush1.msra.mxu0 0.0
        %3980 = vmatprep.subr.mxu0 0.0
        %3981 = vmatpush1.msra.mxu0 0.0
        %3982 = vmatprep.subr.mxu0 0.0
        %3983 = vmatpush1.msra.mxu0 0.0
        %3984 = vmatprep.subr.mxu0 0.0
        %3985 = vmatpush1.msra.mxu0 0.0
        %3986 = vmatprep.subr.mxu0 0.0
        %3987 = vmatpush1.msra.mxu0 0.0
        %3988 = vmatprep.subr.mxu0 0.0
        %3989 = vmatpush1.msra.mxu0 0.0
        %3990 = vmatprep.subr.mxu0 0.0
        %3991 = vmatpush1.msra.mxu0 0.0
        %3992 = vmatprep.subr.mxu0 0.0
        %3993 = vmatpush1.msra.mxu0 0.0
        %3994 = vmatprep.subr.mxu0 0.0
        %3995 = vmatpush1.msra.mxu0 0.0
        %3996 = vmatprep.subr.mxu0 0.0
        %3997 = vmatpush1.msra.mxu0 0.0
        %3998 = vmatprep.subr.mxu0 0.0
        %3999 = vmatpush1.msra.mxu0 0.0
        %4000 = vmatprep.subr.mxu0 0.0
        %4001 = vmatpush1.msra.mxu0 0.0
        %4002 = vmatprep.mubr.f32.mxu0 0.0
        %4003 = vmatmul.mubr.f32.gmra.mrb[0].mxu0 %v3843
        %v4004 = vpop.f32.mrb[0].mxu0
        %v4005 = vadd.f32 %v3839, %v4004
        %v4006 = vpop.f32.mrb[0].mxu0
        %4007 = vmatprep.mubr.f32.mxu0 0.0
        %4008 = vmatmul.mubr.f32.gmra.mrb[0].mxu0 %v3846
        %v4009 = vpop.f32.mrb[0].mxu0
        %v4010 = vadd.f32 %v3839, %v4009
        %v4011 = vpop.f32.mrb[0].mxu0
        %4012 = vmatprep.mubr.f32.mxu0 0.0
        %4013 = vmatmul.mubr.f32.gmra.mrb[0].mxu0 %v3849
        %v4014 = vpop.f32.mrb[0].mxu0
        %v4015 = vadd.f32 %v3839, %v4014
        %v4016 = vpop.f32.mrb[0].mxu0
        %4017 = vmatprep.mubr.f32.mxu0 0.0
        %4018 = vmatmul.mubr.f32.gmra.mrb[0].mxu0 %v3852
        %v4019 = vpop.f32.mrb[0].mxu0
        %v4020 = vadd.f32 %v3839, %v4019
        %v4021 = vpop.f32.mrb[0].mxu0
        %4022 = vmatprep.mubr.f32.mxu0 0.0
        %4023 = vmatmul.mubr.f32.gmra.mrb[0].mxu0 %v3855
        %v4024 = vpop.f32.mrb[0].mxu0
        %v4025 = vadd.f32 %v3839, %v4024
        %v4026 = vpop.f32.mrb[0].mxu0
        %4027 = vmatprep.mubr.f32.mxu0 0.0
        %4028 = vmatmul.mubr.f32.gmra.mrb[0].mxu0 %v3858
        %v4029 = vpop.f32.mrb[0].mxu0
        %v4030 = vadd.f32 %v3839, %v4029
        %v4031 = vpop.f32.mrb[0].mxu0
        %4032 = vmatprep.mubr.f32.mxu0 0.0
        %4033 = vmatmul.mubr.f32.gmra.mrb[0].mxu0 %v3861
        %v4034 = vpop.f32.mrb[0].mxu0
        %v4035 = vadd.f32 %v3839, %v4034
        %v4036 = vpop.f32.mrb[0].mxu0
        %4037 = vmatprep.mubr.f32.mxu0 0.0
        %4038 = vmatmul.mubr.f32.gmra.mrb[0].mxu0 %v3864
        %v4039 = vpop.f32.mrb[0].mxu0
        %v4040 = vadd.f32 %v3839, %v4039
        %v4041 = vpop.f32.mrb[0].mxu0
        %4042 = vmatprep.mubr.f32.mxu0 0.0
        %4043 = vmatmul.mubr.f32.gmra.mrb[0].mxu0 %v3867
        %v4044 = vpop.f32.mrb[0].mxu0
        %v4045 = vadd.f32 %v3839, %v4044
        %v4046 = vpop.f32.mrb[0].mxu0
        %4047 = vmatprep.mubr.f32.mxu0 0.0
        %4048 = vmatmul.mubr.f32.gmra.mrb[0].mxu0 %v3870
        %v4049 = vpop.f32.mrb[0].mxu0
        %v4050 = vadd.f32 %v3839, %v4049
        %v4051 = vpop.f32.mrb[0].mxu0
        %4052 = vmatprep.mubr.f32.mxu0 0.0
        %4053 = vmatmul.mubr.f32.gmra.mrb[0].mxu0 %v3873
        %v4054 = vpop.f32.mrb[0].mxu0
        %v4055 = vadd.f32 %v3839, %v4054
        %v4056 = vpop.f32.mrb[0].mxu0
        %4057 = vmatprep.mubr.f32.mxu0 0.0
        %4058 = vmatmul.mubr.f32.gmra.mrb[0].mxu0 %v3876
        %v4059 = vpop.f32.mrb[0].mxu0
        %v4060 = vadd.f32 %v3839, %v4059
        %v4061 = vpop.f32.mrb[0].mxu0
        %4062 = vmatprep.mubr.f32.mxu0 0.0
        %4063 = vmatmul.mubr.f32.gmra.mrb[0].mxu0 %v3879
        %v4064 = vpop.f32.mrb[0].mxu0
        %v4065 = vadd.f32 %v3839, %v4064
        %v4066 = vpop.f32.mrb[0].mxu0
        %4067 = vmatprep.mubr.f32.mxu0 0.0
        %4068 = vmatmul.mubr.f32.gmra.mrb[0].mxu0 %v3882
        %v4069 = vpop.f32.mrb[0].mxu0
        %v4070 = vadd.f32 %v3839, %v4069
        %v4071 = vpop.f32.mrb[0].mxu0
        %4072 = vmatprep.mubr.f32.mxu0 0.0
        %4073 = vmatmul.mubr.f32.gmra.mrb[0].mxu0 %v3885
        %v4074 = vpop.f32.mrb[0].mxu0
        %v4075 = vadd.f32 %v3839, %v4074
        %v4076 = vpop.f32.mrb[0].mxu0
        %4077 = vmatprep.mubr.f32.mxu0 0.0
        %4078 = vmatmul.mubr.f32.gmra.mrb[0].mxu0 %v3888
        %v4079 = vpop.f32.mrb[0].mxu0
        %v4080 = vadd.f32 %v3839, %v4079
        %v4081 = vpop.f32.mrb[0].mxu0
        %4082 = vmatprep.mubr.f32.mxu0 0.0
        %4083 = vmatmul.mubr.f32.gmra.mrb[0].mxu0 %v3891
        %v4084 = vpop.f32.mrb[0].mxu0
        %v4085 = vadd.f32 %v3839, %v4084
        %v4086 = vpop.f32.mrb[0].mxu0
        %4087 = vmatprep.mubr.f32.mxu0 0.0
        %4088 = vmatmul.mubr.f32.gmra.mrb[0].mxu0 %v3894
        %v4089 = vpop.f32.mrb[0].mxu0
        %v4090 = vadd.f32 %v3839, %v4089
        %v4091 = vpop.f32.mrb[0].mxu0
        %4092 = vmatprep.mubr.f32.mxu0 0.0
        %4093 = vmatmul.mubr.f32.gmra.mrb[0].mxu0 %v3897
        %v4094 = vpop.f32.mrb[0].mxu0
        %v4095 = vadd.f32 %v3839, %v4094
        %v4096 = vpop.f32.mrb[0].mxu0
        %4097 = vmatprep.mubr.f32.mxu0 0.0
        %4098 = vmatmul.mubr.f32.gmra.mrb[0].mxu0 %v3900
        %v4099 = vpop.f32.mrb[0].mxu0
        %v4100 = vadd.f32 %v3839, %v4099
        %v4101 = vpop.f32.mrb[0].mxu0
        %4102 = vmatprep.mubr.f32.mxu0 0.0
        %4103 = vmatmul.mubr.f32.gmra.mrb[0].mxu0 %v3903
        %v4104 = vpop.f32.mrb[0].mxu0
        %v4105 = vadd.f32 %v3839, %v4104
        %v4106 = vpop.f32.mrb[0].mxu0
        %4107 = vmatprep.mubr.f32.mxu0 0.0
        %4108 = vmatmul.mubr.f32.gmra.mrb[0].mxu0 %v3906
        %v4109 = vpop.f32.mrb[0].mxu0
        %v4110 = vadd.f32 %v3839, %v4109
        %v4111 = vpop.f32.mrb[0].mxu0
        %4112 = vmatprep.mubr.f32.mxu0 0.0
        %4113 = vmatmul.mubr.f32.gmra.mrb[0].mxu0 %v3909
        %v4114 = vpop.f32.mrb[0].mxu0
        %v4115 = vadd.f32 %v3839, %v4114
        %v4116 = vpop.f32.mrb[0].mxu0
        %4117 = vmatprep.mubr.f32.mxu0 0.0
        %4118 = vmatmul.mubr.f32.gmra.mrb[0].mxu0 %v3912
        %v4119 = vpop.f32.mrb[0].mxu0
        %v4120 = vadd.f32 %v3839, %v4119
        %v4121 = vpop.f32.mrb[0].mxu0
        %4122 = vmatprep.mubr.f32.mxu0 0.0
        %4123 = vmatmul.mubr.f32.gmra.mrb[0].mxu0 %v3915
        %v4124 = vpop.f32.mrb[0].mxu0
        %v4125 = vadd.f32 %v3839, %v4124
        %v4126 = vpop.f32.mrb[0].mxu0
        %4127 = vmatprep.mubr.f32.mxu0 0.0
        %4128 = vmatmul.mubr.f32.gmra.mrb[0].mxu0 %v3918
        %v4129 = vpop.f32.mrb[0].mxu0
        %v4130 = vadd.f32 %v3839, %v4129
        %v4131 = vpop.f32.mrb[0].mxu0
        %4132 = vmatprep.mubr.f32.mxu0 0.0
        %4133 = vmatmul.mubr.f32.gmra.mrb[0].mxu0 %v3921
        %v4134 = vpop.f32.mrb[0].mxu0
        %v4135 = vadd.f32 %v3839, %v4134
        %v4136 = vpop.f32.mrb[0].mxu0
        %4137 = vmatprep.mubr.f32.mxu0 0.0
        %4138 = vmatmul.mubr.f32.gmra.mrb[0].mxu0 %v3924
        %v4139 = vpop.f32.mrb[0].mxu0
        %v4140 = vadd.f32 %v3839, %v4139
        %v4141 = vpop.f32.mrb[0].mxu0
        %4142 = vmatprep.mubr.f32.mxu0 0.0
        %4143 = vmatmul.mubr.f32.gmra.mrb[0].mxu0 %v3927
        %v4144 = vpop.f32.mrb[0].mxu0
        %v4145 = vadd.f32 %v3839, %v4144
        %v4146 = vpop.f32.mrb[0].mxu0
        %4147 = vmatprep.mubr.f32.mxu0 0.0
        %4148 = vmatmul.mubr.f32.gmra.mrb[0].mxu0 %v3930
        %v4149 = vpop.f32.mrb[0].mxu0
        %v4150 = vadd.f32 %v3839, %v4149
        %v4151 = vpop.f32.mrb[0].mxu0
        %4152 = vmatprep.mubr.f32.mxu0 0.0
        %4153 = vmatmul.mubr.f32.gmra.mrb[0].mxu0 %v3933
        %v4154 = vpop.f32.mrb[0].mxu0
        %v4155 = vadd.f32 %v3839, %v4154
        %v4156 = vpop.f32.mrb[0].mxu0
        %4157 = vmatprep.mubr.f32.mxu0 0.0
        %4158 = vmatmul.mubr.f32.gmra.mrb[0].mxu0 %v3936
        %v4159 = vpop.f32.mrb[0].mxu0
        %v4160 = vadd.f32 %v3839, %v4159
        %v4161 = vpop.f32.mrb[0].mxu0
        %4162 = vdwg.mxu0
        %v4163 = vmul.f32 %v485, 0.5
        %v4164 = vmul.f32 %v490, 0.5
        %v4165 = vmul.f32 %v495, 0.5
        %v4166 = vmul.f32 %v500, 0.5
        %v4167 = vmul.f32 %v505, 0.5
        %v4168 = vmul.f32 %v510, 0.5
        %v4169 = vmul.f32 %v515, 0.5
        %v4170 = vmul.f32 %v520, 0.5
        %v4171 = vmul.f32 %v525, 0.5
        %v4172 = vmul.f32 %v530, 0.5
        %v4173 = vmul.f32 %v535, 0.5
        %v4174 = vmul.f32 %v540, 0.5
        %v4175 = vmul.f32 %v545, 0.5
        %v4176 = vmul.f32 %v550, 0.5
        %v4177 = vmul.f32 %v555, 0.5
        %v4178 = vmul.f32 %v560, 0.5
        %v4179 = vmul.f32 %v565, 0.5
        %v4180 = vmul.f32 %v570, 0.5
        %v4181 = vmul.f32 %v575, 0.5
        %v4182 = vmul.f32 %v580, 0.5
        %v4183 = vmul.f32 %v585, 0.5
        %v4184 = vmul.f32 %v590, 0.5
        %v4185 = vmul.f32 %v595, 0.5
        %v4186 = vmul.f32 %v600, 0.5
        %v4187 = vmul.f32 %v605, 0.5
        %v4188 = vmul.f32 %v610, 0.5
        %v4189 = vmul.f32 %v615, 0.5
        %v4190 = vmul.f32 %v620, 0.5
        %v4191 = vmul.f32 %v625, 0.5
        %v4192 = vmul.f32 %v630, 0.5
        %v4193 = vmul.f32 %v635, 0.5
        %v4194 = vmul.f32 %v640, 0.5
        %v4195 = vadd.f32 %v4005, %v4163
        %v4196 = vadd.f32 %v4010, %v4164
        %v4197 = vadd.f32 %v4015, %v4165
        %v4198 = vadd.f32 %v4020, %v4166
        %v4199 = vadd.f32 %v4025, %v4167
        %v4200 = vadd.f32 %v4030, %v4168
        %v4201 = vadd.f32 %v4035, %v4169
        %v4202 = vadd.f32 %v4040, %v4170
        %v4203 = vadd.f32 %v4045, %v4171
        %v4204 = vadd.f32 %v4050, %v4172
        %v4205 = vadd.f32 %v4055, %v4173
        %v4206 = vadd.f32 %v4060, %v4174
        %v4207 = vadd.f32 %v4065, %v4175
        %v4208 = vadd.f32 %v4070, %v4176
        %v4209 = vadd.f32 %v4075, %v4177
        %v4210 = vadd.f32 %v4080, %v4178
        %v4211 = vadd.f32 %v4085, %v4179
        %v4212 = vadd.f32 %v4090, %v4180
        %v4213 = vadd.f32 %v4095, %v4181
        %v4214 = vadd.f32 %v4100, %v4182
        %v4215 = vadd.f32 %v4105, %v4183
        %v4216 = vadd.f32 %v4110, %v4184
        %v4217 = vadd.f32 %v4115, %v4185
        %v4218 = vadd.f32 %v4120, %v4186
        %v4219 = vadd.f32 %v4125, %v4187
        %v4220 = vadd.f32 %v4130, %v4188
        %v4221 = vadd.f32 %v4135, %v4189
        %v4222 = vadd.f32 %v4140, %v4190
        %v4223 = vadd.f32 %v4145, %v4191
        %v4224 = vadd.f32 %v4150, %v4192
        %v4225 = vadd.f32 %v4155, %v4193
        %v4226 = vadd.f32 %v4160, %v4194
        %v4227 = vmax.f32 %v4195, 0.0
        %v4228 = vmax.f32 %v4196, 0.0
        %v4229 = vmax.f32 %v4197, 0.0
        %v4230 = vmax.f32 %v4198, 0.0
        %v4231 = vmax.f32 %v4199, 0.0
        %v4232 = vmax.f32 %v4200, 0.0
        %v4233 = vmax.f32 %v4201, 0.0
        %v4234 = vmax.f32 %v4202, 0.0
        %v4235 = vmax.f32 %v4203, 0.0
        %v4236 = vmax.f32 %v4204, 0.0
        %v4237 = vmax.f32 %v4205, 0.0
        %v4238 = vmax.f32 %v4206, 0.0
        %v4239 = vmax.f32 %v4207, 0.0
        %v4240 = vmax.f32 %v4208, 0.0
        %v4241 = vmax.f32 %v4209, 0.0
        %v4242 = vmax.f32 %v4210, 0.0
        %v4243 = vmax.f32 %v4211, 0.0
        %v4244 = vmax.f32 %v4212, 0.0
        %v4245 = vmax.f32 %v4213, 0.0
        %v4246 = vmax.f32 %v4214, 0.0
        %v4247 = vmax.f32 %v4215, 0.0
        %v4248 = vmax.f32 %v4216, 0.0
        %v4249 = vmax.f32 %v4217, 0.0
        %v4250 = vmax.f32 %v4218, 0.0
        %v4251 = vmax.f32 %v4219, 0.0
        %v4252 = vmax.f32 %v4220, 0.0
        %v4253 = vmax.f32 %v4221, 0.0
        %v4254 = vmax.f32 %v4222, 0.0
        %v4255 = vmax.f32 %v4223, 0.0
        %v4256 = vmax.f32 %v4224, 0.0
        %v4257 = vmax.f32 %v4225, 0.0
        %v4258 = vmax.f32 %v4226, 0.0
        %4259 = vxpose.xlu0.b32.start [1/16] %v4227, 128
        %4260 = vxpose.xlu0.b32.cont [2/16] %v4228, 128
        %4261 = vxpose.xlu0.b32.cont [3/16] %v4229, 128
        %4262 = vxpose.xlu0.b32.cont [4/16] %v4230, 128
        %4263 = vxpose.xlu0.b32.cont [5/16] %v4231, 128
        %4264 = vxpose.xlu0.b32.cont [6/16] %v4232, 128
        %4265 = vxpose.xlu0.b32.cont [7/16] %v4233, 128
        %4266 = vxpose.xlu0.b32.cont [8/16] %v4234, 128
        %4267 = vxpose.xlu0.b32.cont [9/16] %v4235, 128
        %4268 = vxpose.xlu0.b32.cont [10/16] %v4236, 128
        %4269 = vxpose.xlu0.b32.cont [11/16] %v4237, 128
        %4270 = vxpose.xlu0.b32.cont [12/16] %v4238, 128
        %4271 = vxpose.xlu0.b32.cont [13/16] %v4239, 128
        %4272 = vxpose.xlu0.b32.cont [14/16] %v4240, 128
        %4273 = vxpose.xlu0.b32.cont [15/16] %v4241, 128
        %4274 = vxpose.xlu0.b32.end [16/16] %v4242, 128
        %v4275 = vpop.trf.xlu0
        %v4276 = vpop.trf.xlu0
        %v4277 = vpop.trf.xlu0
        %v4278 = vpop.trf.xlu0
        %v4279 = vpop.trf.xlu0
        %v4280 = vpop.trf.xlu0
        %v4281 = vpop.trf.xlu0
        %v4282 = vpop.trf.xlu0
        %v4283 = vpop.trf.xlu0
        %v4284 = vpop.trf.xlu0
        %v4285 = vpop.trf.xlu0
        %v4286 = vpop.trf.xlu0
        %v4287 = vpop.trf.xlu0
        %v4288 = vpop.trf.xlu0
        %v4289 = vpop.trf.xlu0
        %v4290 = vpop.trf.xlu0
        %4291 = vxpose.xlu0.b32.start [1/16] %v4243, 128
        %4292 = vxpose.xlu0.b32.cont [2/16] %v4244, 128
        %4293 = vxpose.xlu0.b32.cont [3/16] %v4245, 128
        %4294 = vxpose.xlu0.b32.cont [4/16] %v4246, 128
        %4295 = vxpose.xlu0.b32.cont [5/16] %v4247, 128
        %4296 = vxpose.xlu0.b32.cont [6/16] %v4248, 128
        %4297 = vxpose.xlu0.b32.cont [7/16] %v4249, 128
        %4298 = vxpose.xlu0.b32.cont [8/16] %v4250, 128
        %4299 = vxpose.xlu0.b32.cont [9/16] %v4251, 128
        %4300 = vxpose.xlu0.b32.cont [10/16] %v4252, 128
        %4301 = vxpose.xlu0.b32.cont [11/16] %v4253, 128
        %4302 = vxpose.xlu0.b32.cont [12/16] %v4254, 128
        %4303 = vxpose.xlu0.b32.cont [13/16] %v4255, 128
        %4304 = vxpose.xlu0.b32.cont [14/16] %v4256, 128
        %4305 = vxpose.xlu0.b32.cont [15/16] %v4257, 128
        %4306 = vxpose.xlu0.b32.end [16/16] %v4258, 128
        %v4307 = vpop.trf.xlu0
        %v4308 = vpop.trf.xlu0
        %v4309 = vpop.trf.xlu0
        %v4310 = vpop.trf.xlu0
        %v4311 = vpop.trf.xlu0
        %v4312 = vpop.trf.xlu0
        %v4313 = vpop.trf.xlu0
        %v4314 = vpop.trf.xlu0
        %v4315 = vpop.trf.xlu0
        %v4316 = vpop.trf.xlu0
        %v4317 = vpop.trf.xlu0
        %v4318 = vpop.trf.xlu0
        %v4319 = vpop.trf.xlu0
        %v4320 = vpop.trf.xlu0
        %v4321 = vpop.trf.xlu0
        %v4322 = vpop.trf.xlu0
        %4323 = vst [vmem:[%s271] sm:$0xff] %v4275
        %4324 = vst [vmem:[%s271 + $0x8] sm:$0xff] %v4307
        %s4325 = sand.u32 %s181, 1
        %s4326 = scalar_lea.sflag [#allocation5], %s4325
        %s4327 = sand.u32 %s181, 1
        %s4328 = smul.addr %s4327, 16
        %s4329 = scalar_lea.vmem [#allocation4], %s4328
        // Predicated region
        $region49: #{tpu_custom_call.1} parent=47 // pred_check
          %p4330 = pneg %p191
        $region50: #{tpu_custom_call.1} parent=47 // pred_check_branch
          %4332 = sbr.rel (%p4330) target = $region52
        $region51: #{tpu_custom_call.1} parent=47 // pred_region
          %s4334 = ssub.s32 256, 256
          %4335 = vsyncadd %s4326, %s4334
          %s4336 = smul.addr %s21, 2
          %s4337 = smul.addr %s4336, 128
          %s4338 = scalar_lea.hbm %s7, %s4337
          %s4340 = sshll.u32 %s4329, 4
          %s4341 = int_to_ptr.vmem [resolvable:$true] %s4340
          %4343 = dma.vmem_to_hbm [thread:$0]  %s4341, 256, %s4338, %s4326
        $region52: #{tpu_custom_call.1} parent=47 // pred_fallthru
          _
      $region48: #{tpu_custom_call.1} parent=5 // pred_fallthru
        _
      %p4344 = scmp.le.s32.totalorder 2, %s16
      // Predicated region
      $region53: #{tpu_custom_call.1} parent=5 // pred_check
        %p4345 = pneg %p4344
      $region54: #{tpu_custom_call.1} parent=5 // pred_check_branch
        %4347 = sbr.rel (%p4345) target = $region56
      $region55: #{tpu_custom_call.1} parent=5 // pred_region
        %s4348 = ssub.s32 %s16, 2
        // Predicated region
        $region57: #{tpu_custom_call.1} parent=55 // pred_check
          %p4349 = pneg %p197
        $region58: #{tpu_custom_call.1} parent=55 // pred_check_branch
          %4351 = sbr.rel (%p4349) target = $region60
        $region59: #{tpu_custom_call.1} parent=55 // pred_region
          %s4352 = sand.u32 %s182, 1
          %s4353 = scalar_lea.sflag [#allocation5], %s4352
          %s4354 = sand.u32 %s182, 1
          %s4355 = smul.addr %s4354, 16
          %s4356 = scalar_lea.vmem [#allocation4], %s4355
          %4357 = dma.done %s4353, 256
        $region60: #{tpu_custom_call.1} parent=55 // pred_fallthru
          _
      $region56: #{tpu_custom_call.1} parent=5 // pred_fallthru
        _
    $region6: #{tpu_custom_call.1} parent=1 // loop_footer
      %s20 = sadd.s32 1, %s16
    $region7: #{tpu_custom_call.1} parent=1 // loop_footer_branch
      %15 = sbr.rel target = $region3
    $region8: #{tpu_custom_call.1} parent=1 // loop_exit
      _
    %4358 = vsyncpa [#allocation5], 1
    %s4359 = scalar_lea.sflag [#allocation5], 1
    %4360 = vsyncpa %s4359, 1

</llo_original>
